<compile_context>
chip_gen: v7x
topology: tpu7x:2x2x1
jax: 0.10.0
libtpu: 0.0.40
codegen_flags: <defaults>
</compile_context>

<pallas_src>
import math

import jax
import jax.numpy as jnp
from jax.experimental import pallas as pl
from jax.experimental.pallas import tpu as pltpu

_BN_EPS = 1e-5


# ----------------------------------------------------------------------------
# Fused Conv1dStack kernel:
#   x1  = SiLU(conv1(x)  + b1)        (BN scale folded into conv weights)
#   out = x1 + SiLU(conv2(x1) + b2)
# ----------------------------------------------------------------------------
def _silu(y):
    # y * sigmoid(y); exp and the approx reciprocal both go to the EUP slot,
    # leaving a single VPU multiply on the critical VALU slot.
    return y * pl.reciprocal(1.0 + jnp.exp(-y), approx=True)


def _im2col(slab_ref, src_ref, c, ksize, dil, pad, length):
    """slab_ref[k*c + i, t] = src_ref[i, t + k*dil - pad]   (0 where OOB).

    Only the halo columns are zeroed; the valid window is fully overwritten
    every grid step, so no full-slab zero fill is needed.
    """
    for k in range(ksize):
        shift = k * dil - pad
        t0 = max(0, -shift)
        t1 = min(length, length - shift)
        r0, r1 = k * c, (k + 1) * c
        if t0 > 0:
            slab_ref[r0:r1, :t0] = jnp.zeros((c, t0), slab_ref.dtype)
        if t1 < length:
            slab_ref[r0:r1, t1:] = jnp.zeros((c, length - t1), slab_ref.dtype)
        if t1 > t0:
            slab_ref[r0:r1, t0:t1] = src_ref[:, t0 + shift:t1 + shift]


def _make_stack_kernel(c_in, c_out, ksize, dil, pad, length):
    def kernel(x_ref, w1_ref, b1_ref, w2_ref, b2_ref, o_ref,
               slab1_ref, x1_ref, slab2_ref):
        # x_ref : (c_in, L)        activation block (batch squeezed)
        # w1_ref: (c_out, K*c_in)  folded conv-branch weight (im2col layout)
        # w2_ref: (c_out, K*c_out) folded res-branch weight
        # b*_ref: (c_out, 1)       folded BN bias
        # o_ref : (c_out, L)       channel slice of the fused output buffer

        # conv branch: single im2col matmul on the MXU, f32 accumulate.
        _im2col(slab1_ref, x_ref, c_in, ksize, dil, pad, length)
        y1 = jnp.dot(w1_ref[...], slab1_ref[...],
                     preferred_element_type=jnp.float32)
        x1_ref[...] = _silu(y1 + b1_ref[...])

        # res branch on x1 (kept in VMEM), residual add fused.
        _im2col(slab2_ref, x1_ref, c_out, ksize, dil, pad, length)
        y2 = jnp.dot(w2_ref[...], slab2_ref[...],
                     preferred_element_type=jnp.float32)
        h = _silu(y2 + b2_ref[...])

        o_ref[...] = (x1_ref[...] + h).astype(o_ref.dtype)

    return kernel


def _chan_block_map(chan_blk):
    def idx(b):
        return (b, chan_blk, 0)
    return idx


def _const_map(b):
    return (0, 0)


def conv1d_stack_fused(src, w1, b1, w2, b2, *, ksize, dil, pad, c_total,
                       src_chan_blk, dst_chan_blk, alias_src):
    """One fused Conv1dStack.

    The input is channel block `src_chan_blk` (height c_in) of `src`; the stack
    output is written into channel block `dst_chan_blk` (height c_out) of a
    (B, c_total, L) buffer.  If `alias_src`, `src` IS that buffer and is
    updated in place (input_output_aliases); otherwise a fresh buffer is
    created and only the destination slice is defined (callers must write the
    remaining slices before reading them).
    """
    B, _, L = src.shape
    c_out, kc = w1.shape
    c_in = kc // ksize

    kernel = _make_stack_kernel(c_in, c_out, ksize, dil, pad, L)

    grid_spec = pltpu.PrefetchScalarGridSpec(
        num_scalar_prefetch=0,
        grid=(B,),
        in_specs=[
            pl.BlockSpec((None, c_in, L), _chan_block_map(src_chan_blk)),
            pl.BlockSpec(w1.shape, _const_map),
            pl.BlockSpec(b1.shape, _const_map),
            pl.BlockSpec(w2.shape, _const_map),
            pl.BlockSpec(b2.shape, _const_map),
        ],
        out_specs=pl.BlockSpec((None, c_out, L), _chan_block_map(dst_chan_blk)),
        scratch_shapes=[
            pltpu.VMEM((ksize * c_in, L), jnp.float32),   # im2col slab (conv)
            pltpu.VMEM((c_out, L), jnp.float32),          # x1 (kept in VMEM)
            pltpu.VMEM((ksize * c_out, L), jnp.float32),  # im2col slab (res)
        ],
    )

    return pl.pallas_call(
        kernel,
        out_shape=jax.ShapeDtypeStruct((B, c_total, L), src.dtype),
        grid_spec=grid_spec,
        input_output_aliases=({0: 0} if alias_src else {}),
        compiler_params=pltpu.CompilerParams(
            dimension_semantics=("parallel",),   # batch grid -> both TCs (v7x)
        ),
    )(src, w1, b1, w2, b2)


# ----------------------------------------------------------------------------
# Parameter handling (PyTorch layouts, eval-mode BN folding)
# ----------------------------------------------------------------------------
def _fold_branch(branch, *, pad_c_in_to=None):
    """Fold eval-mode BN scale into the conv weight; return im2col-layout
    weight (c_out, K*c_in) [column k*c_in + i <-> w[:, i, k]] and bias (c_out,1).
    """
    w = branch["w"]                                  # (c_out, c_in, K) PyTorch
    c_out, c_in, _ = w.shape
    if pad_c_in_to is not None and pad_c_in_to > c_in:
        w = jnp.pad(w, ((0, 0), (0, pad_c_in_to - c_in), (0, 0)))
    inv = branch["gamma"] / jnp.sqrt(branch["var"] + _BN_EPS)
    w_f = jnp.transpose(w, (0, 2, 1)).reshape(c_out, -1) * inv[:, None]
    b_f = (branch["beta"] - branch["mean"] * inv)[:, None]
    return w_f.astype(jnp.float32), b_f.astype(jnp.float32)


def _init_branch(key, c_in, c_out, ksize):
    kw, kg, kb, km, kv = jax.random.split(key, 5)
    bound = 1.0 / math.sqrt(c_in * ksize)
    return dict(
        w=jax.random.uniform(kw, (c_out, c_in, ksize), jnp.float32, -bound, bound),
        gamma=jax.random.uniform(kg, (c_out,), jnp.float32, 0.5, 1.5),
        beta=0.1 * jax.random.normal(kb, (c_out,), jnp.float32),
        mean=0.1 * jax.random.normal(km, (c_out,), jnp.float32),
        var=jax.random.uniform(kv, (c_out,), jnp.float32, 0.5, 1.5),
    )


def init_conv1d_stack(key, c_in, c_out, ksize):
    k_conv, k_res = jax.random.split(key)
    return dict(conv=_init_branch(k_conv, c_in, c_out, ksize),
                res=_init_branch(k_res, c_out, c_out, ksize))


# ----------------------------------------------------------------------------
# SeqEncoder2 forward (Pallas)
# ----------------------------------------------------------------------------
# (name, kernel_size, dilation, padding) per stack -- all preserve length.
_STACK_CFG = (("conv0", 3, 1, 1),
              ("conv1", 6, 2, 5),
              ("conv2", 15, 1, 7),
              ("conv3", 30, 2, 29))


def seq_encoder2_forward(x, params):
    B, c_in0, L = x.shape
    c_outs = [params[name]["conv"]["w"].shape[0] for name, *_ in _STACK_CFG]
    c_total = sum(c_outs)

    # Pad the tiny model-input channel dim to a sublane multiple (exact: the
    # matching folded-weight columns are zero).
    c_in_pad = -(-c_in0 // 8) * 8
    x0 = x if c_in_pad == c_in0 else jnp.pad(
        x, ((0, 0), (0, c_in_pad - c_in0), (0, 0)))

    # Channel layout of the fused (B, c_total, L) buffer follows the torch.cat
    # order: [0:c0) conv0, [c0:c0+c1) conv1, ... .  Stack i>0 reads its input
    # slice from the same buffer and writes its output slice in place.
    buf = None
    in_off = 0    # channel offset of this stack's input inside the buffer
    out_off = 0   # channel offset of this stack's output
    for s, (name, ksize, dil, pad) in enumerate(_STACK_CFG):
        first = s == 0
        w1, b1 = _fold_branch(params[name]["conv"],
                              pad_c_in_to=c_in_pad if first else None)
        w2, b2 = _fold_branch(params[name]["res"])
        c_out, kc = w1.shape
        c_in = kc // ksize
        assert in_off % c_in == 0 and out_off % c_out == 0
        src = x0 if first else buf
        buf = conv1d_stack_fused(
            src, w1, b1, w2, b2, ksize=ksize, dil=dil, pad=pad,
            c_total=c_total,
            src_chan_blk=0 if first else in_off // c_in,
            dst_chan_blk=out_off // c_out,
            alias_src=not first)
        in_off = out_off
        out_off += c_out
    return buf


# ----------------------------------------------------------------------------
# Pure-JAX reference (eval-mode), for correctness checking
# ----------------------------------------------------------------------------
def _silu_ref(y):
    return y * jax.nn.sigmoid(y)


def _conv_block_ref(x, branch, dil, pad):
    y = jax.lax.conv_general_dilated(
        x, branch["w"], window_strides=(1,), padding=[(pad, pad)],
        rhs_dilation=(dil,), dimension_numbers=("NCH", "OIH", "NCH"),
        precision=jax.lax.Precision.HIGHEST)
    inv = branch["gamma"] / jnp.sqrt(branch["var"] + _BN_EPS)
    y = y * inv[None, :, None] + (branch["beta"] - branch["mean"] * inv)[None, :, None]
    return _silu_ref(y)


def _stack_ref(x, sp, dil, pad):
    x1 = _conv_block_ref(x, sp["conv"], dil, pad)
    return x1 + _conv_block_ref(x1, sp["res"], dil, pad)


def seq_encoder2_ref(x, params):
    x1 = _stack_ref(x, params["conv0"], 1, 1)
    x2 = _stack_ref(x1, params["conv1"], 2, 5)
    x3 = _stack_ref(x2, params["conv2"], 1, 7)
    x4 = _stack_ref(x3, params["conv3"], 2, 29)
    return jnp.concatenate([x1, x2, x3, x4], axis=1)


# ----------------------------------------------------------------------------
if __name__ == "__main__":
    # Small shapes consistent with SeqEncoder2.forward: x is (B, in_dim, L).
    B, IN_DIM, NUM_FEAT, L = 2, 4, 32, 128

    key = jax.random.PRNGKey(0)
    kx, k0, k1, k2, k3 = jax.random.split(key, 5)

    x = jax.random.normal(kx, (B, IN_DIM, L), dtype=jnp.float32)
    params = {
        "conv0": init_conv1d_stack(k0, IN_DIM, NUM_FEAT, 3),
        "conv1": init_conv1d_stack(k1, NUM_FEAT, NUM_FEAT // 2, 6),
        "conv2": init_conv1d_stack(k2, NUM_FEAT // 2, NUM_FEAT // 4, 15),
        "conv3": init_conv1d_stack(k3, NUM_FEAT // 4, NUM_FEAT // 4, 30),
    }

    out = jax.block_until_ready(jax.jit(seq_encoder2_forward)(x, params))
    ref = jax.block_until_ready(seq_encoder2_ref(x, params))

    c_total = NUM_FEAT + NUM_FEAT // 2 + NUM_FEAT // 4 + NUM_FEAT // 4  # 64
    assert out.shape == (B, c_total, L), out.shape
    err = jnp.max(jnp.abs(out - ref))
    # Tolerance slightly wider than pure-f32 (3e-3) to cover the EUP
    # approximate reciprocal in SiLU, as flagged in the perf review.
    assert jnp.allclose(out, ref, atol=3e-3, rtol=3e-3), (
        f"mismatch vs reference; max abs diff = {err}")

    print("KERNEL_OK")
</pallas_src>

<mosaic_0001>
module attributes {stable_mosaic.version = 11 : i64} {
  func.func @kernel(%arg0: i32, %arg1: memref<1x8x128xf32, #tpu.memory_space<vmem>>, %arg2: memref<32x24xf32, #tpu.memory_space<vmem>>, %arg3: memref<32x1xf32, #tpu.memory_space<vmem>>, %arg4: memref<32x96xf32, #tpu.memory_space<vmem>>, %arg5: memref<32x1xf32, #tpu.memory_space<vmem>>, %arg6: memref<1x32x128xf32, #tpu.memory_space<vmem>>, %arg7: memref<24x128xf32, #tpu.memory_space<vmem>>, %arg8: memref<32x128xf32, #tpu.memory_space<vmem>>, %arg9: memref<96x128xf32, #tpu.memory_space<vmem>>) attributes {dimension_semantics = [#tpu.dimension_semantics<parallel>], iteration_bounds = array<i64: 2>, scalar_prefetch = 0 : i64, scratch_operands = 3 : i64, tpu.core_type = #tpu.core_type<tc>, window_params = [{transform_indices = @transform_0, window_bounds = array<i64: 1, 8, 128>}, {pipeline_mode = #tpu.pipeline_mode<synchronous>, transform_indices = @transform_1, window_bounds = array<i64: 32, 24>}, {pipeline_mode = #tpu.pipeline_mode<synchronous>, transform_indices = @transform_2, window_bounds = array<i64: 32, 1>}, {pipeline_mode = #tpu.pipeline_mode<synchronous>, transform_indices = @transform_3, window_bounds = array<i64: 32, 96>}, {pipeline_mode = #tpu.pipeline_mode<synchronous>, transform_indices = @transform_4, window_bounds = array<i64: 32, 1>}, {transform_indices = @transform_5, window_bounds = array<i64: 1, 32, 128>}]} {
    %cst = arith.constant 0.000000e+00 : f32
    %0 = vector.broadcast %cst : f32 to vector<8x1xf32>
    %c0 = arith.constant 0 : index
    %c0_0 = arith.constant 0 : index
    %1 = vector.load %arg7[%c0, %c0_0] : memref<24x128xf32, #tpu.memory_space<vmem>>, vector<8x1xf32>
    tpu.vector_store %arg7[%c0, %c0_0], %0 {strides = array<i32>} : memref<24x128xf32, #tpu.memory_space<vmem>>, vector<8x1xf32>,
    %c0_1 = arith.constant 0 : index
    %c0_2 = arith.constant 0 : index
    %c0_3 = arith.constant 0 : index
    %2 = vector.load %arg1[%c0_1, %c0_2, %c0_3] : memref<1x8x128xf32, #tpu.memory_space<vmem>>, vector<1x8x127xf32>
    %3 = vector.shape_cast %2 : vector<1x8x127xf32> to vector<8x127xf32>
    %c0_4 = arith.constant 0 : index
    %c1 = arith.constant 1 : index
    %4 = vector.load %arg7[%c0_4, %c1] : memref<24x128xf32, #tpu.memory_space<vmem>>, vector<8x127xf32>
    tpu.vector_store %arg7[%c0_4, %c1], %3 {strides = array<i32>} : memref<24x128xf32, #tpu.memory_space<vmem>>, vector<8x127xf32>,
    %c0_5 = arith.constant 0 : index
    %c0_6 = arith.constant 0 : index
    %c0_7 = arith.constant 0 : index
    %5 = vector.load %arg1[%c0_5, %c0_6, %c0_7] : memref<1x8x128xf32, #tpu.memory_space<vmem>>, vector<1x8x128xf32>
    %6 = vector.shape_cast %5 : vector<1x8x128xf32> to vector<8x128xf32>
    %c8 = arith.constant 8 : index
    %c0_8 = arith.constant 0 : index
    %7 = vector.load %arg7[%c8, %c0_8] : memref<24x128xf32, #tpu.memory_space<vmem>>, vector<8x128xf32>
    tpu.vector_store %arg7[%c8, %c0_8], %6 {strides = array<i32>} : memref<24x128xf32, #tpu.memory_space<vmem>>, vector<8x128xf32>,
    %cst_9 = arith.constant 0.000000e+00 : f32
    %8 = vector.broadcast %cst_9 : f32 to vector<8x1xf32>
    %c16 = arith.constant 16 : index
    %c127 = arith.constant 127 : index
    %9 = vector.load %arg7[%c16, %c127] : memref<24x128xf32, #tpu.memory_space<vmem>>, vector<8x1xf32>
    tpu.vector_store %arg7[%c16, %c127], %8 {strides = array<i32>} : memref<24x128xf32, #tpu.memory_space<vmem>>, vector<8x1xf32>,
    %c0_10 = arith.constant 0 : index
    %c0_11 = arith.constant 0 : index
    %c1_12 = arith.constant 1 : index
    %10 = vector.load %arg1[%c0_10, %c0_11, %c1_12] : memref<1x8x128xf32, #tpu.memory_space<vmem>>, vector<1x8x127xf32>
    %11 = vector.shape_cast %10 : vector<1x8x127xf32> to vector<8x127xf32>
    %c16_13 = arith.constant 16 : index
    %c0_14 = arith.constant 0 : index
    %12 = vector.load %arg7[%c16_13, %c0_14] : memref<24x128xf32, #tpu.memory_space<vmem>>, vector<8x127xf32>
    tpu.vector_store %arg7[%c16_13, %c0_14], %11 {strides = array<i32>} : memref<24x128xf32, #tpu.memory_space<vmem>>, vector<8x127xf32>,
    %c0_15 = arith.constant 0 : index
    %c0_16 = arith.constant 0 : index
    %13 = vector.load %arg2[%c0_15, %c0_16] : memref<32x24xf32, #tpu.memory_space<vmem>>, vector<32x24xf32>
    %c0_17 = arith.constant 0 : index
    %c0_18 = arith.constant 0 : index
    %14 = vector.load %arg7[%c0_17, %c0_18] : memref<24x128xf32, #tpu.memory_space<vmem>>, vector<24x128xf32>
    %cst_19 = arith.constant dense<0.000000e+00> : vector<32x128xf32>
    %15 = tpu.matmul %13, %14, %cst_19 {dimension_numbers = #tpu.dot_dimension_numbers<[1], [0], [0], [1], [0, 0, 1, 1], [], []>} : vector<32x24xf32>, vector<24x128xf32>, vector<32x128xf32> -> vector<32x128xf32>
    %c0_20 = arith.constant 0 : index
    %c0_21 = arith.constant 0 : index
    %16 = vector.load %arg3[%c0_20, %c0_21] : memref<32x1xf32, #tpu.memory_space<vmem>>, vector<32x1xf32>
    %17 = vector.broadcast %16 : vector<32x1xf32> to vector<32x128xf32>
    %18 = arith.addf %15, %17 : vector<32x128xf32>
    %cst_22 = arith.constant 0.000000e+00 : f32
    %19 = vector.broadcast %cst_22 : f32 to vector<32x128xf32>
    %20 = arith.subf %19, %18 : vector<32x128xf32>
    %21 = math.exp %20 : vector<32x128xf32>
    %cst_23 = arith.constant 1.000000e+00 : f32
    %22 = vector.broadcast %cst_23 : f32 to vector<32x128xf32>
    %23 = arith.addf %22, %21 : vector<32x128xf32>
    %24 = tpu.reciprocal %23 {approx = true} : vector<32x128xf32> -> vector<32x128xf32>
    %25 = arith.mulf %18, %24 : vector<32x128xf32>
    %c0_24 = arith.constant 0 : index
    %c0_25 = arith.constant 0 : index
    %26 = vector.load %arg8[%c0_24, %c0_25] : memref<32x128xf32, #tpu.memory_space<vmem>>, vector<32x128xf32>
    tpu.vector_store %arg8[%c0_24, %c0_25], %25 {strides = array<i32>} : memref<32x128xf32, #tpu.memory_space<vmem>>, vector<32x128xf32>,
    %cst_26 = arith.constant 0.000000e+00 : f32
    %27 = vector.broadcast %cst_26 : f32 to vector<32x1xf32>
    %c0_27 = arith.constant 0 : index
    %c0_28 = arith.constant 0 : index
    %28 = vector.load %arg9[%c0_27, %c0_28] : memref<96x128xf32, #tpu.memory_space<vmem>>, vector<32x1xf32>
    tpu.vector_store %arg9[%c0_27, %c0_28], %27 {strides = array<i32>} : memref<96x128xf32, #tpu.memory_space<vmem>>, vector<32x1xf32>,
    %c0_29 = arith.constant 0 : index
    %c0_30 = arith.constant 0 : index
    %29 = vector.load %arg8[%c0_29, %c0_30] : memref<32x128xf32, #tpu.memory_space<vmem>>, vector<32x127xf32>
    %c0_31 = arith.constant 0 : index
    %c1_32 = arith.constant 1 : index
    %30 = vector.load %arg9[%c0_31, %c1_32] : memref<96x128xf32, #tpu.memory_space<vmem>>, vector<32x127xf32>
    tpu.vector_store %arg9[%c0_31, %c1_32], %29 {strides = array<i32>} : memref<96x128xf32, #tpu.memory_space<vmem>>, vector<32x127xf32>,
    %c0_33 = arith.constant 0 : index
    %c0_34 = arith.constant 0 : index
    %31 = vector.load %arg8[%c0_33, %c0_34] : memref<32x128xf32, #tpu.memory_space<vmem>>, vector<32x128xf32>
    %c32 = arith.constant 32 : index
    %c0_35 = arith.constant 0 : index
    %32 = vector.load %arg9[%c32, %c0_35] : memref<96x128xf32, #tpu.memory_space<vmem>>, vector<32x128xf32>
    tpu.vector_store %arg9[%c32, %c0_35], %31 {strides = array<i32>} : memref<96x128xf32, #tpu.memory_space<vmem>>, vector<32x128xf32>,
    %cst_36 = arith.constant 0.000000e+00 : f32
    %33 = vector.broadcast %cst_36 : f32 to vector<32x1xf32>
    %c64 = arith.constant 64 : index
    %c127_37 = arith.constant 127 : index
    %34 = vector.load %arg9[%c64, %c127_37] : memref<96x128xf32, #tpu.memory_space<vmem>>, vector<32x1xf32>
    tpu.vector_store %arg9[%c64, %c127_37], %33 {strides = array<i32>} : memref<96x128xf32, #tpu.memory_space<vmem>>, vector<32x1xf32>,
    %c0_38 = arith.constant 0 : index
    %c1_39 = arith.constant 1 : index
    %35 = vector.load %arg8[%c0_38, %c1_39] : memref<32x128xf32, #tpu.memory_space<vmem>>, vector<32x127xf32>
    %c64_40 = arith.constant 64 : index
    %c0_41 = arith.constant 0 : index
    %36 = vector.load %arg9[%c64_40, %c0_41] : memref<96x128xf32, #tpu.memory_space<vmem>>, vector<32x127xf32>
    tpu.vector_store %arg9[%c64_40, %c0_41], %35 {strides = array<i32>} : memref<96x128xf32, #tpu.memory_space<vmem>>, vector<32x127xf32>,
    %c0_42 = arith.constant 0 : index
    %c0_43 = arith.constant 0 : index
    %37 = vector.load %arg4[%c0_42, %c0_43] : memref<32x96xf32, #tpu.memory_space<vmem>>, vector<32x96xf32>
    %c0_44 = arith.constant 0 : index
    %c0_45 = arith.constant 0 : index
    %38 = vector.load %arg9[%c0_44, %c0_45] : memref<96x128xf32, #tpu.memory_space<vmem>>, vector<96x128xf32>
    %cst_46 = arith.constant dense<0.000000e+00> : vector<32x128xf32>
    %39 = tpu.matmul %37, %38, %cst_46 {dimension_numbers = #tpu.dot_dimension_numbers<[1], [0], [0], [1], [0, 0, 1, 1], [], []>} : vector<32x96xf32>, vector<96x128xf32>, vector<32x128xf32> -> vector<32x128xf32>
    %c0_47 = arith.constant 0 : index
    %c0_48 = arith.constant 0 : index
    %40 = vector.load %arg5[%c0_47, %c0_48] : memref<32x1xf32, #tpu.memory_space<vmem>>, vector<32x1xf32>
    %41 = vector.broadcast %40 : vector<32x1xf32> to vector<32x128xf32>
    %42 = arith.addf %39, %41 : vector<32x128xf32>
    %cst_49 = arith.constant 0.000000e+00 : f32
    %43 = vector.broadcast %cst_49 : f32 to vector<32x128xf32>
    %44 = arith.subf %43, %42 : vector<32x128xf32>
    %45 = math.exp %44 : vector<32x128xf32>
    %cst_50 = arith.constant 1.000000e+00 : f32
    %46 = vector.broadcast %cst_50 : f32 to vector<32x128xf32>
    %47 = arith.addf %46, %45 : vector<32x128xf32>
    %48 = tpu.reciprocal %47 {approx = true} : vector<32x128xf32> -> vector<32x128xf32>
    %49 = arith.mulf %42, %48 : vector<32x128xf32>
    %c0_51 = arith.constant 0 : index
    %c0_52 = arith.constant 0 : index
    %50 = vector.load %arg8[%c0_51, %c0_52] : memref<32x128xf32, #tpu.memory_space<vmem>>, vector<32x128xf32>
    %51 = arith.addf %50, %49 : vector<32x128xf32>
    %c0_53 = arith.constant 0 : index
    %c0_54 = arith.constant 0 : index
    %c0_55 = arith.constant 0 : index
    %52 = vector.load %arg6[%c0_53, %c0_54, %c0_55] : memref<1x32x128xf32, #tpu.memory_space<vmem>>, vector<1x32x128xf32>
    %53 = vector.shape_cast %52 : vector<1x32x128xf32> to vector<32x128xf32>
    %54 = vector.shape_cast %51 : vector<32x128xf32> to vector<1x32x128xf32>
    tpu.vector_store %arg6[%c0_53, %c0_54, %c0_55], %54 {strides = array<i32>} : memref<1x32x128xf32, #tpu.memory_space<vmem>>, vector<1x32x128xf32>,
    return
  }
  func.func @transform_0(%arg0: i32) -> (i32, i32, i32) {
    %c0_i32 = arith.constant 0 : i32
    %c0_i32_0 = arith.constant 0 : i32
    %c0_i32_1 = arith.constant 0 : i32
    return %arg0, %c0_i32, %c0_i32_0 : i32, i32, i32
  }
  func.func @transform_1(%arg0: i32) -> (i32, i32) {
    %c0_i32 = arith.constant 0 : i32
    %c0_i32_0 = arith.constant 0 : i32
    %c0_i32_1 = arith.constant 0 : i32
    return %c0_i32, %c0_i32_0 : i32, i32
  }
  func.func @transform_2(%arg0: i32) -> (i32, i32) {
    %c0_i32 = arith.constant 0 : i32
    %c0_i32_0 = arith.constant 0 : i32
    %c0_i32_1 = arith.constant 0 : i32
    return %c0_i32, %c0_i32_0 : i32, i32
  }
  func.func @transform_3(%arg0: i32) -> (i32, i32) {
    %c0_i32 = arith.constant 0 : i32
    %c0_i32_0 = arith.constant 0 : i32
    %c0_i32_1 = arith.constant 0 : i32
    return %c0_i32, %c0_i32_0 : i32, i32
  }
  func.func @transform_4(%arg0: i32) -> (i32, i32) {
    %c0_i32 = arith.constant 0 : i32
    %c0_i32_0 = arith.constant 0 : i32
    %c0_i32_1 = arith.constant 0 : i32
    return %c0_i32, %c0_i32_0 : i32, i32
  }
  func.func @transform_5(%arg0: i32) -> (i32, i32, i32) {
    %c0_i32 = arith.constant 0 : i32
    %c0_i32_0 = arith.constant 0 : i32
    %c0_i32_1 = arith.constant 0 : i32
    return %arg0, %c0_i32, %c0_i32_0 : i32, i32, i32
  }
}

module attributes {stable_mosaic.version = 11 : i64} {
  func.func @kernel(%arg0: i32, %arg1: memref<1x32x128xf32, #tpu.memory_space<vmem>>, %arg2: memref<16x192xf32, #tpu.memory_space<vmem>>, %arg3: memref<16x1xf32, #tpu.memory_space<vmem>>, %arg4: memref<16x96xf32, #tpu.memory_space<vmem>>, %arg5: memref<16x1xf32, #tpu.memory_space<vmem>>, %arg6: memref<1x16x128xf32, #tpu.memory_space<vmem>>, %arg7: memref<192x128xf32, #tpu.memory_space<vmem>>, %arg8: memref<16x128xf32, #tpu.memory_space<vmem>>, %arg9: memref<96x128xf32, #tpu.memory_space<vmem>>) attributes {dimension_semantics = [#tpu.dimension_semantics<parallel>], iteration_bounds = array<i64: 2>, scalar_prefetch = 0 : i64, scratch_operands = 3 : i64, tpu.core_type = #tpu.core_type<tc>, window_params = [{transform_indices = @transform_0, window_bounds = array<i64: 1, 32, 128>}, {pipeline_mode = #tpu.pipeline_mode<synchronous>, transform_indices = @transform_1, window_bounds = array<i64: 16, 192>}, {pipeline_mode = #tpu.pipeline_mode<synchronous>, transform_indices = @transform_2, window_bounds = array<i64: 16, 1>}, {pipeline_mode = #tpu.pipeline_mode<synchronous>, transform_indices = @transform_3, window_bounds = array<i64: 16, 96>}, {pipeline_mode = #tpu.pipeline_mode<synchronous>, transform_indices = @transform_4, window_bounds = array<i64: 16, 1>}, {transform_indices = @transform_5, window_bounds = array<i64: 1, 16, 128>}]} {
    %cst = arith.constant 0.000000e+00 : f32
    %0 = vector.broadcast %cst : f32 to vector<32x5xf32>
    %c0 = arith.constant 0 : index
    %c0_0 = arith.constant 0 : index
    %1 = vector.load %arg7[%c0, %c0_0] : memref<192x128xf32, #tpu.memory_space<vmem>>, vector<32x5xf32>
    tpu.vector_store %arg7[%c0, %c0_0], %0 {strides = array<i32>} : memref<192x128xf32, #tpu.memory_space<vmem>>, vector<32x5xf32>,
    %c0_1 = arith.constant 0 : index
    %c0_2 = arith.constant 0 : index
    %c0_3 = arith.constant 0 : index
    %2 = vector.load %arg1[%c0_1, %c0_2, %c0_3] : memref<1x32x128xf32, #tpu.memory_space<vmem>>, vector<1x32x123xf32>
    %3 = vector.shape_cast %2 : vector<1x32x123xf32> to vector<32x123xf32>
    %c0_4 = arith.constant 0 : index
    %c5 = arith.constant 5 : index
    %4 = vector.load %arg7[%c0_4, %c5] : memref<192x128xf32, #tpu.memory_space<vmem>>, vector<32x123xf32>
    tpu.vector_store %arg7[%c0_4, %c5], %3 {strides = array<i32>} : memref<192x128xf32, #tpu.memory_space<vmem>>, vector<32x123xf32>,
    %cst_5 = arith.constant 0.000000e+00 : f32
    %5 = vector.broadcast %cst_5 : f32 to vector<32x3xf32>
    %c32 = arith.constant 32 : index
    %c0_6 = arith.constant 0 : index
    %6 = vector.load %arg7[%c32, %c0_6] : memref<192x128xf32, #tpu.memory_space<vmem>>, vector<32x3xf32>
    tpu.vector_store %arg7[%c32, %c0_6], %5 {strides = array<i32>} : memref<192x128xf32, #tpu.memory_space<vmem>>, vector<32x3xf32>,
    %c0_7 = arith.constant 0 : index
    %c0_8 = arith.constant 0 : index
    %c0_9 = arith.constant 0 : index
    %7 = vector.load %arg1[%c0_7, %c0_8, %c0_9] : memref<1x32x128xf32, #tpu.memory_space<vmem>>, vector<1x32x125xf32>
    %8 = vector.shape_cast %7 : vector<1x32x125xf32> to vector<32x125xf32>
    %c32_10 = arith.constant 32 : index
    %c3 = arith.constant 3 : index
    %9 = vector.load %arg7[%c32_10, %c3] : memref<192x128xf32, #tpu.memory_space<vmem>>, vector<32x125xf32>
    tpu.vector_store %arg7[%c32_10, %c3], %8 {strides = array<i32>} : memref<192x128xf32, #tpu.memory_space<vmem>>, vector<32x125xf32>,
    %cst_11 = arith.constant 0.000000e+00 : f32
    %10 = vector.broadcast %cst_11 : f32 to vector<32x1xf32>
    %c64 = arith.constant 64 : index
    %c0_12 = arith.constant 0 : index
    %11 = vector.load %arg7[%c64, %c0_12] : memref<192x128xf32, #tpu.memory_space<vmem>>, vector<32x1xf32>
    tpu.vector_store %arg7[%c64, %c0_12], %10 {strides = array<i32>} : memref<192x128xf32, #tpu.memory_space<vmem>>, vector<32x1xf32>,
    %c0_13 = arith.constant 0 : index
    %c0_14 = arith.constant 0 : index
    %c0_15 = arith.constant 0 : index
    %12 = vector.load %arg1[%c0_13, %c0_14, %c0_15] : memref<1x32x128xf32, #tpu.memory_space<vmem>>, vector<1x32x127xf32>
    %13 = vector.shape_cast %12 : vector<1x32x127xf32> to vector<32x127xf32>
    %c64_16 = arith.constant 64 : index
    %c1 = arith.constant 1 : index
    %14 = vector.load %arg7[%c64_16, %c1] : memref<192x128xf32, #tpu.memory_space<vmem>>, vector<32x127xf32>
    tpu.vector_store %arg7[%c64_16, %c1], %13 {strides = array<i32>} : memref<192x128xf32, #tpu.memory_space<vmem>>, vector<32x127xf32>,
    %cst_17 = arith.constant 0.000000e+00 : f32
    %15 = vector.broadcast %cst_17 : f32 to vector<32x1xf32>
    %c96 = arith.constant 96 : index
    %c127 = arith.constant 127 : index
    %16 = vector.load %arg7[%c96, %c127] : memref<192x128xf32, #tpu.memory_space<vmem>>, vector<32x1xf32>
    tpu.vector_store %arg7[%c96, %c127], %15 {strides = array<i32>} : memref<192x128xf32, #tpu.memory_space<vmem>>, vector<32x1xf32>,
    %c0_18 = arith.constant 0 : index
    %c0_19 = arith.constant 0 : index
    %c1_20 = arith.constant 1 : index
    %17 = vector.load %arg1[%c0_18, %c0_19, %c1_20] : memref<1x32x128xf32, #tpu.memory_space<vmem>>, vector<1x32x127xf32>
    %18 = vector.shape_cast %17 : vector<1x32x127xf32> to vector<32x127xf32>
    %c96_21 = arith.constant 96 : index
    %c0_22 = arith.constant 0 : index
    %19 = vector.load %arg7[%c96_21, %c0_22] : memref<192x128xf32, #tpu.memory_space<vmem>>, vector<32x127xf32>
    tpu.vector_store %arg7[%c96_21, %c0_22], %18 {strides = array<i32>} : memref<192x128xf32, #tpu.memory_space<vmem>>, vector<32x127xf32>,
    %cst_23 = arith.constant 0.000000e+00 : f32
    %20 = vector.broadcast %cst_23 : f32 to vector<32x3xf32>
    %c128 = arith.constant 128 : index
    %c125 = arith.constant 125 : index
    %21 = vector.load %arg7[%c128, %c125] : memref<192x128xf32, #tpu.memory_space<vmem>>, vector<32x3xf32>
    tpu.vector_store %arg7[%c128, %c125], %20 {strides = array<i32>} : memref<192x128xf32, #tpu.memory_space<vmem>>, vector<32x3xf32>,
    %c0_24 = arith.constant 0 : index
    %c0_25 = arith.constant 0 : index
    %c3_26 = arith.constant 3 : index
    %22 = vector.load %arg1[%c0_24, %c0_25, %c3_26] : memref<1x32x128xf32, #tpu.memory_space<vmem>>, vector<1x32x125xf32>
    %23 = vector.shape_cast %22 : vector<1x32x125xf32> to vector<32x125xf32>
    %c128_27 = arith.constant 128 : index
    %c0_28 = arith.constant 0 : index
    %24 = vector.load %arg7[%c128_27, %c0_28] : memref<192x128xf32, #tpu.memory_space<vmem>>, vector<32x125xf32>
    tpu.vector_store %arg7[%c128_27, %c0_28], %23 {strides = array<i32>} : memref<192x128xf32, #tpu.memory_space<vmem>>, vector<32x125xf32>,
    %cst_29 = arith.constant 0.000000e+00 : f32
    %25 = vector.broadcast %cst_29 : f32 to vector<32x5xf32>
    %c160 = arith.constant 160 : index
    %c123 = arith.constant 123 : index
    %26 = vector.load %arg7[%c160, %c123] : memref<192x128xf32, #tpu.memory_space<vmem>>, vector<32x5xf32>
    tpu.vector_store %arg7[%c160, %c123], %25 {strides = array<i32>} : memref<192x128xf32, #tpu.memory_space<vmem>>, vector<32x5xf32>,
    %c0_30 = arith.constant 0 : index
    %c0_31 = arith.constant 0 : index
    %c5_32 = arith.constant 5 : index
    %27 = vector.load %arg1[%c0_30, %c0_31, %c5_32] : memref<1x32x128xf32, #tpu.memory_space<vmem>>, vector<1x32x123xf32>
    %28 = vector.shape_cast %27 : vector<1x32x123xf32> to vector<32x123xf32>
    %c160_33 = arith.constant 160 : index
    %c0_34 = arith.constant 0 : index
    %29 = vector.load %arg7[%c160_33, %c0_34] : memref<192x128xf32, #tpu.memory_space<vmem>>, vector<32x123xf32>
    tpu.vector_store %arg7[%c160_33, %c0_34], %28 {strides = array<i32>} : memref<192x128xf32, #tpu.memory_space<vmem>>, vector<32x123xf32>,
    %c0_35 = arith.constant 0 : index
    %c0_36 = arith.constant 0 : index
    %30 = vector.load %arg2[%c0_35, %c0_36] : memref<16x192xf32, #tpu.memory_space<vmem>>, vector<16x192xf32>
    %c0_37 = arith.constant 0 : index
    %c0_38 = arith.constant 0 : index
    %31 = vector.load %arg7[%c0_37, %c0_38] : memref<192x128xf32, #tpu.memory_space<vmem>>, vector<192x128xf32>
    %cst_39 = arith.constant dense<0.000000e+00> : vector<16x128xf32>
    %32 = tpu.matmul %30, %31, %cst_39 {dimension_numbers = #tpu.dot_dimension_numbers<[1], [0], [0], [1], [0, 0, 1, 1], [], []>} : vector<16x192xf32>, vector<192x128xf32>, vector<16x128xf32> -> vector<16x128xf32>
    %c0_40 = arith.constant 0 : index
    %c0_41 = arith.constant 0 : index
    %33 = vector.load %arg3[%c0_40, %c0_41] : memref<16x1xf32, #tpu.memory_space<vmem>>, vector<16x1xf32>
    %34 = vector.broadcast %33 : vector<16x1xf32> to vector<16x128xf32>
    %35 = arith.addf %32, %34 : vector<16x128xf32>
    %cst_42 = arith.constant 0.000000e+00 : f32
    %36 = vector.broadcast %cst_42 : f32 to vector<16x128xf32>
    %37 = arith.subf %36, %35 : vector<16x128xf32>
    %38 = math.exp %37 : vector<16x128xf32>
    %cst_43 = arith.constant 1.000000e+00 : f32
    %39 = vector.broadcast %cst_43 : f32 to vector<16x128xf32>
    %40 = arith.addf %39, %38 : vector<16x128xf32>
    %41 = tpu.reciprocal %40 {approx = true} : vector<16x128xf32> -> vector<16x128xf32>
    %42 = arith.mulf %35, %41 : vector<16x128xf32>
    %c0_44 = arith.constant 0 : index
    %c0_45 = arith.constant 0 : index
    %43 = vector.load %arg8[%c0_44, %c0_45] : memref<16x128xf32, #tpu.memory_space<vmem>>, vector<16x128xf32>
    tpu.vector_store %arg8[%c0_44, %c0_45], %42 {strides = array<i32>} : memref<16x128xf32, #tpu.memory_space<vmem>>, vector<16x128xf32>,
    %cst_46 = arith.constant 0.000000e+00 : f32
    %44 = vector.broadcast %cst_46 : f32 to vector<16x5xf32>
    %c0_47 = arith.constant 0 : index
    %c0_48 = arith.constant 0 : index
    %45 = vector.load %arg9[%c0_47, %c0_48] : memref<96x128xf32, #tpu.memory_space<vmem>>, vector<16x5xf32>
    tpu.vector_store %arg9[%c0_47, %c0_48], %44 {strides = array<i32>} : memref<96x128xf32, #tpu.memory_space<vmem>>, vector<16x5xf32>,
    %c0_49 = arith.constant 0 : index
    %c0_50 = arith.constant 0 : index
    %46 = vector.load %arg8[%c0_49, %c0_50] : memref<16x128xf32, #tpu.memory_space<vmem>>, vector<16x123xf32>
    %c0_51 = arith.constant 0 : index
    %c5_52 = arith.constant 5 : index
    %47 = vector.load %arg9[%c0_51, %c5_52] : memref<96x128xf32, #tpu.memory_space<vmem>>, vector<16x123xf32>
    tpu.vector_store %arg9[%c0_51, %c5_52], %46 {strides = array<i32>} : memref<96x128xf32, #tpu.memory_space<vmem>>, vector<16x123xf32>,
    %cst_53 = arith.constant 0.000000e+00 : f32
    %48 = vector.broadcast %cst_53 : f32 to vector<16x3xf32>
    %c16 = arith.constant 16 : index
    %c0_54 = arith.constant 0 : index
    %49 = vector.load %arg9[%c16, %c0_54] : memref<96x128xf32, #tpu.memory_space<vmem>>, vector<16x3xf32>
    tpu.vector_store %arg9[%c16, %c0_54], %48 {strides = array<i32>} : memref<96x128xf32, #tpu.memory_space<vmem>>, vector<16x3xf32>,
    %c0_55 = arith.constant 0 : index
    %c0_56 = arith.constant 0 : index
    %50 = vector.load %arg8[%c0_55, %c0_56] : memref<16x128xf32, #tpu.memory_space<vmem>>, vector<16x125xf32>
    %c16_57 = arith.constant 16 : index
    %c3_58 = arith.constant 3 : index
    %51 = vector.load %arg9[%c16_57, %c3_58] : memref<96x128xf32, #tpu.memory_space<vmem>>, vector<16x125xf32>
    tpu.vector_store %arg9[%c16_57, %c3_58], %50 {strides = array<i32>} : memref<96x128xf32, #tpu.memory_space<vmem>>, vector<16x125xf32>,
    %cst_59 = arith.constant 0.000000e+00 : f32
    %52 = vector.broadcast %cst_59 : f32 to vector<16x1xf32>
    %c32_60 = arith.constant 32 : index
    %c0_61 = arith.constant 0 : index
    %53 = vector.load %arg9[%c32_60, %c0_61] : memref<96x128xf32, #tpu.memory_space<vmem>>, vector<16x1xf32>
    tpu.vector_store %arg9[%c32_60, %c0_61], %52 {strides = array<i32>} : memref<96x128xf32, #tpu.memory_space<vmem>>, vector<16x1xf32>,
    %c0_62 = arith.constant 0 : index
    %c0_63 = arith.constant 0 : index
    %54 = vector.load %arg8[%c0_62, %c0_63] : memref<16x128xf32, #tpu.memory_space<vmem>>, vector<16x127xf32>
    %c32_64 = arith.constant 32 : index
    %c1_65 = arith.constant 1 : index
    %55 = vector.load %arg9[%c32_64, %c1_65] : memref<96x128xf32, #tpu.memory_space<vmem>>, vector<16x127xf32>
    tpu.vector_store %arg9[%c32_64, %c1_65], %54 {strides = array<i32>} : memref<96x128xf32, #tpu.memory_space<vmem>>, vector<16x127xf32>,
    %cst_66 = arith.constant 0.000000e+00 : f32
    %56 = vector.broadcast %cst_66 : f32 to vector<16x1xf32>
    %c48 = arith.constant 48 : index
    %c127_67 = arith.constant 127 : index
    %57 = vector.load %arg9[%c48, %c127_67] : memref<96x128xf32, #tpu.memory_space<vmem>>, vector<16x1xf32>
    tpu.vector_store %arg9[%c48, %c127_67], %56 {strides = array<i32>} : memref<96x128xf32, #tpu.memory_space<vmem>>, vector<16x1xf32>,
    %c0_68 = arith.constant 0 : index
    %c1_69 = arith.constant 1 : index
    %58 = vector.load %arg8[%c0_68, %c1_69] : memref<16x128xf32, #tpu.memory_space<vmem>>, vector<16x127xf32>
    %c48_70 = arith.constant 48 : index
    %c0_71 = arith.constant 0 : index
    %59 = vector.load %arg9[%c48_70, %c0_71] : memref<96x128xf32, #tpu.memory_space<vmem>>, vector<16x127xf32>
    tpu.vector_store %arg9[%c48_70, %c0_71], %58 {strides = array<i32>} : memref<96x128xf32, #tpu.memory_space<vmem>>, vector<16x127xf32>,
    %cst_72 = arith.constant 0.000000e+00 : f32
    %60 = vector.broadcast %cst_72 : f32 to vector<16x3xf32>
    %c64_73 = arith.constant 64 : index
    %c125_74 = arith.constant 125 : index
    %61 = vector.load %arg9[%c64_73, %c125_74] : memref<96x128xf32, #tpu.memory_space<vmem>>, vector<16x3xf32>
    tpu.vector_store %arg9[%c64_73, %c125_74], %60 {strides = array<i32>} : memref<96x128xf32, #tpu.memory_space<vmem>>, vector<16x3xf32>,
    %c0_75 = arith.constant 0 : index
    %c3_76 = arith.constant 3 : index
    %62 = vector.load %arg8[%c0_75, %c3_76] : memref<16x128xf32, #tpu.memory_space<vmem>>, vector<16x125xf32>
    %c64_77 = arith.constant 64 : index
    %c0_78 = arith.constant 0 : index
    %63 = vector.load %arg9[%c64_77, %c0_78] : memref<96x128xf32, #tpu.memory_space<vmem>>, vector<16x125xf32>
    tpu.vector_store %arg9[%c64_77, %c0_78], %62 {strides = array<i32>} : memref<96x128xf32, #tpu.memory_space<vmem>>, vector<16x125xf32>,
    %cst_79 = arith.constant 0.000000e+00 : f32
    %64 = vector.broadcast %cst_79 : f32 to vector<16x5xf32>
    %c80 = arith.constant 80 : index
    %c123_80 = arith.constant 123 : index
    %65 = vector.load %arg9[%c80, %c123_80] : memref<96x128xf32, #tpu.memory_space<vmem>>, vector<16x5xf32>
    tpu.vector_store %arg9[%c80, %c123_80], %64 {strides = array<i32>} : memref<96x128xf32, #tpu.memory_space<vmem>>, vector<16x5xf32>,
    %c0_81 = arith.constant 0 : index
    %c5_82 = arith.constant 5 : index
    %66 = vector.load %arg8[%c0_81, %c5_82] : memref<16x128xf32, #tpu.memory_space<vmem>>, vector<16x123xf32>
    %c80_83 = arith.constant 80 : index
    %c0_84 = arith.constant 0 : index
    %67 = vector.load %arg9[%c80_83, %c0_84] : memref<96x128xf32, #tpu.memory_space<vmem>>, vector<16x123xf32>
    tpu.vector_store %arg9[%c80_83, %c0_84], %66 {strides = array<i32>} : memref<96x128xf32, #tpu.memory_space<vmem>>, vector<16x123xf32>,
    %c0_85 = arith.constant 0 : index
    %c0_86 = arith.constant 0 : index
    %68 = vector.load %arg4[%c0_85, %c0_86] : memref<16x96xf32, #tpu.memory_space<vmem>>, vector<16x96xf32>
    %c0_87 = arith.constant 0 : index
    %c0_88 = arith.constant 0 : index
    %69 = vector.load %arg9[%c0_87, %c0_88] : memref<96x128xf32, #tpu.memory_space<vmem>>, vector<96x128xf32>
    %cst_89 = arith.constant dense<0.000000e+00> : vector<16x128xf32>
    %70 = tpu.matmul %68, %69, %cst_89 {dimension_numbers = #tpu.dot_dimension_numbers<[1], [0], [0], [1], [0, 0, 1, 1], [], []>} : vector<16x96xf32>, vector<96x128xf32>, vector<16x128xf32> -> vector<16x128xf32>
    %c0_90 = arith.constant 0 : index
    %c0_91 = arith.constant 0 : index
    %71 = vector.load %arg5[%c0_90, %c0_91] : memref<16x1xf32, #tpu.memory_space<vmem>>, vector<16x1xf32>
    %72 = vector.broadcast %71 : vector<16x1xf32> to vector<16x128xf32>
    %73 = arith.addf %70, %72 : vector<16x128xf32>
    %cst_92 = arith.constant 0.000000e+00 : f32
    %74 = vector.broadcast %cst_92 : f32 to vector<16x128xf32>
    %75 = arith.subf %74, %73 : vector<16x128xf32>
    %76 = math.exp %75 : vector<16x128xf32>
    %cst_93 = arith.constant 1.000000e+00 : f32
    %77 = vector.broadcast %cst_93 : f32 to vector<16x128xf32>
    %78 = arith.addf %77, %76 : vector<16x128xf32>
    %79 = tpu.reciprocal %78 {approx = true} : vector<16x128xf32> -> vector<16x128xf32>
    %80 = arith.mulf %73, %79 : vector<16x128xf32>
    %c0_94 = arith.constant 0 : index
    %c0_95 = arith.constant 0 : index
    %81 = vector.load %arg8[%c0_94, %c0_95] : memref<16x128xf32, #tpu.memory_space<vmem>>, vector<16x128xf32>
    %82 = arith.addf %81, %80 : vector<16x128xf32>
    %c0_96 = arith.constant 0 : index
    %c0_97 = arith.constant 0 : index
    %c0_98 = arith.constant 0 : index
    %83 = vector.load %arg6[%c0_96, %c0_97, %c0_98] : memref<1x16x128xf32, #tpu.memory_space<vmem>>, vector<1x16x128xf32>
    %84 = vector.shape_cast %83 : vector<1x16x128xf32> to vector<16x128xf32>
    %85 = vector.shape_cast %82 : vector<16x128xf32> to vector<1x16x128xf32>
    tpu.vector_store %arg6[%c0_96, %c0_97, %c0_98], %85 {strides = array<i32>} : memref<1x16x128xf32, #tpu.memory_space<vmem>>, vector<1x16x128xf32>,
    return
  }
  func.func @transform_0(%arg0: i32) -> (i32, i32, i32) {
    %c0_i32 = arith.constant 0 : i32
    %c0_i32_0 = arith.constant 0 : i32
    %c0_i32_1 = arith.constant 0 : i32
    return %arg0, %c0_i32, %c0_i32_0 : i32, i32, i32
  }
  func.func @transform_1(%arg0: i32) -> (i32, i32) {
    %c0_i32 = arith.constant 0 : i32
    %c0_i32_0 = arith.constant 0 : i32
    %c0_i32_1 = arith.constant 0 : i32
    return %c0_i32, %c0_i32_0 : i32, i32
  }
  func.func @transform_2(%arg0: i32) -> (i32, i32) {
    %c0_i32 = arith.constant 0 : i32
    %c0_i32_0 = arith.constant 0 : i32
    %c0_i32_1 = arith.constant 0 : i32
    return %c0_i32, %c0_i32_0 : i32, i32
  }
  func.func @transform_3(%arg0: i32) -> (i32, i32) {
    %c0_i32 = arith.constant 0 : i32
    %c0_i32_0 = arith.constant 0 : i32
    %c0_i32_1 = arith.constant 0 : i32
    return %c0_i32, %c0_i32_0 : i32, i32
  }
  func.func @transform_4(%arg0: i32) -> (i32, i32) {
    %c0_i32 = arith.constant 0 : i32
    %c0_i32_0 = arith.constant 0 : i32
    %c0_i32_1 = arith.constant 0 : i32
    return %c0_i32, %c0_i32_0 : i32, i32
  }
  func.func @transform_5(%arg0: i32) -> (i32, i32, i32) {
    %c2_i32 = arith.constant 2 : i32
    %c0_i32 = arith.constant 0 : i32
    %c0_i32_0 = arith.constant 0 : i32
    return %arg0, %c2_i32, %c0_i32 : i32, i32, i32
  }
}

module attributes {stable_mosaic.version = 11 : i64} {
  func.func @kernel(%arg0: i32, %arg1: memref<1x16x128xf32, #tpu.memory_space<vmem>>, %arg2: memref<8x240xf32, #tpu.memory_space<vmem>>, %arg3: memref<8x1xf32, #tpu.memory_space<vmem>>, %arg4: memref<8x120xf32, #tpu.memory_space<vmem>>, %arg5: memref<8x1xf32, #tpu.memory_space<vmem>>, %arg6: memref<1x8x128xf32, #tpu.memory_space<vmem>>, %arg7: memref<240x128xf32, #tpu.memory_space<vmem>>, %arg8: memref<8x128xf32, #tpu.memory_space<vmem>>, %arg9: memref<120x128xf32, #tpu.memory_space<vmem>>) attributes {dimension_semantics = [#tpu.dimension_semantics<parallel>], iteration_bounds = array<i64: 2>, scalar_prefetch = 0 : i64, scratch_operands = 3 : i64, tpu.core_type = #tpu.core_type<tc>, window_params = [{transform_indices = @transform_0, window_bounds = array<i64: 1, 16, 128>}, {pipeline_mode = #tpu.pipeline_mode<synchronous>, transform_indices = @transform_1, window_bounds = array<i64: 8, 240>}, {pipeline_mode = #tpu.pipeline_mode<synchronous>, transform_indices = @transform_2, window_bounds = array<i64: 8, 1>}, {pipeline_mode = #tpu.pipeline_mode<synchronous>, transform_indices = @transform_3, window_bounds = array<i64: 8, 120>}, {pipeline_mode = #tpu.pipeline_mode<synchronous>, transform_indices = @transform_4, window_bounds = array<i64: 8, 1>}, {transform_indices = @transform_5, window_bounds = array<i64: 1, 8, 128>}]} {
    %cst = arith.constant 0.000000e+00 : f32
    %0 = vector.broadcast %cst : f32 to vector<16x7xf32>
    %c0 = arith.constant 0 : index
    %c0_0 = arith.constant 0 : index
    %1 = vector.load %arg7[%c0, %c0_0] : memref<240x128xf32, #tpu.memory_space<vmem>>, vector<16x7xf32>
    tpu.vector_store %arg7[%c0, %c0_0], %0 {strides = array<i32>} : memref<240x128xf32, #tpu.memory_space<vmem>>, vector<16x7xf32>,
    %c0_1 = arith.constant 0 : index
    %c0_2 = arith.constant 0 : index
    %c0_3 = arith.constant 0 : index
    %2 = vector.load %arg1[%c0_1, %c0_2, %c0_3] : memref<1x16x128xf32, #tpu.memory_space<vmem>>, vector<1x16x121xf32>
    %3 = vector.shape_cast %2 : vector<1x16x121xf32> to vector<16x121xf32>
    %c0_4 = arith.constant 0 : index
    %c7 = arith.constant 7 : index
    %4 = vector.load %arg7[%c0_4, %c7] : memref<240x128xf32, #tpu.memory_space<vmem>>, vector<16x121xf32>
    tpu.vector_store %arg7[%c0_4, %c7], %3 {strides = array<i32>} : memref<240x128xf32, #tpu.memory_space<vmem>>, vector<16x121xf32>,
    %cst_5 = arith.constant 0.000000e+00 : f32
    %5 = vector.broadcast %cst_5 : f32 to vector<16x6xf32>
    %c16 = arith.constant 16 : index
    %c0_6 = arith.constant 0 : index
    %6 = vector.load %arg7[%c16, %c0_6] : memref<240x128xf32, #tpu.memory_space<vmem>>, vector<16x6xf32>
    tpu.vector_store %arg7[%c16, %c0_6], %5 {strides = array<i32>} : memref<240x128xf32, #tpu.memory_space<vmem>>, vector<16x6xf32>,
    %c0_7 = arith.constant 0 : index
    %c0_8 = arith.constant 0 : index
    %c0_9 = arith.constant 0 : index
    %7 = vector.load %arg1[%c0_7, %c0_8, %c0_9] : memref<1x16x128xf32, #tpu.memory_space<vmem>>, vector<1x16x122xf32>
    %8 = vector.shape_cast %7 : vector<1x16x122xf32> to vector<16x122xf32>
    %c16_10 = arith.constant 16 : index
    %c6 = arith.constant 6 : index
    %9 = vector.load %arg7[%c16_10, %c6] : memref<240x128xf32, #tpu.memory_space<vmem>>, vector<16x122xf32>
    tpu.vector_store %arg7[%c16_10, %c6], %8 {strides = array<i32>} : memref<240x128xf32, #tpu.memory_space<vmem>>, vector<16x122xf32>,
    %cst_11 = arith.constant 0.000000e+00 : f32
    %10 = vector.broadcast %cst_11 : f32 to vector<16x5xf32>
    %c32 = arith.constant 32 : index
    %c0_12 = arith.constant 0 : index
    %11 = vector.load %arg7[%c32, %c0_12] : memref<240x128xf32, #tpu.memory_space<vmem>>, vector<16x5xf32>
    tpu.vector_store %arg7[%c32, %c0_12], %10 {strides = array<i32>} : memref<240x128xf32, #tpu.memory_space<vmem>>, vector<16x5xf32>,
    %c0_13 = arith.constant 0 : index
    %c0_14 = arith.constant 0 : index
    %c0_15 = arith.constant 0 : index
    %12 = vector.load %arg1[%c0_13, %c0_14, %c0_15] : memref<1x16x128xf32, #tpu.memory_space<vmem>>, vector<1x16x123xf32>
    %13 = vector.shape_cast %12 : vector<1x16x123xf32> to vector<16x123xf32>
    %c32_16 = arith.constant 32 : index
    %c5 = arith.constant 5 : index
    %14 = vector.load %arg7[%c32_16, %c5] : memref<240x128xf32, #tpu.memory_space<vmem>>, vector<16x123xf32>
    tpu.vector_store %arg7[%c32_16, %c5], %13 {strides = array<i32>} : memref<240x128xf32, #tpu.memory_space<vmem>>, vector<16x123xf32>,
    %cst_17 = arith.constant 0.000000e+00 : f32
    %15 = vector.broadcast %cst_17 : f32 to vector<16x4xf32>
    %c48 = arith.constant 48 : index
    %c0_18 = arith.constant 0 : index
    %16 = vector.load %arg7[%c48, %c0_18] : memref<240x128xf32, #tpu.memory_space<vmem>>, vector<16x4xf32>
    tpu.vector_store %arg7[%c48, %c0_18], %15 {strides = array<i32>} : memref<240x128xf32, #tpu.memory_space<vmem>>, vector<16x4xf32>,
    %c0_19 = arith.constant 0 : index
    %c0_20 = arith.constant 0 : index
    %c0_21 = arith.constant 0 : index
    %17 = vector.load %arg1[%c0_19, %c0_20, %c0_21] : memref<1x16x128xf32, #tpu.memory_space<vmem>>, vector<1x16x124xf32>
    %18 = vector.shape_cast %17 : vector<1x16x124xf32> to vector<16x124xf32>
    %c48_22 = arith.constant 48 : index
    %c4 = arith.constant 4 : index
    %19 = vector.load %arg7[%c48_22, %c4] : memref<240x128xf32, #tpu.memory_space<vmem>>, vector<16x124xf32>
    tpu.vector_store %arg7[%c48_22, %c4], %18 {strides = array<i32>} : memref<240x128xf32, #tpu.memory_space<vmem>>, vector<16x124xf32>,
    %cst_23 = arith.constant 0.000000e+00 : f32
    %20 = vector.broadcast %cst_23 : f32 to vector<16x3xf32>
    %c64 = arith.constant 64 : index
    %c0_24 = arith.constant 0 : index
    %21 = vector.load %arg7[%c64, %c0_24] : memref<240x128xf32, #tpu.memory_space<vmem>>, vector<16x3xf32>
    tpu.vector_store %arg7[%c64, %c0_24], %20 {strides = array<i32>} : memref<240x128xf32, #tpu.memory_space<vmem>>, vector<16x3xf32>,
    %c0_25 = arith.constant 0 : index
    %c0_26 = arith.constant 0 : index
    %c0_27 = arith.constant 0 : index
    %22 = vector.load %arg1[%c0_25, %c0_26, %c0_27] : memref<1x16x128xf32, #tpu.memory_space<vmem>>, vector<1x16x125xf32>
    %23 = vector.shape_cast %22 : vector<1x16x125xf32> to vector<16x125xf32>
    %c64_28 = arith.constant 64 : index
    %c3 = arith.constant 3 : index
    %24 = vector.load %arg7[%c64_28, %c3] : memref<240x128xf32, #tpu.memory_space<vmem>>, vector<16x125xf32>
    tpu.vector_store %arg7[%c64_28, %c3], %23 {strides = array<i32>} : memref<240x128xf32, #tpu.memory_space<vmem>>, vector<16x125xf32>,
    %cst_29 = arith.constant 0.000000e+00 : f32
    %25 = vector.broadcast %cst_29 : f32 to vector<16x2xf32>
    %c80 = arith.constant 80 : index
    %c0_30 = arith.constant 0 : index
    %26 = vector.load %arg7[%c80, %c0_30] : memref<240x128xf32, #tpu.memory_space<vmem>>, vector<16x2xf32>
    tpu.vector_store %arg7[%c80, %c0_30], %25 {strides = array<i32>} : memref<240x128xf32, #tpu.memory_space<vmem>>, vector<16x2xf32>,
    %c0_31 = arith.constant 0 : index
    %c0_32 = arith.constant 0 : index
    %c0_33 = arith.constant 0 : index
    %27 = vector.load %arg1[%c0_31, %c0_32, %c0_33] : memref<1x16x128xf32, #tpu.memory_space<vmem>>, vector<1x16x126xf32>
    %28 = vector.shape_cast %27 : vector<1x16x126xf32> to vector<16x126xf32>
    %c80_34 = arith.constant 80 : index
    %c2 = arith.constant 2 : index
    %29 = vector.load %arg7[%c80_34, %c2] : memref<240x128xf32, #tpu.memory_space<vmem>>, vector<16x126xf32>
    tpu.vector_store %arg7[%c80_34, %c2], %28 {strides = array<i32>} : memref<240x128xf32, #tpu.memory_space<vmem>>, vector<16x126xf32>,
    %cst_35 = arith.constant 0.000000e+00 : f32
    %30 = vector.broadcast %cst_35 : f32 to vector<16x1xf32>
    %c96 = arith.constant 96 : index
    %c0_36 = arith.constant 0 : index
    %31 = vector.load %arg7[%c96, %c0_36] : memref<240x128xf32, #tpu.memory_space<vmem>>, vector<16x1xf32>
    tpu.vector_store %arg7[%c96, %c0_36], %30 {strides = array<i32>} : memref<240x128xf32, #tpu.memory_space<vmem>>, vector<16x1xf32>,
    %c0_37 = arith.constant 0 : index
    %c0_38 = arith.constant 0 : index
    %c0_39 = arith.constant 0 : index
    %32 = vector.load %arg1[%c0_37, %c0_38, %c0_39] : memref<1x16x128xf32, #tpu.memory_space<vmem>>, vector<1x16x127xf32>
    %33 = vector.shape_cast %32 : vector<1x16x127xf32> to vector<16x127xf32>
    %c96_40 = arith.constant 96 : index
    %c1 = arith.constant 1 : index
    %34 = vector.load %arg7[%c96_40, %c1] : memref<240x128xf32, #tpu.memory_space<vmem>>, vector<16x127xf32>
    tpu.vector_store %arg7[%c96_40, %c1], %33 {strides = array<i32>} : memref<240x128xf32, #tpu.memory_space<vmem>>, vector<16x127xf32>,
    %c0_41 = arith.constant 0 : index
    %c0_42 = arith.constant 0 : index
    %c0_43 = arith.constant 0 : index
    %35 = vector.load %arg1[%c0_41, %c0_42, %c0_43] : memref<1x16x128xf32, #tpu.memory_space<vmem>>, vector<1x16x128xf32>
    %36 = vector.shape_cast %35 : vector<1x16x128xf32> to vector<16x128xf32>
    %c112 = arith.constant 112 : index
    %c0_44 = arith.constant 0 : index
    %37 = vector.load %arg7[%c112, %c0_44] : memref<240x128xf32, #tpu.memory_space<vmem>>, vector<16x128xf32>
    tpu.vector_store %arg7[%c112, %c0_44], %36 {strides = array<i32>} : memref<240x128xf32, #tpu.memory_space<vmem>>, vector<16x128xf32>,
    %cst_45 = arith.constant 0.000000e+00 : f32
    %38 = vector.broadcast %cst_45 : f32 to vector<16x1xf32>
    %c128 = arith.constant 128 : index
    %c127 = arith.constant 127 : index
    %39 = vector.load %arg7[%c128, %c127] : memref<240x128xf32, #tpu.memory_space<vmem>>, vector<16x1xf32>
    tpu.vector_store %arg7[%c128, %c127], %38 {strides = array<i32>} : memref<240x128xf32, #tpu.memory_space<vmem>>, vector<16x1xf32>,
    %c0_46 = arith.constant 0 : index
    %c0_47 = arith.constant 0 : index
    %c1_48 = arith.constant 1 : index
    %40 = vector.load %arg1[%c0_46, %c0_47, %c1_48] : memref<1x16x128xf32, #tpu.memory_space<vmem>>, vector<1x16x127xf32>
    %41 = vector.shape_cast %40 : vector<1x16x127xf32> to vector<16x127xf32>
    %c128_49 = arith.constant 128 : index
    %c0_50 = arith.constant 0 : index
    %42 = vector.load %arg7[%c128_49, %c0_50] : memref<240x128xf32, #tpu.memory_space<vmem>>, vector<16x127xf32>
    tpu.vector_store %arg7[%c128_49, %c0_50], %41 {strides = array<i32>} : memref<240x128xf32, #tpu.memory_space<vmem>>, vector<16x127xf32>,
    %cst_51 = arith.constant 0.000000e+00 : f32
    %43 = vector.broadcast %cst_51 : f32 to vector<16x2xf32>
    %c144 = arith.constant 144 : index
    %c126 = arith.constant 126 : index
    %44 = vector.load %arg7[%c144, %c126] : memref<240x128xf32, #tpu.memory_space<vmem>>, vector<16x2xf32>
    tpu.vector_store %arg7[%c144, %c126], %43 {strides = array<i32>} : memref<240x128xf32, #tpu.memory_space<vmem>>, vector<16x2xf32>,
    %c0_52 = arith.constant 0 : index
    %c0_53 = arith.constant 0 : index
    %c2_54 = arith.constant 2 : index
    %45 = vector.load %arg1[%c0_52, %c0_53, %c2_54] : memref<1x16x128xf32, #tpu.memory_space<vmem>>, vector<1x16x126xf32>
    %46 = vector.shape_cast %45 : vector<1x16x126xf32> to vector<16x126xf32>
    %c144_55 = arith.constant 144 : index
    %c0_56 = arith.constant 0 : index
    %47 = vector.load %arg7[%c144_55, %c0_56] : memref<240x128xf32, #tpu.memory_space<vmem>>, vector<16x126xf32>
    tpu.vector_store %arg7[%c144_55, %c0_56], %46 {strides = array<i32>} : memref<240x128xf32, #tpu.memory_space<vmem>>, vector<16x126xf32>,
    %cst_57 = arith.constant 0.000000e+00 : f32
    %48 = vector.broadcast %cst_57 : f32 to vector<16x3xf32>
    %c160 = arith.constant 160 : index
    %c125 = arith.constant 125 : index
    %49 = vector.load %arg7[%c160, %c125] : memref<240x128xf32, #tpu.memory_space<vmem>>, vector<16x3xf32>
    tpu.vector_store %arg7[%c160, %c125], %48 {strides = array<i32>} : memref<240x128xf32, #tpu.memory_space<vmem>>, vector<16x3xf32>,
    %c0_58 = arith.constant 0 : index
    %c0_59 = arith.constant 0 : index
    %c3_60 = arith.constant 3 : index
    %50 = vector.load %arg1[%c0_58, %c0_59, %c3_60] : memref<1x16x128xf32, #tpu.memory_space<vmem>>, vector<1x16x125xf32>
    %51 = vector.shape_cast %50 : vector<1x16x125xf32> to vector<16x125xf32>
    %c160_61 = arith.constant 160 : index
    %c0_62 = arith.constant 0 : index
    %52 = vector.load %arg7[%c160_61, %c0_62] : memref<240x128xf32, #tpu.memory_space<vmem>>, vector<16x125xf32>
    tpu.vector_store %arg7[%c160_61, %c0_62], %51 {strides = array<i32>} : memref<240x128xf32, #tpu.memory_space<vmem>>, vector<16x125xf32>,
    %cst_63 = arith.constant 0.000000e+00 : f32
    %53 = vector.broadcast %cst_63 : f32 to vector<16x4xf32>
    %c176 = arith.constant 176 : index
    %c124 = arith.constant 124 : index
    %54 = vector.load %arg7[%c176, %c124] : memref<240x128xf32, #tpu.memory_space<vmem>>, vector<16x4xf32>
    tpu.vector_store %arg7[%c176, %c124], %53 {strides = array<i32>} : memref<240x128xf32, #tpu.memory_space<vmem>>, vector<16x4xf32>,
    %c0_64 = arith.constant 0 : index
    %c0_65 = arith.constant 0 : index
    %c4_66 = arith.constant 4 : index
    %55 = vector.load %arg1[%c0_64, %c0_65, %c4_66] : memref<1x16x128xf32, #tpu.memory_space<vmem>>, vector<1x16x124xf32>
    %56 = vector.shape_cast %55 : vector<1x16x124xf32> to vector<16x124xf32>
    %c176_67 = arith.constant 176 : index
    %c0_68 = arith.constant 0 : index
    %57 = vector.load %arg7[%c176_67, %c0_68] : memref<240x128xf32, #tpu.memory_space<vmem>>, vector<16x124xf32>
    tpu.vector_store %arg7[%c176_67, %c0_68], %56 {strides = array<i32>} : memref<240x128xf32, #tpu.memory_space<vmem>>, vector<16x124xf32>,
    %cst_69 = arith.constant 0.000000e+00 : f32
    %58 = vector.broadcast %cst_69 : f32 to vector<16x5xf32>
    %c192 = arith.constant 192 : index
    %c123 = arith.constant 123 : index
    %59 = vector.load %arg7[%c192, %c123] : memref<240x128xf32, #tpu.memory_space<vmem>>, vector<16x5xf32>
    tpu.vector_store %arg7[%c192, %c123], %58 {strides = array<i32>} : memref<240x128xf32, #tpu.memory_space<vmem>>, vector<16x5xf32>,
    %c0_70 = arith.constant 0 : index
    %c0_71 = arith.constant 0 : index
    %c5_72 = arith.constant 5 : index
    %60 = vector.load %arg1[%c0_70, %c0_71, %c5_72] : memref<1x16x128xf32, #tpu.memory_space<vmem>>, vector<1x16x123xf32>
    %61 = vector.shape_cast %60 : vector<1x16x123xf32> to vector<16x123xf32>
    %c192_73 = arith.constant 192 : index
    %c0_74 = arith.constant 0 : index
    %62 = vector.load %arg7[%c192_73, %c0_74] : memref<240x128xf32, #tpu.memory_space<vmem>>, vector<16x123xf32>
    tpu.vector_store %arg7[%c192_73, %c0_74], %61 {strides = array<i32>} : memref<240x128xf32, #tpu.memory_space<vmem>>, vector<16x123xf32>,
    %cst_75 = arith.constant 0.000000e+00 : f32
    %63 = vector.broadcast %cst_75 : f32 to vector<16x6xf32>
    %c208 = arith.constant 208 : index
    %c122 = arith.constant 122 : index
    %64 = vector.load %arg7[%c208, %c122] : memref<240x128xf32, #tpu.memory_space<vmem>>, vector<16x6xf32>
    tpu.vector_store %arg7[%c208, %c122], %63 {strides = array<i32>} : memref<240x128xf32, #tpu.memory_space<vmem>>, vector<16x6xf32>,
    %c0_76 = arith.constant 0 : index
    %c0_77 = arith.constant 0 : index
    %c6_78 = arith.constant 6 : index
    %65 = vector.load %arg1[%c0_76, %c0_77, %c6_78] : memref<1x16x128xf32, #tpu.memory_space<vmem>>, vector<1x16x122xf32>
    %66 = vector.shape_cast %65 : vector<1x16x122xf32> to vector<16x122xf32>
    %c208_79 = arith.constant 208 : index
    %c0_80 = arith.constant 0 : index
    %67 = vector.load %arg7[%c208_79, %c0_80] : memref<240x128xf32, #tpu.memory_space<vmem>>, vector<16x122xf32>
    tpu.vector_store %arg7[%c208_79, %c0_80], %66 {strides = array<i32>} : memref<240x128xf32, #tpu.memory_space<vmem>>, vector<16x122xf32>,
    %cst_81 = arith.constant 0.000000e+00 : f32
    %68 = vector.broadcast %cst_81 : f32 to vector<16x7xf32>
    %c224 = arith.constant 224 : index
    %c121 = arith.constant 121 : index
    %69 = vector.load %arg7[%c224, %c121] : memref<240x128xf32, #tpu.memory_space<vmem>>, vector<16x7xf32>
    tpu.vector_store %arg7[%c224, %c121], %68 {strides = array<i32>} : memref<240x128xf32, #tpu.memory_space<vmem>>, vector<16x7xf32>,
    %c0_82 = arith.constant 0 : index
    %c0_83 = arith.constant 0 : index
    %c7_84 = arith.constant 7 : index
    %70 = vector.load %arg1[%c0_82, %c0_83, %c7_84] : memref<1x16x128xf32, #tpu.memory_space<vmem>>, vector<1x16x121xf32>
    %71 = vector.shape_cast %70 : vector<1x16x121xf32> to vector<16x121xf32>
    %c224_85 = arith.constant 224 : index
    %c0_86 = arith.constant 0 : index
    %72 = vector.load %arg7[%c224_85, %c0_86] : memref<240x128xf32, #tpu.memory_space<vmem>>, vector<16x121xf32>
    tpu.vector_store %arg7[%c224_85, %c0_86], %71 {strides = array<i32>} : memref<240x128xf32, #tpu.memory_space<vmem>>, vector<16x121xf32>,
    %c0_87 = arith.constant 0 : index
    %c0_88 = arith.constant 0 : index
    %73 = vector.load %arg2[%c0_87, %c0_88] : memref<8x240xf32, #tpu.memory_space<vmem>>, vector<8x240xf32>
    %c0_89 = arith.constant 0 : index
    %c0_90 = arith.constant 0 : index
    %74 = vector.load %arg7[%c0_89, %c0_90] : memref<240x128xf32, #tpu.memory_space<vmem>>, vector<240x128xf32>
    %cst_91 = arith.constant dense<0.000000e+00> : vector<8x128xf32>
    %75 = tpu.matmul %73, %74, %cst_91 {dimension_numbers = #tpu.dot_dimension_numbers<[1], [0], [0], [1], [0, 0, 1, 1], [], []>} : vector<8x240xf32>, vector<240x128xf32>, vector<8x128xf32> -> vector<8x128xf32>
    %c0_92 = arith.constant 0 : index
    %c0_93 = arith.constant 0 : index
    %76 = vector.load %arg3[%c0_92, %c0_93] : memref<8x1xf32, #tpu.memory_space<vmem>>, vector<8x1xf32>
    %77 = vector.broadcast %76 : vector<8x1xf32> to vector<8x128xf32>
    %78 = arith.addf %75, %77 : vector<8x128xf32>
    %cst_94 = arith.constant 0.000000e+00 : f32
    %79 = vector.broadcast %cst_94 : f32 to vector<8x128xf32>
    %80 = arith.subf %79, %78 : vector<8x128xf32>
    %81 = math.exp %80 : vector<8x128xf32>
    %cst_95 = arith.constant 1.000000e+00 : f32
    %82 = vector.broadcast %cst_95 : f32 to vector<8x128xf32>
    %83 = arith.addf %82, %81 : vector<8x128xf32>
    %84 = tpu.reciprocal %83 {approx = true} : vector<8x128xf32> -> vector<8x128xf32>
    %85 = arith.mulf %78, %84 : vector<8x128xf32>
    %c0_96 = arith.constant 0 : index
    %c0_97 = arith.constant 0 : index
    %86 = vector.load %arg8[%c0_96, %c0_97] : memref<8x128xf32, #tpu.memory_space<vmem>>, vector<8x128xf32>
    tpu.vector_store %arg8[%c0_96, %c0_97], %85 {strides = array<i32>} : memref<8x128xf32, #tpu.memory_space<vmem>>, vector<8x128xf32>,
    %cst_98 = arith.constant 0.000000e+00 : f32
    %87 = vector.broadcast %cst_98 : f32 to vector<8x7xf32>
    %c0_99 = arith.constant 0 : index
    %c0_100 = arith.constant 0 : index
    %88 = vector.load %arg9[%c0_99, %c0_100] : memref<120x128xf32, #tpu.memory_space<vmem>>, vector<8x7xf32>
    tpu.vector_store %arg9[%c0_99, %c0_100], %87 {strides = array<i32>} : memref<120x128xf32, #tpu.memory_space<vmem>>, vector<8x7xf32>,
    %c0_101 = arith.constant 0 : index
    %c0_102 = arith.constant 0 : index
    %89 = vector.load %arg8[%c0_101, %c0_102] : memref<8x128xf32, #tpu.memory_space<vmem>>, vector<8x121xf32>
    %c0_103 = arith.constant 0 : index
    %c7_104 = arith.constant 7 : index
    %90 = vector.load %arg9[%c0_103, %c7_104] : memref<120x128xf32, #tpu.memory_space<vmem>>, vector<8x121xf32>
    tpu.vector_store %arg9[%c0_103, %c7_104], %89 {strides = array<i32>} : memref<120x128xf32, #tpu.memory_space<vmem>>, vector<8x121xf32>,
    %cst_105 = arith.constant 0.000000e+00 : f32
    %91 = vector.broadcast %cst_105 : f32 to vector<8x6xf32>
    %c8 = arith.constant 8 : index
    %c0_106 = arith.constant 0 : index
    %92 = vector.load %arg9[%c8, %c0_106] : memref<120x128xf32, #tpu.memory_space<vmem>>, vector<8x6xf32>
    tpu.vector_store %arg9[%c8, %c0_106], %91 {strides = array<i32>} : memref<120x128xf32, #tpu.memory_space<vmem>>, vector<8x6xf32>,
    %c0_107 = arith.constant 0 : index
    %c0_108 = arith.constant 0 : index
    %93 = vector.load %arg8[%c0_107, %c0_108] : memref<8x128xf32, #tpu.memory_space<vmem>>, vector<8x122xf32>
    %c8_109 = arith.constant 8 : index
    %c6_110 = arith.constant 6 : index
    %94 = vector.load %arg9[%c8_109, %c6_110] : memref<120x128xf32, #tpu.memory_space<vmem>>, vector<8x122xf32>
    tpu.vector_store %arg9[%c8_109, %c6_110], %93 {strides = array<i32>} : memref<120x128xf32, #tpu.memory_space<vmem>>, vector<8x122xf32>,
    %cst_111 = arith.constant 0.000000e+00 : f32
    %95 = vector.broadcast %cst_111 : f32 to vector<8x5xf32>
    %c16_112 = arith.constant 16 : index
    %c0_113 = arith.constant 0 : index
    %96 = vector.load %arg9[%c16_112, %c0_113] : memref<120x128xf32, #tpu.memory_space<vmem>>, vector<8x5xf32>
    tpu.vector_store %arg9[%c16_112, %c0_113], %95 {strides = array<i32>} : memref<120x128xf32, #tpu.memory_space<vmem>>, vector<8x5xf32>,
    %c0_114 = arith.constant 0 : index
    %c0_115 = arith.constant 0 : index
    %97 = vector.load %arg8[%c0_114, %c0_115] : memref<8x128xf32, #tpu.memory_space<vmem>>, vector<8x123xf32>
    %c16_116 = arith.constant 16 : index
    %c5_117 = arith.constant 5 : index
    %98 = vector.load %arg9[%c16_116, %c5_117] : memref<120x128xf32, #tpu.memory_space<vmem>>, vector<8x123xf32>
    tpu.vector_store %arg9[%c16_116, %c5_117], %97 {strides = array<i32>} : memref<120x128xf32, #tpu.memory_space<vmem>>, vector<8x123xf32>,
    %cst_118 = arith.constant 0.000000e+00 : f32
    %99 = vector.broadcast %cst_118 : f32 to vector<8x4xf32>
    %c24 = arith.constant 24 : index
    %c0_119 = arith.constant 0 : index
    %100 = vector.load %arg9[%c24, %c0_119] : memref<120x128xf32, #tpu.memory_space<vmem>>, vector<8x4xf32>
    tpu.vector_store %arg9[%c24, %c0_119], %99 {strides = array<i32>} : memref<120x128xf32, #tpu.memory_space<vmem>>, vector<8x4xf32>,
    %c0_120 = arith.constant 0 : index
    %c0_121 = arith.constant 0 : index
    %101 = vector.load %arg8[%c0_120, %c0_121] : memref<8x128xf32, #tpu.memory_space<vmem>>, vector<8x124xf32>
    %c24_122 = arith.constant 24 : index
    %c4_123 = arith.constant 4 : index
    %102 = vector.load %arg9[%c24_122, %c4_123] : memref<120x128xf32, #tpu.memory_space<vmem>>, vector<8x124xf32>
    tpu.vector_store %arg9[%c24_122, %c4_123], %101 {strides = array<i32>} : memref<120x128xf32, #tpu.memory_space<vmem>>, vector<8x124xf32>,
    %cst_124 = arith.constant 0.000000e+00 : f32
    %103 = vector.broadcast %cst_124 : f32 to vector<8x3xf32>
    %c32_125 = arith.constant 32 : index
    %c0_126 = arith.constant 0 : index
    %104 = vector.load %arg9[%c32_125, %c0_126] : memref<120x128xf32, #tpu.memory_space<vmem>>, vector<8x3xf32>
    tpu.vector_store %arg9[%c32_125, %c0_126], %103 {strides = array<i32>} : memref<120x128xf32, #tpu.memory_space<vmem>>, vector<8x3xf32>,
    %c0_127 = arith.constant 0 : index
    %c0_128 = arith.constant 0 : index
    %105 = vector.load %arg8[%c0_127, %c0_128] : memref<8x128xf32, #tpu.memory_space<vmem>>, vector<8x125xf32>
    %c32_129 = arith.constant 32 : index
    %c3_130 = arith.constant 3 : index
    %106 = vector.load %arg9[%c32_129, %c3_130] : memref<120x128xf32, #tpu.memory_space<vmem>>, vector<8x125xf32>
    tpu.vector_store %arg9[%c32_129, %c3_130], %105 {strides = array<i32>} : memref<120x128xf32, #tpu.memory_space<vmem>>, vector<8x125xf32>,
    %cst_131 = arith.constant 0.000000e+00 : f32
    %107 = vector.broadcast %cst_131 : f32 to vector<8x2xf32>
    %c40 = arith.constant 40 : index
    %c0_132 = arith.constant 0 : index
    %108 = vector.load %arg9[%c40, %c0_132] : memref<120x128xf32, #tpu.memory_space<vmem>>, vector<8x2xf32>
    tpu.vector_store %arg9[%c40, %c0_132], %107 {strides = array<i32>} : memref<120x128xf32, #tpu.memory_space<vmem>>, vector<8x2xf32>,
    %c0_133 = arith.constant 0 : index
    %c0_134 = arith.constant 0 : index
    %109 = vector.load %arg8[%c0_133, %c0_134] : memref<8x128xf32, #tpu.memory_space<vmem>>, vector<8x126xf32>
    %c40_135 = arith.constant 40 : index
    %c2_136 = arith.constant 2 : index
    %110 = vector.load %arg9[%c40_135, %c2_136] : memref<120x128xf32, #tpu.memory_space<vmem>>, vector<8x126xf32>
    tpu.vector_store %arg9[%c40_135, %c2_136], %109 {strides = array<i32>} : memref<120x128xf32, #tpu.memory_space<vmem>>, vector<8x126xf32>,
    %cst_137 = arith.constant 0.000000e+00 : f32
    %111 = vector.broadcast %cst_137 : f32 to vector<8x1xf32>
    %c48_138 = arith.constant 48 : index
    %c0_139 = arith.constant 0 : index
    %112 = vector.load %arg9[%c48_138, %c0_139] : memref<120x128xf32, #tpu.memory_space<vmem>>, vector<8x1xf32>
    tpu.vector_store %arg9[%c48_138, %c0_139], %111 {strides = array<i32>} : memref<120x128xf32, #tpu.memory_space<vmem>>, vector<8x1xf32>,
    %c0_140 = arith.constant 0 : index
    %c0_141 = arith.constant 0 : index
    %113 = vector.load %arg8[%c0_140, %c0_141] : memref<8x128xf32, #tpu.memory_space<vmem>>, vector<8x127xf32>
    %c48_142 = arith.constant 48 : index
    %c1_143 = arith.constant 1 : index
    %114 = vector.load %arg9[%c48_142, %c1_143] : memref<120x128xf32, #tpu.memory_space<vmem>>, vector<8x127xf32>
    tpu.vector_store %arg9[%c48_142, %c1_143], %113 {strides = array<i32>} : memref<120x128xf32, #tpu.memory_space<vmem>>, vector<8x127xf32>,
    %c0_144 = arith.constant 0 : index
    %c0_145 = arith.constant 0 : index
    %115 = vector.load %arg8[%c0_144, %c0_145] : memref<8x128xf32, #tpu.memory_space<vmem>>, vector<8x128xf32>
    %c56 = arith.constant 56 : index
    %c0_146 = arith.constant 0 : index
    %116 = vector.load %arg9[%c56, %c0_146] : memref<120x128xf32, #tpu.memory_space<vmem>>, vector<8x128xf32>
    tpu.vector_store %arg9[%c56, %c0_146], %115 {strides = array<i32>} : memref<120x128xf32, #tpu.memory_space<vmem>>, vector<8x128xf32>,
    %cst_147 = arith.constant 0.000000e+00 : f32
    %117 = vector.broadcast %cst_147 : f32 to vector<8x1xf32>
    %c64_148 = arith.constant 64 : index
    %c127_149 = arith.constant 127 : index
    %118 = vector.load %arg9[%c64_148, %c127_149] : memref<120x128xf32, #tpu.memory_space<vmem>>, vector<8x1xf32>
    tpu.vector_store %arg9[%c64_148, %c127_149], %117 {strides = array<i32>} : memref<120x128xf32, #tpu.memory_space<vmem>>, vector<8x1xf32>,
    %c0_150 = arith.constant 0 : index
    %c1_151 = arith.constant 1 : index
    %119 = vector.load %arg8[%c0_150, %c1_151] : memref<8x128xf32, #tpu.memory_space<vmem>>, vector<8x127xf32>
    %c64_152 = arith.constant 64 : index
    %c0_153 = arith.constant 0 : index
    %120 = vector.load %arg9[%c64_152, %c0_153] : memref<120x128xf32, #tpu.memory_space<vmem>>, vector<8x127xf32>
    tpu.vector_store %arg9[%c64_152, %c0_153], %119 {strides = array<i32>} : memref<120x128xf32, #tpu.memory_space<vmem>>, vector<8x127xf32>,
    %cst_154 = arith.constant 0.000000e+00 : f32
    %121 = vector.broadcast %cst_154 : f32 to vector<8x2xf32>
    %c72 = arith.constant 72 : index
    %c126_155 = arith.constant 126 : index
    %122 = vector.load %arg9[%c72, %c126_155] : memref<120x128xf32, #tpu.memory_space<vmem>>, vector<8x2xf32>
    tpu.vector_store %arg9[%c72, %c126_155], %121 {strides = array<i32>} : memref<120x128xf32, #tpu.memory_space<vmem>>, vector<8x2xf32>,
    %c0_156 = arith.constant 0 : index
    %c2_157 = arith.constant 2 : index
    %123 = vector.load %arg8[%c0_156, %c2_157] : memref<8x128xf32, #tpu.memory_space<vmem>>, vector<8x126xf32>
    %c72_158 = arith.constant 72 : index
    %c0_159 = arith.constant 0 : index
    %124 = vector.load %arg9[%c72_158, %c0_159] : memref<120x128xf32, #tpu.memory_space<vmem>>, vector<8x126xf32>
    tpu.vector_store %arg9[%c72_158, %c0_159], %123 {strides = array<i32>} : memref<120x128xf32, #tpu.memory_space<vmem>>, vector<8x126xf32>,
    %cst_160 = arith.constant 0.000000e+00 : f32
    %125 = vector.broadcast %cst_160 : f32 to vector<8x3xf32>
    %c80_161 = arith.constant 80 : index
    %c125_162 = arith.constant 125 : index
    %126 = vector.load %arg9[%c80_161, %c125_162] : memref<120x128xf32, #tpu.memory_space<vmem>>, vector<8x3xf32>
    tpu.vector_store %arg9[%c80_161, %c125_162], %125 {strides = array<i32>} : memref<120x128xf32, #tpu.memory_space<vmem>>, vector<8x3xf32>,
    %c0_163 = arith.constant 0 : index
    %c3_164 = arith.constant 3 : index
    %127 = vector.load %arg8[%c0_163, %c3_164] : memref<8x128xf32, #tpu.memory_space<vmem>>, vector<8x125xf32>
    %c80_165 = arith.constant 80 : index
    %c0_166 = arith.constant 0 : index
    %128 = vector.load %arg9[%c80_165, %c0_166] : memref<120x128xf32, #tpu.memory_space<vmem>>, vector<8x125xf32>
    tpu.vector_store %arg9[%c80_165, %c0_166], %127 {strides = array<i32>} : memref<120x128xf32, #tpu.memory_space<vmem>>, vector<8x125xf32>,
    %cst_167 = arith.constant 0.000000e+00 : f32
    %129 = vector.broadcast %cst_167 : f32 to vector<8x4xf32>
    %c88 = arith.constant 88 : index
    %c124_168 = arith.constant 124 : index
    %130 = vector.load %arg9[%c88, %c124_168] : memref<120x128xf32, #tpu.memory_space<vmem>>, vector<8x4xf32>
    tpu.vector_store %arg9[%c88, %c124_168], %129 {strides = array<i32>} : memref<120x128xf32, #tpu.memory_space<vmem>>, vector<8x4xf32>,
    %c0_169 = arith.constant 0 : index
    %c4_170 = arith.constant 4 : index
    %131 = vector.load %arg8[%c0_169, %c4_170] : memref<8x128xf32, #tpu.memory_space<vmem>>, vector<8x124xf32>
    %c88_171 = arith.constant 88 : index
    %c0_172 = arith.constant 0 : index
    %132 = vector.load %arg9[%c88_171, %c0_172] : memref<120x128xf32, #tpu.memory_space<vmem>>, vector<8x124xf32>
    tpu.vector_store %arg9[%c88_171, %c0_172], %131 {strides = array<i32>} : memref<120x128xf32, #tpu.memory_space<vmem>>, vector<8x124xf32>,
    %cst_173 = arith.constant 0.000000e+00 : f32
    %133 = vector.broadcast %cst_173 : f32 to vector<8x5xf32>
    %c96_174 = arith.constant 96 : index
    %c123_175 = arith.constant 123 : index
    %134 = vector.load %arg9[%c96_174, %c123_175] : memref<120x128xf32, #tpu.memory_space<vmem>>, vector<8x5xf32>
    tpu.vector_store %arg9[%c96_174, %c123_175], %133 {strides = array<i32>} : memref<120x128xf32, #tpu.memory_space<vmem>>, vector<8x5xf32>,
    %c0_176 = arith.constant 0 : index
    %c5_177 = arith.constant 5 : index
    %135 = vector.load %arg8[%c0_176, %c5_177] : memref<8x128xf32, #tpu.memory_space<vmem>>, vector<8x123xf32>
    %c96_178 = arith.constant 96 : index
    %c0_179 = arith.constant 0 : index
    %136 = vector.load %arg9[%c96_178, %c0_179] : memref<120x128xf32, #tpu.memory_space<vmem>>, vector<8x123xf32>
    tpu.vector_store %arg9[%c96_178, %c0_179], %135 {strides = array<i32>} : memref<120x128xf32, #tpu.memory_space<vmem>>, vector<8x123xf32>,
    %cst_180 = arith.constant 0.000000e+00 : f32
    %137 = vector.broadcast %cst_180 : f32 to vector<8x6xf32>
    %c104 = arith.constant 104 : index
    %c122_181 = arith.constant 122 : index
    %138 = vector.load %arg9[%c104, %c122_181] : memref<120x128xf32, #tpu.memory_space<vmem>>, vector<8x6xf32>
    tpu.vector_store %arg9[%c104, %c122_181], %137 {strides = array<i32>} : memref<120x128xf32, #tpu.memory_space<vmem>>, vector<8x6xf32>,
    %c0_182 = arith.constant 0 : index
    %c6_183 = arith.constant 6 : index
    %139 = vector.load %arg8[%c0_182, %c6_183] : memref<8x128xf32, #tpu.memory_space<vmem>>, vector<8x122xf32>
    %c104_184 = arith.constant 104 : index
    %c0_185 = arith.constant 0 : index
    %140 = vector.load %arg9[%c104_184, %c0_185] : memref<120x128xf32, #tpu.memory_space<vmem>>, vector<8x122xf32>
    tpu.vector_store %arg9[%c104_184, %c0_185], %139 {strides = array<i32>} : memref<120x128xf32, #tpu.memory_space<vmem>>, vector<8x122xf32>,
    %cst_186 = arith.constant 0.000000e+00 : f32
    %141 = vector.broadcast %cst_186 : f32 to vector<8x7xf32>
    %c112_187 = arith.constant 112 : index
    %c121_188 = arith.constant 121 : index
    %142 = vector.load %arg9[%c112_187, %c121_188] : memref<120x128xf32, #tpu.memory_space<vmem>>, vector<8x7xf32>
    tpu.vector_store %arg9[%c112_187, %c121_188], %141 {strides = array<i32>} : memref<120x128xf32, #tpu.memory_space<vmem>>, vector<8x7xf32>,
    %c0_189 = arith.constant 0 : index
    %c7_190 = arith.constant 7 : index
    %143 = vector.load %arg8[%c0_189, %c7_190] : memref<8x128xf32, #tpu.memory_space<vmem>>, vector<8x121xf32>
    %c112_191 = arith.constant 112 : index
    %c0_192 = arith.constant 0 : index
    %144 = vector.load %arg9[%c112_191, %c0_192] : memref<120x128xf32, #tpu.memory_space<vmem>>, vector<8x121xf32>
    tpu.vector_store %arg9[%c112_191, %c0_192], %143 {strides = array<i32>} : memref<120x128xf32, #tpu.memory_space<vmem>>, vector<8x121xf32>,
    %c0_193 = arith.constant 0 : index
    %c0_194 = arith.constant 0 : index
    %145 = vector.load %arg4[%c0_193, %c0_194] : memref<8x120xf32, #tpu.memory_space<vmem>>, vector<8x120xf32>
    %c0_195 = arith.constant 0 : index
    %c0_196 = arith.constant 0 : index
    %146 = vector.load %arg9[%c0_195, %c0_196] : memref<120x128xf32, #tpu.memory_space<vmem>>, vector<120x128xf32>
    %cst_197 = arith.constant dense<0.000000e+00> : vector<8x128xf32>
    %147 = tpu.matmul %145, %146, %cst_197 {dimension_numbers = #tpu.dot_dimension_numbers<[1], [0], [0], [1], [0, 0, 1, 1], [], []>} : vector<8x120xf32>, vector<120x128xf32>, vector<8x128xf32> -> vector<8x128xf32>
    %c0_198 = arith.constant 0 : index
    %c0_199 = arith.constant 0 : index
    %148 = vector.load %arg5[%c0_198, %c0_199] : memref<8x1xf32, #tpu.memory_space<vmem>>, vector<8x1xf32>
    %149 = vector.broadcast %148 : vector<8x1xf32> to vector<8x128xf32>
    %150 = arith.addf %147, %149 : vector<8x128xf32>
    %cst_200 = arith.constant 0.000000e+00 : f32
    %151 = vector.broadcast %cst_200 : f32 to vector<8x128xf32>
    %152 = arith.subf %151, %150 : vector<8x128xf32>
    %153 = math.exp %152 : vector<8x128xf32>
    %cst_201 = arith.constant 1.000000e+00 : f32
    %154 = vector.broadcast %cst_201 : f32 to vector<8x128xf32>
    %155 = arith.addf %154, %153 : vector<8x128xf32>
    %156 = tpu.reciprocal %155 {approx = true} : vector<8x128xf32> -> vector<8x128xf32>
    %157 = arith.mulf %150, %156 : vector<8x128xf32>
    %c0_202 = arith.constant 0 : index
    %c0_203 = arith.constant 0 : index
    %158 = vector.load %arg8[%c0_202, %c0_203] : memref<8x128xf32, #tpu.memory_space<vmem>>, vector<8x128xf32>
    %159 = arith.addf %158, %157 : vector<8x128xf32>
    %c0_204 = arith.constant 0 : index
    %c0_205 = arith.constant 0 : index
    %c0_206 = arith.constant 0 : index
    %160 = vector.load %arg6[%c0_204, %c0_205, %c0_206] : memref<1x8x128xf32, #tpu.memory_space<vmem>>, vector<1x8x128xf32>
    %161 = vector.shape_cast %160 : vector<1x8x128xf32> to vector<8x128xf32>
    %162 = vector.shape_cast %159 : vector<8x128xf32> to vector<1x8x128xf32>
    tpu.vector_store %arg6[%c0_204, %c0_205, %c0_206], %162 {strides = array<i32>} : memref<1x8x128xf32, #tpu.memory_space<vmem>>, vector<1x8x128xf32>,
    return
  }
  func.func @transform_0(%arg0: i32) -> (i32, i32, i32) {
    %c2_i32 = arith.constant 2 : i32
    %c0_i32 = arith.constant 0 : i32
    %c0_i32_0 = arith.constant 0 : i32
    return %arg0, %c2_i32, %c0_i32 : i32, i32, i32
  }
  func.func @transform_1(%arg0: i32) -> (i32, i32) {
    %c0_i32 = arith.constant 0 : i32
    %c0_i32_0 = arith.constant 0 : i32
    %c0_i32_1 = arith.constant 0 : i32
    return %c0_i32, %c0_i32_0 : i32, i32
  }
  func.func @transform_2(%arg0: i32) -> (i32, i32) {
    %c0_i32 = arith.constant 0 : i32
    %c0_i32_0 = arith.constant 0 : i32
    %c0_i32_1 = arith.constant 0 : i32
    return %c0_i32, %c0_i32_0 : i32, i32
  }
  func.func @transform_3(%arg0: i32) -> (i32, i32) {
    %c0_i32 = arith.constant 0 : i32
    %c0_i32_0 = arith.constant 0 : i32
    %c0_i32_1 = arith.constant 0 : i32
    return %c0_i32, %c0_i32_0 : i32, i32
  }
  func.func @transform_4(%arg0: i32) -> (i32, i32) {
    %c0_i32 = arith.constant 0 : i32
    %c0_i32_0 = arith.constant 0 : i32
    %c0_i32_1 = arith.constant 0 : i32
    return %c0_i32, %c0_i32_0 : i32, i32
  }
  func.func @transform_5(%arg0: i32) -> (i32, i32, i32) {
    %c6_i32 = arith.constant 6 : i32
    %c0_i32 = arith.constant 0 : i32
    %c0_i32_0 = arith.constant 0 : i32
    return %arg0, %c6_i32, %c0_i32 : i32, i32, i32
  }
}

module attributes {stable_mosaic.version = 11 : i64} {
  func.func @kernel(%arg0: i32, %arg1: memref<1x8x128xf32, #tpu.memory_space<vmem>>, %arg2: memref<8x240xf32, #tpu.memory_space<vmem>>, %arg3: memref<8x1xf32, #tpu.memory_space<vmem>>, %arg4: memref<8x240xf32, #tpu.memory_space<vmem>>, %arg5: memref<8x1xf32, #tpu.memory_space<vmem>>, %arg6: memref<1x8x128xf32, #tpu.memory_space<vmem>>, %arg7: memref<240x128xf32, #tpu.memory_space<vmem>>, %arg8: memref<8x128xf32, #tpu.memory_space<vmem>>, %arg9: memref<240x128xf32, #tpu.memory_space<vmem>>) attributes {dimension_semantics = [#tpu.dimension_semantics<parallel>], iteration_bounds = array<i64: 2>, scalar_prefetch = 0 : i64, scratch_operands = 3 : i64, tpu.core_type = #tpu.core_type<tc>, window_params = [{transform_indices = @transform_0, window_bounds = array<i64: 1, 8, 128>}, {pipeline_mode = #tpu.pipeline_mode<synchronous>, transform_indices = @transform_1, window_bounds = array<i64: 8, 240>}, {pipeline_mode = #tpu.pipeline_mode<synchronous>, transform_indices = @transform_2, window_bounds = array<i64: 8, 1>}, {pipeline_mode = #tpu.pipeline_mode<synchronous>, transform_indices = @transform_3, window_bounds = array<i64: 8, 240>}, {pipeline_mode = #tpu.pipeline_mode<synchronous>, transform_indices = @transform_4, window_bounds = array<i64: 8, 1>}, {transform_indices = @transform_5, window_bounds = array<i64: 1, 8, 128>}]} {
    %cst = arith.constant 0.000000e+00 : f32
    %0 = vector.broadcast %cst : f32 to vector<8x29xf32>
    %c0 = arith.constant 0 : index
    %c0_0 = arith.constant 0 : index
    %1 = vector.load %arg7[%c0, %c0_0] : memref<240x128xf32, #tpu.memory_space<vmem>>, vector<8x29xf32>
    tpu.vector_store %arg7[%c0, %c0_0], %0 {strides = array<i32>} : memref<240x128xf32, #tpu.memory_space<vmem>>, vector<8x29xf32>,
    %c0_1 = arith.constant 0 : index
    %c0_2 = arith.constant 0 : index
    %c0_3 = arith.constant 0 : index
    %2 = vector.load %arg1[%c0_1, %c0_2, %c0_3] : memref<1x8x128xf32, #tpu.memory_space<vmem>>, vector<1x8x99xf32>
    %3 = vector.shape_cast %2 : vector<1x8x99xf32> to vector<8x99xf32>
    %c0_4 = arith.constant 0 : index
    %c29 = arith.constant 29 : index
    %4 = vector.load %arg7[%c0_4, %c29] : memref<240x128xf32, #tpu.memory_space<vmem>>, vector<8x99xf32>
    tpu.vector_store %arg7[%c0_4, %c29], %3 {strides = array<i32>} : memref<240x128xf32, #tpu.memory_space<vmem>>, vector<8x99xf32>,
    %cst_5 = arith.constant 0.000000e+00 : f32
    %5 = vector.broadcast %cst_5 : f32 to vector<8x27xf32>
    %c8 = arith.constant 8 : index
    %c0_6 = arith.constant 0 : index
    %6 = vector.load %arg7[%c8, %c0_6] : memref<240x128xf32, #tpu.memory_space<vmem>>, vector<8x27xf32>
    tpu.vector_store %arg7[%c8, %c0_6], %5 {strides = array<i32>} : memref<240x128xf32, #tpu.memory_space<vmem>>, vector<8x27xf32>,
    %c0_7 = arith.constant 0 : index
    %c0_8 = arith.constant 0 : index
    %c0_9 = arith.constant 0 : index
    %7 = vector.load %arg1[%c0_7, %c0_8, %c0_9] : memref<1x8x128xf32, #tpu.memory_space<vmem>>, vector<1x8x101xf32>
    %8 = vector.shape_cast %7 : vector<1x8x101xf32> to vector<8x101xf32>
    %c8_10 = arith.constant 8 : index
    %c27 = arith.constant 27 : index
    %9 = vector.load %arg7[%c8_10, %c27] : memref<240x128xf32, #tpu.memory_space<vmem>>, vector<8x101xf32>
    tpu.vector_store %arg7[%c8_10, %c27], %8 {strides = array<i32>} : memref<240x128xf32, #tpu.memory_space<vmem>>, vector<8x101xf32>,
    %cst_11 = arith.constant 0.000000e+00 : f32
    %10 = vector.broadcast %cst_11 : f32 to vector<8x25xf32>
    %c16 = arith.constant 16 : index
    %c0_12 = arith.constant 0 : index
    %11 = vector.load %arg7[%c16, %c0_12] : memref<240x128xf32, #tpu.memory_space<vmem>>, vector<8x25xf32>
    tpu.vector_store %arg7[%c16, %c0_12], %10 {strides = array<i32>} : memref<240x128xf32, #tpu.memory_space<vmem>>, vector<8x25xf32>,
    %c0_13 = arith.constant 0 : index
    %c0_14 = arith.constant 0 : index
    %c0_15 = arith.constant 0 : index
    %12 = vector.load %arg1[%c0_13, %c0_14, %c0_15] : memref<1x8x128xf32, #tpu.memory_space<vmem>>, vector<1x8x103xf32>
    %13 = vector.shape_cast %12 : vector<1x8x103xf32> to vector<8x103xf32>
    %c16_16 = arith.constant 16 : index
    %c25 = arith.constant 25 : index
    %14 = vector.load %arg7[%c16_16, %c25] : memref<240x128xf32, #tpu.memory_space<vmem>>, vector<8x103xf32>
    tpu.vector_store %arg7[%c16_16, %c25], %13 {strides = array<i32>} : memref<240x128xf32, #tpu.memory_space<vmem>>, vector<8x103xf32>,
    %cst_17 = arith.constant 0.000000e+00 : f32
    %15 = vector.broadcast %cst_17 : f32 to vector<8x23xf32>
    %c24 = arith.constant 24 : index
    %c0_18 = arith.constant 0 : index
    %16 = vector.load %arg7[%c24, %c0_18] : memref<240x128xf32, #tpu.memory_space<vmem>>, vector<8x23xf32>
    tpu.vector_store %arg7[%c24, %c0_18], %15 {strides = array<i32>} : memref<240x128xf32, #tpu.memory_space<vmem>>, vector<8x23xf32>,
    %c0_19 = arith.constant 0 : index
    %c0_20 = arith.constant 0 : index
    %c0_21 = arith.constant 0 : index
    %17 = vector.load %arg1[%c0_19, %c0_20, %c0_21] : memref<1x8x128xf32, #tpu.memory_space<vmem>>, vector<1x8x105xf32>
    %18 = vector.shape_cast %17 : vector<1x8x105xf32> to vector<8x105xf32>
    %c24_22 = arith.constant 24 : index
    %c23 = arith.constant 23 : index
    %19 = vector.load %arg7[%c24_22, %c23] : memref<240x128xf32, #tpu.memory_space<vmem>>, vector<8x105xf32>
    tpu.vector_store %arg7[%c24_22, %c23], %18 {strides = array<i32>} : memref<240x128xf32, #tpu.memory_space<vmem>>, vector<8x105xf32>,
    %cst_23 = arith.constant 0.000000e+00 : f32
    %20 = vector.broadcast %cst_23 : f32 to vector<8x21xf32>
    %c32 = arith.constant 32 : index
    %c0_24 = arith.constant 0 : index
    %21 = vector.load %arg7[%c32, %c0_24] : memref<240x128xf32, #tpu.memory_space<vmem>>, vector<8x21xf32>
    tpu.vector_store %arg7[%c32, %c0_24], %20 {strides = array<i32>} : memref<240x128xf32, #tpu.memory_space<vmem>>, vector<8x21xf32>,
    %c0_25 = arith.constant 0 : index
    %c0_26 = arith.constant 0 : index
    %c0_27 = arith.constant 0 : index
    %22 = vector.load %arg1[%c0_25, %c0_26, %c0_27] : memref<1x8x128xf32, #tpu.memory_space<vmem>>, vector<1x8x107xf32>
    %23 = vector.shape_cast %22 : vector<1x8x107xf32> to vector<8x107xf32>
    %c32_28 = arith.constant 32 : index
    %c21 = arith.constant 21 : index
    %24 = vector.load %arg7[%c32_28, %c21] : memref<240x128xf32, #tpu.memory_space<vmem>>, vector<8x107xf32>
    tpu.vector_store %arg7[%c32_28, %c21], %23 {strides = array<i32>} : memref<240x128xf32, #tpu.memory_space<vmem>>, vector<8x107xf32>,
    %cst_29 = arith.constant 0.000000e+00 : f32
    %25 = vector.broadcast %cst_29 : f32 to vector<8x19xf32>
    %c40 = arith.constant 40 : index
    %c0_30 = arith.constant 0 : index
    %26 = vector.load %arg7[%c40, %c0_30] : memref<240x128xf32, #tpu.memory_space<vmem>>, vector<8x19xf32>
    tpu.vector_store %arg7[%c40, %c0_30], %25 {strides = array<i32>} : memref<240x128xf32, #tpu.memory_space<vmem>>, vector<8x19xf32>,
    %c0_31 = arith.constant 0 : index
    %c0_32 = arith.constant 0 : index
    %c0_33 = arith.constant 0 : index
    %27 = vector.load %arg1[%c0_31, %c0_32, %c0_33] : memref<1x8x128xf32, #tpu.memory_space<vmem>>, vector<1x8x109xf32>
    %28 = vector.shape_cast %27 : vector<1x8x109xf32> to vector<8x109xf32>
    %c40_34 = arith.constant 40 : index
    %c19 = arith.constant 19 : index
    %29 = vector.load %arg7[%c40_34, %c19] : memref<240x128xf32, #tpu.memory_space<vmem>>, vector<8x109xf32>
    tpu.vector_store %arg7[%c40_34, %c19], %28 {strides = array<i32>} : memref<240x128xf32, #tpu.memory_space<vmem>>, vector<8x109xf32>,
    %cst_35 = arith.constant 0.000000e+00 : f32
    %30 = vector.broadcast %cst_35 : f32 to vector<8x17xf32>
    %c48 = arith.constant 48 : index
    %c0_36 = arith.constant 0 : index
    %31 = vector.load %arg7[%c48, %c0_36] : memref<240x128xf32, #tpu.memory_space<vmem>>, vector<8x17xf32>
    tpu.vector_store %arg7[%c48, %c0_36], %30 {strides = array<i32>} : memref<240x128xf32, #tpu.memory_space<vmem>>, vector<8x17xf32>,
    %c0_37 = arith.constant 0 : index
    %c0_38 = arith.constant 0 : index
    %c0_39 = arith.constant 0 : index
    %32 = vector.load %arg1[%c0_37, %c0_38, %c0_39] : memref<1x8x128xf32, #tpu.memory_space<vmem>>, vector<1x8x111xf32>
    %33 = vector.shape_cast %32 : vector<1x8x111xf32> to vector<8x111xf32>
    %c48_40 = arith.constant 48 : index
    %c17 = arith.constant 17 : index
    %34 = vector.load %arg7[%c48_40, %c17] : memref<240x128xf32, #tpu.memory_space<vmem>>, vector<8x111xf32>
    tpu.vector_store %arg7[%c48_40, %c17], %33 {strides = array<i32>} : memref<240x128xf32, #tpu.memory_space<vmem>>, vector<8x111xf32>,
    %cst_41 = arith.constant 0.000000e+00 : f32
    %35 = vector.broadcast %cst_41 : f32 to vector<8x15xf32>
    %c56 = arith.constant 56 : index
    %c0_42 = arith.constant 0 : index
    %36 = vector.load %arg7[%c56, %c0_42] : memref<240x128xf32, #tpu.memory_space<vmem>>, vector<8x15xf32>
    tpu.vector_store %arg7[%c56, %c0_42], %35 {strides = array<i32>} : memref<240x128xf32, #tpu.memory_space<vmem>>, vector<8x15xf32>,
    %c0_43 = arith.constant 0 : index
    %c0_44 = arith.constant 0 : index
    %c0_45 = arith.constant 0 : index
    %37 = vector.load %arg1[%c0_43, %c0_44, %c0_45] : memref<1x8x128xf32, #tpu.memory_space<vmem>>, vector<1x8x113xf32>
    %38 = vector.shape_cast %37 : vector<1x8x113xf32> to vector<8x113xf32>
    %c56_46 = arith.constant 56 : index
    %c15 = arith.constant 15 : index
    %39 = vector.load %arg7[%c56_46, %c15] : memref<240x128xf32, #tpu.memory_space<vmem>>, vector<8x113xf32>
    tpu.vector_store %arg7[%c56_46, %c15], %38 {strides = array<i32>} : memref<240x128xf32, #tpu.memory_space<vmem>>, vector<8x113xf32>,
    %cst_47 = arith.constant 0.000000e+00 : f32
    %40 = vector.broadcast %cst_47 : f32 to vector<8x13xf32>
    %c64 = arith.constant 64 : index
    %c0_48 = arith.constant 0 : index
    %41 = vector.load %arg7[%c64, %c0_48] : memref<240x128xf32, #tpu.memory_space<vmem>>, vector<8x13xf32>
    tpu.vector_store %arg7[%c64, %c0_48], %40 {strides = array<i32>} : memref<240x128xf32, #tpu.memory_space<vmem>>, vector<8x13xf32>,
    %c0_49 = arith.constant 0 : index
    %c0_50 = arith.constant 0 : index
    %c0_51 = arith.constant 0 : index
    %42 = vector.load %arg1[%c0_49, %c0_50, %c0_51] : memref<1x8x128xf32, #tpu.memory_space<vmem>>, vector<1x8x115xf32>
    %43 = vector.shape_cast %42 : vector<1x8x115xf32> to vector<8x115xf32>
    %c64_52 = arith.constant 64 : index
    %c13 = arith.constant 13 : index
    %44 = vector.load %arg7[%c64_52, %c13] : memref<240x128xf32, #tpu.memory_space<vmem>>, vector<8x115xf32>
    tpu.vector_store %arg7[%c64_52, %c13], %43 {strides = array<i32>} : memref<240x128xf32, #tpu.memory_space<vmem>>, vector<8x115xf32>,
    %cst_53 = arith.constant 0.000000e+00 : f32
    %45 = vector.broadcast %cst_53 : f32 to vector<8x11xf32>
    %c72 = arith.constant 72 : index
    %c0_54 = arith.constant 0 : index
    %46 = vector.load %arg7[%c72, %c0_54] : memref<240x128xf32, #tpu.memory_space<vmem>>, vector<8x11xf32>
    tpu.vector_store %arg7[%c72, %c0_54], %45 {strides = array<i32>} : memref<240x128xf32, #tpu.memory_space<vmem>>, vector<8x11xf32>,
    %c0_55 = arith.constant 0 : index
    %c0_56 = arith.constant 0 : index
    %c0_57 = arith.constant 0 : index
    %47 = vector.load %arg1[%c0_55, %c0_56, %c0_57] : memref<1x8x128xf32, #tpu.memory_space<vmem>>, vector<1x8x117xf32>
    %48 = vector.shape_cast %47 : vector<1x8x117xf32> to vector<8x117xf32>
    %c72_58 = arith.constant 72 : index
    %c11 = arith.constant 11 : index
    %49 = vector.load %arg7[%c72_58, %c11] : memref<240x128xf32, #tpu.memory_space<vmem>>, vector<8x117xf32>
    tpu.vector_store %arg7[%c72_58, %c11], %48 {strides = array<i32>} : memref<240x128xf32, #tpu.memory_space<vmem>>, vector<8x117xf32>,
    %cst_59 = arith.constant 0.000000e+00 : f32
    %50 = vector.broadcast %cst_59 : f32 to vector<8x9xf32>
    %c80 = arith.constant 80 : index
    %c0_60 = arith.constant 0 : index
    %51 = vector.load %arg7[%c80, %c0_60] : memref<240x128xf32, #tpu.memory_space<vmem>>, vector<8x9xf32>
    tpu.vector_store %arg7[%c80, %c0_60], %50 {strides = array<i32>} : memref<240x128xf32, #tpu.memory_space<vmem>>, vector<8x9xf32>,
    %c0_61 = arith.constant 0 : index
    %c0_62 = arith.constant 0 : index
    %c0_63 = arith.constant 0 : index
    %52 = vector.load %arg1[%c0_61, %c0_62, %c0_63] : memref<1x8x128xf32, #tpu.memory_space<vmem>>, vector<1x8x119xf32>
    %53 = vector.shape_cast %52 : vector<1x8x119xf32> to vector<8x119xf32>
    %c80_64 = arith.constant 80 : index
    %c9 = arith.constant 9 : index
    %54 = vector.load %arg7[%c80_64, %c9] : memref<240x128xf32, #tpu.memory_space<vmem>>, vector<8x119xf32>
    tpu.vector_store %arg7[%c80_64, %c9], %53 {strides = array<i32>} : memref<240x128xf32, #tpu.memory_space<vmem>>, vector<8x119xf32>,
    %cst_65 = arith.constant 0.000000e+00 : f32
    %55 = vector.broadcast %cst_65 : f32 to vector<8x7xf32>
    %c88 = arith.constant 88 : index
    %c0_66 = arith.constant 0 : index
    %56 = vector.load %arg7[%c88, %c0_66] : memref<240x128xf32, #tpu.memory_space<vmem>>, vector<8x7xf32>
    tpu.vector_store %arg7[%c88, %c0_66], %55 {strides = array<i32>} : memref<240x128xf32, #tpu.memory_space<vmem>>, vector<8x7xf32>,
    %c0_67 = arith.constant 0 : index
    %c0_68 = arith.constant 0 : index
    %c0_69 = arith.constant 0 : index
    %57 = vector.load %arg1[%c0_67, %c0_68, %c0_69] : memref<1x8x128xf32, #tpu.memory_space<vmem>>, vector<1x8x121xf32>
    %58 = vector.shape_cast %57 : vector<1x8x121xf32> to vector<8x121xf32>
    %c88_70 = arith.constant 88 : index
    %c7 = arith.constant 7 : index
    %59 = vector.load %arg7[%c88_70, %c7] : memref<240x128xf32, #tpu.memory_space<vmem>>, vector<8x121xf32>
    tpu.vector_store %arg7[%c88_70, %c7], %58 {strides = array<i32>} : memref<240x128xf32, #tpu.memory_space<vmem>>, vector<8x121xf32>,
    %cst_71 = arith.constant 0.000000e+00 : f32
    %60 = vector.broadcast %cst_71 : f32 to vector<8x5xf32>
    %c96 = arith.constant 96 : index
    %c0_72 = arith.constant 0 : index
    %61 = vector.load %arg7[%c96, %c0_72] : memref<240x128xf32, #tpu.memory_space<vmem>>, vector<8x5xf32>
    tpu.vector_store %arg7[%c96, %c0_72], %60 {strides = array<i32>} : memref<240x128xf32, #tpu.memory_space<vmem>>, vector<8x5xf32>,
    %c0_73 = arith.constant 0 : index
    %c0_74 = arith.constant 0 : index
    %c0_75 = arith.constant 0 : index
    %62 = vector.load %arg1[%c0_73, %c0_74, %c0_75] : memref<1x8x128xf32, #tpu.memory_space<vmem>>, vector<1x8x123xf32>
    %63 = vector.shape_cast %62 : vector<1x8x123xf32> to vector<8x123xf32>
    %c96_76 = arith.constant 96 : index
    %c5 = arith.constant 5 : index
    %64 = vector.load %arg7[%c96_76, %c5] : memref<240x128xf32, #tpu.memory_space<vmem>>, vector<8x123xf32>
    tpu.vector_store %arg7[%c96_76, %c5], %63 {strides = array<i32>} : memref<240x128xf32, #tpu.memory_space<vmem>>, vector<8x123xf32>,
    %cst_77 = arith.constant 0.000000e+00 : f32
    %65 = vector.broadcast %cst_77 : f32 to vector<8x3xf32>
    %c104 = arith.constant 104 : index
    %c0_78 = arith.constant 0 : index
    %66 = vector.load %arg7[%c104, %c0_78] : memref<240x128xf32, #tpu.memory_space<vmem>>, vector<8x3xf32>
    tpu.vector_store %arg7[%c104, %c0_78], %65 {strides = array<i32>} : memref<240x128xf32, #tpu.memory_space<vmem>>, vector<8x3xf32>,
    %c0_79 = arith.constant 0 : index
    %c0_80 = arith.constant 0 : index
    %c0_81 = arith.constant 0 : index
    %67 = vector.load %arg1[%c0_79, %c0_80, %c0_81] : memref<1x8x128xf32, #tpu.memory_space<vmem>>, vector<1x8x125xf32>
    %68 = vector.shape_cast %67 : vector<1x8x125xf32> to vector<8x125xf32>
    %c104_82 = arith.constant 104 : index
    %c3 = arith.constant 3 : index
    %69 = vector.load %arg7[%c104_82, %c3] : memref<240x128xf32, #tpu.memory_space<vmem>>, vector<8x125xf32>
    tpu.vector_store %arg7[%c104_82, %c3], %68 {strides = array<i32>} : memref<240x128xf32, #tpu.memory_space<vmem>>, vector<8x125xf32>,
    %cst_83 = arith.constant 0.000000e+00 : f32
    %70 = vector.broadcast %cst_83 : f32 to vector<8x1xf32>
    %c112 = arith.constant 112 : index
    %c0_84 = arith.constant 0 : index
    %71 = vector.load %arg7[%c112, %c0_84] : memref<240x128xf32, #tpu.memory_space<vmem>>, vector<8x1xf32>
    tpu.vector_store %arg7[%c112, %c0_84], %70 {strides = array<i32>} : memref<240x128xf32, #tpu.memory_space<vmem>>, vector<8x1xf32>,
    %c0_85 = arith.constant 0 : index
    %c0_86 = arith.constant 0 : index
    %c0_87 = arith.constant 0 : index
    %72 = vector.load %arg1[%c0_85, %c0_86, %c0_87] : memref<1x8x128xf32, #tpu.memory_space<vmem>>, vector<1x8x127xf32>
    %73 = vector.shape_cast %72 : vector<1x8x127xf32> to vector<8x127xf32>
    %c112_88 = arith.constant 112 : index
    %c1 = arith.constant 1 : index
    %74 = vector.load %arg7[%c112_88, %c1] : memref<240x128xf32, #tpu.memory_space<vmem>>, vector<8x127xf32>
    tpu.vector_store %arg7[%c112_88, %c1], %73 {strides = array<i32>} : memref<240x128xf32, #tpu.memory_space<vmem>>, vector<8x127xf32>,
    %cst_89 = arith.constant 0.000000e+00 : f32
    %75 = vector.broadcast %cst_89 : f32 to vector<8x1xf32>
    %c120 = arith.constant 120 : index
    %c127 = arith.constant 127 : index
    %76 = vector.load %arg7[%c120, %c127] : memref<240x128xf32, #tpu.memory_space<vmem>>, vector<8x1xf32>
    tpu.vector_store %arg7[%c120, %c127], %75 {strides = array<i32>} : memref<240x128xf32, #tpu.memory_space<vmem>>, vector<8x1xf32>,
    %c0_90 = arith.constant 0 : index
    %c0_91 = arith.constant 0 : index
    %c1_92 = arith.constant 1 : index
    %77 = vector.load %arg1[%c0_90, %c0_91, %c1_92] : memref<1x8x128xf32, #tpu.memory_space<vmem>>, vector<1x8x127xf32>
    %78 = vector.shape_cast %77 : vector<1x8x127xf32> to vector<8x127xf32>
    %c120_93 = arith.constant 120 : index
    %c0_94 = arith.constant 0 : index
    %79 = vector.load %arg7[%c120_93, %c0_94] : memref<240x128xf32, #tpu.memory_space<vmem>>, vector<8x127xf32>
    tpu.vector_store %arg7[%c120_93, %c0_94], %78 {strides = array<i32>} : memref<240x128xf32, #tpu.memory_space<vmem>>, vector<8x127xf32>,
    %cst_95 = arith.constant 0.000000e+00 : f32
    %80 = vector.broadcast %cst_95 : f32 to vector<8x3xf32>
    %c128 = arith.constant 128 : index
    %c125 = arith.constant 125 : index
    %81 = vector.load %arg7[%c128, %c125] : memref<240x128xf32, #tpu.memory_space<vmem>>, vector<8x3xf32>
    tpu.vector_store %arg7[%c128, %c125], %80 {strides = array<i32>} : memref<240x128xf32, #tpu.memory_space<vmem>>, vector<8x3xf32>,
    %c0_96 = arith.constant 0 : index
    %c0_97 = arith.constant 0 : index
    %c3_98 = arith.constant 3 : index
    %82 = vector.load %arg1[%c0_96, %c0_97, %c3_98] : memref<1x8x128xf32, #tpu.memory_space<vmem>>, vector<1x8x125xf32>
    %83 = vector.shape_cast %82 : vector<1x8x125xf32> to vector<8x125xf32>
    %c128_99 = arith.constant 128 : index
    %c0_100 = arith.constant 0 : index
    %84 = vector.load %arg7[%c128_99, %c0_100] : memref<240x128xf32, #tpu.memory_space<vmem>>, vector<8x125xf32>
    tpu.vector_store %arg7[%c128_99, %c0_100], %83 {strides = array<i32>} : memref<240x128xf32, #tpu.memory_space<vmem>>, vector<8x125xf32>,
    %cst_101 = arith.constant 0.000000e+00 : f32
    %85 = vector.broadcast %cst_101 : f32 to vector<8x5xf32>
    %c136 = arith.constant 136 : index
    %c123 = arith.constant 123 : index
    %86 = vector.load %arg7[%c136, %c123] : memref<240x128xf32, #tpu.memory_space<vmem>>, vector<8x5xf32>
    tpu.vector_store %arg7[%c136, %c123], %85 {strides = array<i32>} : memref<240x128xf32, #tpu.memory_space<vmem>>, vector<8x5xf32>,
    %c0_102 = arith.constant 0 : index
    %c0_103 = arith.constant 0 : index
    %c5_104 = arith.constant 5 : index
    %87 = vector.load %arg1[%c0_102, %c0_103, %c5_104] : memref<1x8x128xf32, #tpu.memory_space<vmem>>, vector<1x8x123xf32>
    %88 = vector.shape_cast %87 : vector<1x8x123xf32> to vector<8x123xf32>
    %c136_105 = arith.constant 136 : index
    %c0_106 = arith.constant 0 : index
    %89 = vector.load %arg7[%c136_105, %c0_106] : memref<240x128xf32, #tpu.memory_space<vmem>>, vector<8x123xf32>
    tpu.vector_store %arg7[%c136_105, %c0_106], %88 {strides = array<i32>} : memref<240x128xf32, #tpu.memory_space<vmem>>, vector<8x123xf32>,
    %cst_107 = arith.constant 0.000000e+00 : f32
    %90 = vector.broadcast %cst_107 : f32 to vector<8x7xf32>
    %c144 = arith.constant 144 : index
    %c121 = arith.constant 121 : index
    %91 = vector.load %arg7[%c144, %c121] : memref<240x128xf32, #tpu.memory_space<vmem>>, vector<8x7xf32>
    tpu.vector_store %arg7[%c144, %c121], %90 {strides = array<i32>} : memref<240x128xf32, #tpu.memory_space<vmem>>, vector<8x7xf32>,
    %c0_108 = arith.constant 0 : index
    %c0_109 = arith.constant 0 : index
    %c7_110 = arith.constant 7 : index
    %92 = vector.load %arg1[%c0_108, %c0_109, %c7_110] : memref<1x8x128xf32, #tpu.memory_space<vmem>>, vector<1x8x121xf32>
    %93 = vector.shape_cast %92 : vector<1x8x121xf32> to vector<8x121xf32>
    %c144_111 = arith.constant 144 : index
    %c0_112 = arith.constant 0 : index
    %94 = vector.load %arg7[%c144_111, %c0_112] : memref<240x128xf32, #tpu.memory_space<vmem>>, vector<8x121xf32>
    tpu.vector_store %arg7[%c144_111, %c0_112], %93 {strides = array<i32>} : memref<240x128xf32, #tpu.memory_space<vmem>>, vector<8x121xf32>,
    %cst_113 = arith.constant 0.000000e+00 : f32
    %95 = vector.broadcast %cst_113 : f32 to vector<8x9xf32>
    %c152 = arith.constant 152 : index
    %c119 = arith.constant 119 : index
    %96 = vector.load %arg7[%c152, %c119] : memref<240x128xf32, #tpu.memory_space<vmem>>, vector<8x9xf32>
    tpu.vector_store %arg7[%c152, %c119], %95 {strides = array<i32>} : memref<240x128xf32, #tpu.memory_space<vmem>>, vector<8x9xf32>,
    %c0_114 = arith.constant 0 : index
    %c0_115 = arith.constant 0 : index
    %c9_116 = arith.constant 9 : index
    %97 = vector.load %arg1[%c0_114, %c0_115, %c9_116] : memref<1x8x128xf32, #tpu.memory_space<vmem>>, vector<1x8x119xf32>
    %98 = vector.shape_cast %97 : vector<1x8x119xf32> to vector<8x119xf32>
    %c152_117 = arith.constant 152 : index
    %c0_118 = arith.constant 0 : index
    %99 = vector.load %arg7[%c152_117, %c0_118] : memref<240x128xf32, #tpu.memory_space<vmem>>, vector<8x119xf32>
    tpu.vector_store %arg7[%c152_117, %c0_118], %98 {strides = array<i32>} : memref<240x128xf32, #tpu.memory_space<vmem>>, vector<8x119xf32>,
    %cst_119 = arith.constant 0.000000e+00 : f32
    %100 = vector.broadcast %cst_119 : f32 to vector<8x11xf32>
    %c160 = arith.constant 160 : index
    %c117 = arith.constant 117 : index
    %101 = vector.load %arg7[%c160, %c117] : memref<240x128xf32, #tpu.memory_space<vmem>>, vector<8x11xf32>
    tpu.vector_store %arg7[%c160, %c117], %100 {strides = array<i32>} : memref<240x128xf32, #tpu.memory_space<vmem>>, vector<8x11xf32>,
    %c0_120 = arith.constant 0 : index
    %c0_121 = arith.constant 0 : index
    %c11_122 = arith.constant 11 : index
    %102 = vector.load %arg1[%c0_120, %c0_121, %c11_122] : memref<1x8x128xf32, #tpu.memory_space<vmem>>, vector<1x8x117xf32>
    %103 = vector.shape_cast %102 : vector<1x8x117xf32> to vector<8x117xf32>
    %c160_123 = arith.constant 160 : index
    %c0_124 = arith.constant 0 : index
    %104 = vector.load %arg7[%c160_123, %c0_124] : memref<240x128xf32, #tpu.memory_space<vmem>>, vector<8x117xf32>
    tpu.vector_store %arg7[%c160_123, %c0_124], %103 {strides = array<i32>} : memref<240x128xf32, #tpu.memory_space<vmem>>, vector<8x117xf32>,
    %cst_125 = arith.constant 0.000000e+00 : f32
    %105 = vector.broadcast %cst_125 : f32 to vector<8x13xf32>
    %c168 = arith.constant 168 : index
    %c115 = arith.constant 115 : index
    %106 = vector.load %arg7[%c168, %c115] : memref<240x128xf32, #tpu.memory_space<vmem>>, vector<8x13xf32>
    tpu.vector_store %arg7[%c168, %c115], %105 {strides = array<i32>} : memref<240x128xf32, #tpu.memory_space<vmem>>, vector<8x13xf32>,
    %c0_126 = arith.constant 0 : index
    %c0_127 = arith.constant 0 : index
    %c13_128 = arith.constant 13 : index
    %107 = vector.load %arg1[%c0_126, %c0_127, %c13_128] : memref<1x8x128xf32, #tpu.memory_space<vmem>>, vector<1x8x115xf32>
    %108 = vector.shape_cast %107 : vector<1x8x115xf32> to vector<8x115xf32>
    %c168_129 = arith.constant 168 : index
    %c0_130 = arith.constant 0 : index
    %109 = vector.load %arg7[%c168_129, %c0_130] : memref<240x128xf32, #tpu.memory_space<vmem>>, vector<8x115xf32>
    tpu.vector_store %arg7[%c168_129, %c0_130], %108 {strides = array<i32>} : memref<240x128xf32, #tpu.memory_space<vmem>>, vector<8x115xf32>,
    %cst_131 = arith.constant 0.000000e+00 : f32
    %110 = vector.broadcast %cst_131 : f32 to vector<8x15xf32>
    %c176 = arith.constant 176 : index
    %c113 = arith.constant 113 : index
    %111 = vector.load %arg7[%c176, %c113] : memref<240x128xf32, #tpu.memory_space<vmem>>, vector<8x15xf32>
    tpu.vector_store %arg7[%c176, %c113], %110 {strides = array<i32>} : memref<240x128xf32, #tpu.memory_space<vmem>>, vector<8x15xf32>,
    %c0_132 = arith.constant 0 : index
    %c0_133 = arith.constant 0 : index
    %c15_134 = arith.constant 15 : index
    %112 = vector.load %arg1[%c0_132, %c0_133, %c15_134] : memref<1x8x128xf32, #tpu.memory_space<vmem>>, vector<1x8x113xf32>
    %113 = vector.shape_cast %112 : vector<1x8x113xf32> to vector<8x113xf32>
    %c176_135 = arith.constant 176 : index
    %c0_136 = arith.constant 0 : index
    %114 = vector.load %arg7[%c176_135, %c0_136] : memref<240x128xf32, #tpu.memory_space<vmem>>, vector<8x113xf32>
    tpu.vector_store %arg7[%c176_135, %c0_136], %113 {strides = array<i32>} : memref<240x128xf32, #tpu.memory_space<vmem>>, vector<8x113xf32>,
    %cst_137 = arith.constant 0.000000e+00 : f32
    %115 = vector.broadcast %cst_137 : f32 to vector<8x17xf32>
    %c184 = arith.constant 184 : index
    %c111 = arith.constant 111 : index
    %116 = vector.load %arg7[%c184, %c111] : memref<240x128xf32, #tpu.memory_space<vmem>>, vector<8x17xf32>
    tpu.vector_store %arg7[%c184, %c111], %115 {strides = array<i32>} : memref<240x128xf32, #tpu.memory_space<vmem>>, vector<8x17xf32>,
    %c0_138 = arith.constant 0 : index
    %c0_139 = arith.constant 0 : index
    %c17_140 = arith.constant 17 : index
    %117 = vector.load %arg1[%c0_138, %c0_139, %c17_140] : memref<1x8x128xf32, #tpu.memory_space<vmem>>, vector<1x8x111xf32>
    %118 = vector.shape_cast %117 : vector<1x8x111xf32> to vector<8x111xf32>
    %c184_141 = arith.constant 184 : index
    %c0_142 = arith.constant 0 : index
    %119 = vector.load %arg7[%c184_141, %c0_142] : memref<240x128xf32, #tpu.memory_space<vmem>>, vector<8x111xf32>
    tpu.vector_store %arg7[%c184_141, %c0_142], %118 {strides = array<i32>} : memref<240x128xf32, #tpu.memory_space<vmem>>, vector<8x111xf32>,
    %cst_143 = arith.constant 0.000000e+00 : f32
    %120 = vector.broadcast %cst_143 : f32 to vector<8x19xf32>
    %c192 = arith.constant 192 : index
    %c109 = arith.constant 109 : index
    %121 = vector.load %arg7[%c192, %c109] : memref<240x128xf32, #tpu.memory_space<vmem>>, vector<8x19xf32>
    tpu.vector_store %arg7[%c192, %c109], %120 {strides = array<i32>} : memref<240x128xf32, #tpu.memory_space<vmem>>, vector<8x19xf32>,
    %c0_144 = arith.constant 0 : index
    %c0_145 = arith.constant 0 : index
    %c19_146 = arith.constant 19 : index
    %122 = vector.load %arg1[%c0_144, %c0_145, %c19_146] : memref<1x8x128xf32, #tpu.memory_space<vmem>>, vector<1x8x109xf32>
    %123 = vector.shape_cast %122 : vector<1x8x109xf32> to vector<8x109xf32>
    %c192_147 = arith.constant 192 : index
    %c0_148 = arith.constant 0 : index
    %124 = vector.load %arg7[%c192_147, %c0_148] : memref<240x128xf32, #tpu.memory_space<vmem>>, vector<8x109xf32>
    tpu.vector_store %arg7[%c192_147, %c0_148], %123 {strides = array<i32>} : memref<240x128xf32, #tpu.memory_space<vmem>>, vector<8x109xf32>,
    %cst_149 = arith.constant 0.000000e+00 : f32
    %125 = vector.broadcast %cst_149 : f32 to vector<8x21xf32>
    %c200 = arith.constant 200 : index
    %c107 = arith.constant 107 : index
    %126 = vector.load %arg7[%c200, %c107] : memref<240x128xf32, #tpu.memory_space<vmem>>, vector<8x21xf32>
    tpu.vector_store %arg7[%c200, %c107], %125 {strides = array<i32>} : memref<240x128xf32, #tpu.memory_space<vmem>>, vector<8x21xf32>,
    %c0_150 = arith.constant 0 : index
    %c0_151 = arith.constant 0 : index
    %c21_152 = arith.constant 21 : index
    %127 = vector.load %arg1[%c0_150, %c0_151, %c21_152] : memref<1x8x128xf32, #tpu.memory_space<vmem>>, vector<1x8x107xf32>
    %128 = vector.shape_cast %127 : vector<1x8x107xf32> to vector<8x107xf32>
    %c200_153 = arith.constant 200 : index
    %c0_154 = arith.constant 0 : index
    %129 = vector.load %arg7[%c200_153, %c0_154] : memref<240x128xf32, #tpu.memory_space<vmem>>, vector<8x107xf32>
    tpu.vector_store %arg7[%c200_153, %c0_154], %128 {strides = array<i32>} : memref<240x128xf32, #tpu.memory_space<vmem>>, vector<8x107xf32>,
    %cst_155 = arith.constant 0.000000e+00 : f32
    %130 = vector.broadcast %cst_155 : f32 to vector<8x23xf32>
    %c208 = arith.constant 208 : index
    %c105 = arith.constant 105 : index
    %131 = vector.load %arg7[%c208, %c105] : memref<240x128xf32, #tpu.memory_space<vmem>>, vector<8x23xf32>
    tpu.vector_store %arg7[%c208, %c105], %130 {strides = array<i32>} : memref<240x128xf32, #tpu.memory_space<vmem>>, vector<8x23xf32>,
    %c0_156 = arith.constant 0 : index
    %c0_157 = arith.constant 0 : index
    %c23_158 = arith.constant 23 : index
    %132 = vector.load %arg1[%c0_156, %c0_157, %c23_158] : memref<1x8x128xf32, #tpu.memory_space<vmem>>, vector<1x8x105xf32>
    %133 = vector.shape_cast %132 : vector<1x8x105xf32> to vector<8x105xf32>
    %c208_159 = arith.constant 208 : index
    %c0_160 = arith.constant 0 : index
    %134 = vector.load %arg7[%c208_159, %c0_160] : memref<240x128xf32, #tpu.memory_space<vmem>>, vector<8x105xf32>
    tpu.vector_store %arg7[%c208_159, %c0_160], %133 {strides = array<i32>} : memref<240x128xf32, #tpu.memory_space<vmem>>, vector<8x105xf32>,
    %cst_161 = arith.constant 0.000000e+00 : f32
    %135 = vector.broadcast %cst_161 : f32 to vector<8x25xf32>
    %c216 = arith.constant 216 : index
    %c103 = arith.constant 103 : index
    %136 = vector.load %arg7[%c216, %c103] : memref<240x128xf32, #tpu.memory_space<vmem>>, vector<8x25xf32>
    tpu.vector_store %arg7[%c216, %c103], %135 {strides = array<i32>} : memref<240x128xf32, #tpu.memory_space<vmem>>, vector<8x25xf32>,
    %c0_162 = arith.constant 0 : index
    %c0_163 = arith.constant 0 : index
    %c25_164 = arith.constant 25 : index
    %137 = vector.load %arg1[%c0_162, %c0_163, %c25_164] : memref<1x8x128xf32, #tpu.memory_space<vmem>>, vector<1x8x103xf32>
    %138 = vector.shape_cast %137 : vector<1x8x103xf32> to vector<8x103xf32>
    %c216_165 = arith.constant 216 : index
    %c0_166 = arith.constant 0 : index
    %139 = vector.load %arg7[%c216_165, %c0_166] : memref<240x128xf32, #tpu.memory_space<vmem>>, vector<8x103xf32>
    tpu.vector_store %arg7[%c216_165, %c0_166], %138 {strides = array<i32>} : memref<240x128xf32, #tpu.memory_space<vmem>>, vector<8x103xf32>,
    %cst_167 = arith.constant 0.000000e+00 : f32
    %140 = vector.broadcast %cst_167 : f32 to vector<8x27xf32>
    %c224 = arith.constant 224 : index
    %c101 = arith.constant 101 : index
    %141 = vector.load %arg7[%c224, %c101] : memref<240x128xf32, #tpu.memory_space<vmem>>, vector<8x27xf32>
    tpu.vector_store %arg7[%c224, %c101], %140 {strides = array<i32>} : memref<240x128xf32, #tpu.memory_space<vmem>>, vector<8x27xf32>,
    %c0_168 = arith.constant 0 : index
    %c0_169 = arith.constant 0 : index
    %c27_170 = arith.constant 27 : index
    %142 = vector.load %arg1[%c0_168, %c0_169, %c27_170] : memref<1x8x128xf32, #tpu.memory_space<vmem>>, vector<1x8x101xf32>
    %143 = vector.shape_cast %142 : vector<1x8x101xf32> to vector<8x101xf32>
    %c224_171 = arith.constant 224 : index
    %c0_172 = arith.constant 0 : index
    %144 = vector.load %arg7[%c224_171, %c0_172] : memref<240x128xf32, #tpu.memory_space<vmem>>, vector<8x101xf32>
    tpu.vector_store %arg7[%c224_171, %c0_172], %143 {strides = array<i32>} : memref<240x128xf32, #tpu.memory_space<vmem>>, vector<8x101xf32>,
    %cst_173 = arith.constant 0.000000e+00 : f32
    %145 = vector.broadcast %cst_173 : f32 to vector<8x29xf32>
    %c232 = arith.constant 232 : index
    %c99 = arith.constant 99 : index
    %146 = vector.load %arg7[%c232, %c99] : memref<240x128xf32, #tpu.memory_space<vmem>>, vector<8x29xf32>
    tpu.vector_store %arg7[%c232, %c99], %145 {strides = array<i32>} : memref<240x128xf32, #tpu.memory_space<vmem>>, vector<8x29xf32>,
    %c0_174 = arith.constant 0 : index
    %c0_175 = arith.constant 0 : index
    %c29_176 = arith.constant 29 : index
    %147 = vector.load %arg1[%c0_174, %c0_175, %c29_176] : memref<1x8x128xf32, #tpu.memory_space<vmem>>, vector<1x8x99xf32>
    %148 = vector.shape_cast %147 : vector<1x8x99xf32> to vector<8x99xf32>
    %c232_177 = arith.constant 232 : index
    %c0_178 = arith.constant 0 : index
    %149 = vector.load %arg7[%c232_177, %c0_178] : memref<240x128xf32, #tpu.memory_space<vmem>>, vector<8x99xf32>
    tpu.vector_store %arg7[%c232_177, %c0_178], %148 {strides = array<i32>} : memref<240x128xf32, #tpu.memory_space<vmem>>, vector<8x99xf32>,
    %c0_179 = arith.constant 0 : index
    %c0_180 = arith.constant 0 : index
    %150 = vector.load %arg2[%c0_179, %c0_180] : memref<8x240xf32, #tpu.memory_space<vmem>>, vector<8x240xf32>
    %c0_181 = arith.constant 0 : index
    %c0_182 = arith.constant 0 : index
    %151 = vector.load %arg7[%c0_181, %c0_182] : memref<240x128xf32, #tpu.memory_space<vmem>>, vector<240x128xf32>
    %cst_183 = arith.constant dense<0.000000e+00> : vector<8x128xf32>
    %152 = tpu.matmul %150, %151, %cst_183 {dimension_numbers = #tpu.dot_dimension_numbers<[1], [0], [0], [1], [0, 0, 1, 1], [], []>} : vector<8x240xf32>, vector<240x128xf32>, vector<8x128xf32> -> vector<8x128xf32>
    %c0_184 = arith.constant 0 : index
    %c0_185 = arith.constant 0 : index
    %153 = vector.load %arg3[%c0_184, %c0_185] : memref<8x1xf32, #tpu.memory_space<vmem>>, vector<8x1xf32>
    %154 = vector.broadcast %153 : vector<8x1xf32> to vector<8x128xf32>
    %155 = arith.addf %152, %154 : vector<8x128xf32>
    %cst_186 = arith.constant 0.000000e+00 : f32
    %156 = vector.broadcast %cst_186 : f32 to vector<8x128xf32>
    %157 = arith.subf %156, %155 : vector<8x128xf32>
    %158 = math.exp %157 : vector<8x128xf32>
    %cst_187 = arith.constant 1.000000e+00 : f32
    %159 = vector.broadcast %cst_187 : f32 to vector<8x128xf32>
    %160 = arith.addf %159, %158 : vector<8x128xf32>
    %161 = tpu.reciprocal %160 {approx = true} : vector<8x128xf32> -> vector<8x128xf32>
    %162 = arith.mulf %155, %161 : vector<8x128xf32>
    %c0_188 = arith.constant 0 : index
    %c0_189 = arith.constant 0 : index
    %163 = vector.load %arg8[%c0_188, %c0_189] : memref<8x128xf32, #tpu.memory_space<vmem>>, vector<8x128xf32>
    tpu.vector_store %arg8[%c0_188, %c0_189], %162 {strides = array<i32>} : memref<8x128xf32, #tpu.memory_space<vmem>>, vector<8x128xf32>,
    %cst_190 = arith.constant 0.000000e+00 : f32
    %164 = vector.broadcast %cst_190 : f32 to vector<8x29xf32>
    %c0_191 = arith.constant 0 : index
    %c0_192 = arith.constant 0 : index
    %165 = vector.load %arg9[%c0_191, %c0_192] : memref<240x128xf32, #tpu.memory_space<vmem>>, vector<8x29xf32>
    tpu.vector_store %arg9[%c0_191, %c0_192], %164 {strides = array<i32>} : memref<240x128xf32, #tpu.memory_space<vmem>>, vector<8x29xf32>,
    %c0_193 = arith.constant 0 : index
    %c0_194 = arith.constant 0 : index
    %166 = vector.load %arg8[%c0_193, %c0_194] : memref<8x128xf32, #tpu.memory_space<vmem>>, vector<8x99xf32>
    %c0_195 = arith.constant 0 : index
    %c29_196 = arith.constant 29 : index
    %167 = vector.load %arg9[%c0_195, %c29_196] : memref<240x128xf32, #tpu.memory_space<vmem>>, vector<8x99xf32>
    tpu.vector_store %arg9[%c0_195, %c29_196], %166 {strides = array<i32>} : memref<240x128xf32, #tpu.memory_space<vmem>>, vector<8x99xf32>,
    %cst_197 = arith.constant 0.000000e+00 : f32
    %168 = vector.broadcast %cst_197 : f32 to vector<8x27xf32>
    %c8_198 = arith.constant 8 : index
    %c0_199 = arith.constant 0 : index
    %169 = vector.load %arg9[%c8_198, %c0_199] : memref<240x128xf32, #tpu.memory_space<vmem>>, vector<8x27xf32>
    tpu.vector_store %arg9[%c8_198, %c0_199], %168 {strides = array<i32>} : memref<240x128xf32, #tpu.memory_space<vmem>>, vector<8x27xf32>,
    %c0_200 = arith.constant 0 : index
    %c0_201 = arith.constant 0 : index
    %170 = vector.load %arg8[%c0_200, %c0_201] : memref<8x128xf32, #tpu.memory_space<vmem>>, vector<8x101xf32>
    %c8_202 = arith.constant 8 : index
    %c27_203 = arith.constant 27 : index
    %171 = vector.load %arg9[%c8_202, %c27_203] : memref<240x128xf32, #tpu.memory_space<vmem>>, vector<8x101xf32>
    tpu.vector_store %arg9[%c8_202, %c27_203], %170 {strides = array<i32>} : memref<240x128xf32, #tpu.memory_space<vmem>>, vector<8x101xf32>,
    %cst_204 = arith.constant 0.000000e+00 : f32
    %172 = vector.broadcast %cst_204 : f32 to vector<8x25xf32>
    %c16_205 = arith.constant 16 : index
    %c0_206 = arith.constant 0 : index
    %173 = vector.load %arg9[%c16_205, %c0_206] : memref<240x128xf32, #tpu.memory_space<vmem>>, vector<8x25xf32>
    tpu.vector_store %arg9[%c16_205, %c0_206], %172 {strides = array<i32>} : memref<240x128xf32, #tpu.memory_space<vmem>>, vector<8x25xf32>,
    %c0_207 = arith.constant 0 : index
    %c0_208 = arith.constant 0 : index
    %174 = vector.load %arg8[%c0_207, %c0_208] : memref<8x128xf32, #tpu.memory_space<vmem>>, vector<8x103xf32>
    %c16_209 = arith.constant 16 : index
    %c25_210 = arith.constant 25 : index
    %175 = vector.load %arg9[%c16_209, %c25_210] : memref<240x128xf32, #tpu.memory_space<vmem>>, vector<8x103xf32>
    tpu.vector_store %arg9[%c16_209, %c25_210], %174 {strides = array<i32>} : memref<240x128xf32, #tpu.memory_space<vmem>>, vector<8x103xf32>,
    %cst_211 = arith.constant 0.000000e+00 : f32
    %176 = vector.broadcast %cst_211 : f32 to vector<8x23xf32>
    %c24_212 = arith.constant 24 : index
    %c0_213 = arith.constant 0 : index
    %177 = vector.load %arg9[%c24_212, %c0_213] : memref<240x128xf32, #tpu.memory_space<vmem>>, vector<8x23xf32>
    tpu.vector_store %arg9[%c24_212, %c0_213], %176 {strides = array<i32>} : memref<240x128xf32, #tpu.memory_space<vmem>>, vector<8x23xf32>,
    %c0_214 = arith.constant 0 : index
    %c0_215 = arith.constant 0 : index
    %178 = vector.load %arg8[%c0_214, %c0_215] : memref<8x128xf32, #tpu.memory_space<vmem>>, vector<8x105xf32>
    %c24_216 = arith.constant 24 : index
    %c23_217 = arith.constant 23 : index
    %179 = vector.load %arg9[%c24_216, %c23_217] : memref<240x128xf32, #tpu.memory_space<vmem>>, vector<8x105xf32>
    tpu.vector_store %arg9[%c24_216, %c23_217], %178 {strides = array<i32>} : memref<240x128xf32, #tpu.memory_space<vmem>>, vector<8x105xf32>,
    %cst_218 = arith.constant 0.000000e+00 : f32
    %180 = vector.broadcast %cst_218 : f32 to vector<8x21xf32>
    %c32_219 = arith.constant 32 : index
    %c0_220 = arith.constant 0 : index
    %181 = vector.load %arg9[%c32_219, %c0_220] : memref<240x128xf32, #tpu.memory_space<vmem>>, vector<8x21xf32>
    tpu.vector_store %arg9[%c32_219, %c0_220], %180 {strides = array<i32>} : memref<240x128xf32, #tpu.memory_space<vmem>>, vector<8x21xf32>,
    %c0_221 = arith.constant 0 : index
    %c0_222 = arith.constant 0 : index
    %182 = vector.load %arg8[%c0_221, %c0_222] : memref<8x128xf32, #tpu.memory_space<vmem>>, vector<8x107xf32>
    %c32_223 = arith.constant 32 : index
    %c21_224 = arith.constant 21 : index
    %183 = vector.load %arg9[%c32_223, %c21_224] : memref<240x128xf32, #tpu.memory_space<vmem>>, vector<8x107xf32>
    tpu.vector_store %arg9[%c32_223, %c21_224], %182 {strides = array<i32>} : memref<240x128xf32, #tpu.memory_space<vmem>>, vector<8x107xf32>,
    %cst_225 = arith.constant 0.000000e+00 : f32
    %184 = vector.broadcast %cst_225 : f32 to vector<8x19xf32>
    %c40_226 = arith.constant 40 : index
    %c0_227 = arith.constant 0 : index
    %185 = vector.load %arg9[%c40_226, %c0_227] : memref<240x128xf32, #tpu.memory_space<vmem>>, vector<8x19xf32>
    tpu.vector_store %arg9[%c40_226, %c0_227], %184 {strides = array<i32>} : memref<240x128xf32, #tpu.memory_space<vmem>>, vector<8x19xf32>,
    %c0_228 = arith.constant 0 : index
    %c0_229 = arith.constant 0 : index
    %186 = vector.load %arg8[%c0_228, %c0_229] : memref<8x128xf32, #tpu.memory_space<vmem>>, vector<8x109xf32>
    %c40_230 = arith.constant 40 : index
    %c19_231 = arith.constant 19 : index
    %187 = vector.load %arg9[%c40_230, %c19_231] : memref<240x128xf32, #tpu.memory_space<vmem>>, vector<8x109xf32>
    tpu.vector_store %arg9[%c40_230, %c19_231], %186 {strides = array<i32>} : memref<240x128xf32, #tpu.memory_space<vmem>>, vector<8x109xf32>,
    %cst_232 = arith.constant 0.000000e+00 : f32
    %188 = vector.broadcast %cst_232 : f32 to vector<8x17xf32>
    %c48_233 = arith.constant 48 : index
    %c0_234 = arith.constant 0 : index
    %189 = vector.load %arg9[%c48_233, %c0_234] : memref<240x128xf32, #tpu.memory_space<vmem>>, vector<8x17xf32>
    tpu.vector_store %arg9[%c48_233, %c0_234], %188 {strides = array<i32>} : memref<240x128xf32, #tpu.memory_space<vmem>>, vector<8x17xf32>,
    %c0_235 = arith.constant 0 : index
    %c0_236 = arith.constant 0 : index
    %190 = vector.load %arg8[%c0_235, %c0_236] : memref<8x128xf32, #tpu.memory_space<vmem>>, vector<8x111xf32>
    %c48_237 = arith.constant 48 : index
    %c17_238 = arith.constant 17 : index
    %191 = vector.load %arg9[%c48_237, %c17_238] : memref<240x128xf32, #tpu.memory_space<vmem>>, vector<8x111xf32>
    tpu.vector_store %arg9[%c48_237, %c17_238], %190 {strides = array<i32>} : memref<240x128xf32, #tpu.memory_space<vmem>>, vector<8x111xf32>,
    %cst_239 = arith.constant 0.000000e+00 : f32
    %192 = vector.broadcast %cst_239 : f32 to vector<8x15xf32>
    %c56_240 = arith.constant 56 : index
    %c0_241 = arith.constant 0 : index
    %193 = vector.load %arg9[%c56_240, %c0_241] : memref<240x128xf32, #tpu.memory_space<vmem>>, vector<8x15xf32>
    tpu.vector_store %arg9[%c56_240, %c0_241], %192 {strides = array<i32>} : memref<240x128xf32, #tpu.memory_space<vmem>>, vector<8x15xf32>,
    %c0_242 = arith.constant 0 : index
    %c0_243 = arith.constant 0 : index
    %194 = vector.load %arg8[%c0_242, %c0_243] : memref<8x128xf32, #tpu.memory_space<vmem>>, vector<8x113xf32>
    %c56_244 = arith.constant 56 : index
    %c15_245 = arith.constant 15 : index
    %195 = vector.load %arg9[%c56_244, %c15_245] : memref<240x128xf32, #tpu.memory_space<vmem>>, vector<8x113xf32>
    tpu.vector_store %arg9[%c56_244, %c15_245], %194 {strides = array<i32>} : memref<240x128xf32, #tpu.memory_space<vmem>>, vector<8x113xf32>,
    %cst_246 = arith.constant 0.000000e+00 : f32
    %196 = vector.broadcast %cst_246 : f32 to vector<8x13xf32>
    %c64_247 = arith.constant 64 : index
    %c0_248 = arith.constant 0 : index
    %197 = vector.load %arg9[%c64_247, %c0_248] : memref<240x128xf32, #tpu.memory_space<vmem>>, vector<8x13xf32>
    tpu.vector_store %arg9[%c64_247, %c0_248], %196 {strides = array<i32>} : memref<240x128xf32, #tpu.memory_space<vmem>>, vector<8x13xf32>,
    %c0_249 = arith.constant 0 : index
    %c0_250 = arith.constant 0 : index
    %198 = vector.load %arg8[%c0_249, %c0_250] : memref<8x128xf32, #tpu.memory_space<vmem>>, vector<8x115xf32>
    %c64_251 = arith.constant 64 : index
    %c13_252 = arith.constant 13 : index
    %199 = vector.load %arg9[%c64_251, %c13_252] : memref<240x128xf32, #tpu.memory_space<vmem>>, vector<8x115xf32>
    tpu.vector_store %arg9[%c64_251, %c13_252], %198 {strides = array<i32>} : memref<240x128xf32, #tpu.memory_space<vmem>>, vector<8x115xf32>,
    %cst_253 = arith.constant 0.000000e+00 : f32
    %200 = vector.broadcast %cst_253 : f32 to vector<8x11xf32>
    %c72_254 = arith.constant 72 : index
    %c0_255 = arith.constant 0 : index
    %201 = vector.load %arg9[%c72_254, %c0_255] : memref<240x128xf32, #tpu.memory_space<vmem>>, vector<8x11xf32>
    tpu.vector_store %arg9[%c72_254, %c0_255], %200 {strides = array<i32>} : memref<240x128xf32, #tpu.memory_space<vmem>>, vector<8x11xf32>,
    %c0_256 = arith.constant 0 : index
    %c0_257 = arith.constant 0 : index
    %202 = vector.load %arg8[%c0_256, %c0_257] : memref<8x128xf32, #tpu.memory_space<vmem>>, vector<8x117xf32>
    %c72_258 = arith.constant 72 : index
    %c11_259 = arith.constant 11 : index
    %203 = vector.load %arg9[%c72_258, %c11_259] : memref<240x128xf32, #tpu.memory_space<vmem>>, vector<8x117xf32>
    tpu.vector_store %arg9[%c72_258, %c11_259], %202 {strides = array<i32>} : memref<240x128xf32, #tpu.memory_space<vmem>>, vector<8x117xf32>,
    %cst_260 = arith.constant 0.000000e+00 : f32
    %204 = vector.broadcast %cst_260 : f32 to vector<8x9xf32>
    %c80_261 = arith.constant 80 : index
    %c0_262 = arith.constant 0 : index
    %205 = vector.load %arg9[%c80_261, %c0_262] : memref<240x128xf32, #tpu.memory_space<vmem>>, vector<8x9xf32>
    tpu.vector_store %arg9[%c80_261, %c0_262], %204 {strides = array<i32>} : memref<240x128xf32, #tpu.memory_space<vmem>>, vector<8x9xf32>,
    %c0_263 = arith.constant 0 : index
    %c0_264 = arith.constant 0 : index
    %206 = vector.load %arg8[%c0_263, %c0_264] : memref<8x128xf32, #tpu.memory_space<vmem>>, vector<8x119xf32>
    %c80_265 = arith.constant 80 : index
    %c9_266 = arith.constant 9 : index
    %207 = vector.load %arg9[%c80_265, %c9_266] : memref<240x128xf32, #tpu.memory_space<vmem>>, vector<8x119xf32>
    tpu.vector_store %arg9[%c80_265, %c9_266], %206 {strides = array<i32>} : memref<240x128xf32, #tpu.memory_space<vmem>>, vector<8x119xf32>,
    %cst_267 = arith.constant 0.000000e+00 : f32
    %208 = vector.broadcast %cst_267 : f32 to vector<8x7xf32>
    %c88_268 = arith.constant 88 : index
    %c0_269 = arith.constant 0 : index
    %209 = vector.load %arg9[%c88_268, %c0_269] : memref<240x128xf32, #tpu.memory_space<vmem>>, vector<8x7xf32>
    tpu.vector_store %arg9[%c88_268, %c0_269], %208 {strides = array<i32>} : memref<240x128xf32, #tpu.memory_space<vmem>>, vector<8x7xf32>,
    %c0_270 = arith.constant 0 : index
    %c0_271 = arith.constant 0 : index
    %210 = vector.load %arg8[%c0_270, %c0_271] : memref<8x128xf32, #tpu.memory_space<vmem>>, vector<8x121xf32>
    %c88_272 = arith.constant 88 : index
    %c7_273 = arith.constant 7 : index
    %211 = vector.load %arg9[%c88_272, %c7_273] : memref<240x128xf32, #tpu.memory_space<vmem>>, vector<8x121xf32>
    tpu.vector_store %arg9[%c88_272, %c7_273], %210 {strides = array<i32>} : memref<240x128xf32, #tpu.memory_space<vmem>>, vector<8x121xf32>,
    %cst_274 = arith.constant 0.000000e+00 : f32
    %212 = vector.broadcast %cst_274 : f32 to vector<8x5xf32>
    %c96_275 = arith.constant 96 : index
    %c0_276 = arith.constant 0 : index
    %213 = vector.load %arg9[%c96_275, %c0_276] : memref<240x128xf32, #tpu.memory_space<vmem>>, vector<8x5xf32>
    tpu.vector_store %arg9[%c96_275, %c0_276], %212 {strides = array<i32>} : memref<240x128xf32, #tpu.memory_space<vmem>>, vector<8x5xf32>,
    %c0_277 = arith.constant 0 : index
    %c0_278 = arith.constant 0 : index
    %214 = vector.load %arg8[%c0_277, %c0_278] : memref<8x128xf32, #tpu.memory_space<vmem>>, vector<8x123xf32>
    %c96_279 = arith.constant 96 : index
    %c5_280 = arith.constant 5 : index
    %215 = vector.load %arg9[%c96_279, %c5_280] : memref<240x128xf32, #tpu.memory_space<vmem>>, vector<8x123xf32>
    tpu.vector_store %arg9[%c96_279, %c5_280], %214 {strides = array<i32>} : memref<240x128xf32, #tpu.memory_space<vmem>>, vector<8x123xf32>,
    %cst_281 = arith.constant 0.000000e+00 : f32
    %216 = vector.broadcast %cst_281 : f32 to vector<8x3xf32>
    %c104_282 = arith.constant 104 : index
    %c0_283 = arith.constant 0 : index
    %217 = vector.load %arg9[%c104_282, %c0_283] : memref<240x128xf32, #tpu.memory_space<vmem>>, vector<8x3xf32>
    tpu.vector_store %arg9[%c104_282, %c0_283], %216 {strides = array<i32>} : memref<240x128xf32, #tpu.memory_space<vmem>>, vector<8x3xf32>,
    %c0_284 = arith.constant 0 : index
    %c0_285 = arith.constant 0 : index
    %218 = vector.load %arg8[%c0_284, %c0_285] : memref<8x128xf32, #tpu.memory_space<vmem>>, vector<8x125xf32>
    %c104_286 = arith.constant 104 : index
    %c3_287 = arith.constant 3 : index
    %219 = vector.load %arg9[%c104_286, %c3_287] : memref<240x128xf32, #tpu.memory_space<vmem>>, vector<8x125xf32>
    tpu.vector_store %arg9[%c104_286, %c3_287], %218 {strides = array<i32>} : memref<240x128xf32, #tpu.memory_space<vmem>>, vector<8x125xf32>,
    %cst_288 = arith.constant 0.000000e+00 : f32
    %220 = vector.broadcast %cst_288 : f32 to vector<8x1xf32>
    %c112_289 = arith.constant 112 : index
    %c0_290 = arith.constant 0 : index
    %221 = vector.load %arg9[%c112_289, %c0_290] : memref<240x128xf32, #tpu.memory_space<vmem>>, vector<8x1xf32>
    tpu.vector_store %arg9[%c112_289, %c0_290], %220 {strides = array<i32>} : memref<240x128xf32, #tpu.memory_space<vmem>>, vector<8x1xf32>,
    %c0_291 = arith.constant 0 : index
    %c0_292 = arith.constant 0 : index
    %222 = vector.load %arg8[%c0_291, %c0_292] : memref<8x128xf32, #tpu.memory_space<vmem>>, vector<8x127xf32>
    %c112_293 = arith.constant 112 : index
    %c1_294 = arith.constant 1 : index
    %223 = vector.load %arg9[%c112_293, %c1_294] : memref<240x128xf32, #tpu.memory_space<vmem>>, vector<8x127xf32>
    tpu.vector_store %arg9[%c112_293, %c1_294], %222 {strides = array<i32>} : memref<240x128xf32, #tpu.memory_space<vmem>>, vector<8x127xf32>,
    %cst_295 = arith.constant 0.000000e+00 : f32
    %224 = vector.broadcast %cst_295 : f32 to vector<8x1xf32>
    %c120_296 = arith.constant 120 : index
    %c127_297 = arith.constant 127 : index
    %225 = vector.load %arg9[%c120_296, %c127_297] : memref<240x128xf32, #tpu.memory_space<vmem>>, vector<8x1xf32>
    tpu.vector_store %arg9[%c120_296, %c127_297], %224 {strides = array<i32>} : memref<240x128xf32, #tpu.memory_space<vmem>>, vector<8x1xf32>,
    %c0_298 = arith.constant 0 : index
    %c1_299 = arith.constant 1 : index
    %226 = vector.load %arg8[%c0_298, %c1_299] : memref<8x128xf32, #tpu.memory_space<vmem>>, vector<8x127xf32>
    %c120_300 = arith.constant 120 : index
    %c0_301 = arith.constant 0 : index
    %227 = vector.load %arg9[%c120_300, %c0_301] : memref<240x128xf32, #tpu.memory_space<vmem>>, vector<8x127xf32>
    tpu.vector_store %arg9[%c120_300, %c0_301], %226 {strides = array<i32>} : memref<240x128xf32, #tpu.memory_space<vmem>>, vector<8x127xf32>,
    %cst_302 = arith.constant 0.000000e+00 : f32
    %228 = vector.broadcast %cst_302 : f32 to vector<8x3xf32>
    %c128_303 = arith.constant 128 : index
    %c125_304 = arith.constant 125 : index
    %229 = vector.load %arg9[%c128_303, %c125_304] : memref<240x128xf32, #tpu.memory_space<vmem>>, vector<8x3xf32>
    tpu.vector_store %arg9[%c128_303, %c125_304], %228 {strides = array<i32>} : memref<240x128xf32, #tpu.memory_space<vmem>>, vector<8x3xf32>,
    %c0_305 = arith.constant 0 : index
    %c3_306 = arith.constant 3 : index
    %230 = vector.load %arg8[%c0_305, %c3_306] : memref<8x128xf32, #tpu.memory_space<vmem>>, vector<8x125xf32>
    %c128_307 = arith.constant 128 : index
    %c0_308 = arith.constant 0 : index
    %231 = vector.load %arg9[%c128_307, %c0_308] : memref<240x128xf32, #tpu.memory_space<vmem>>, vector<8x125xf32>
    tpu.vector_store %arg9[%c128_307, %c0_308], %230 {strides = array<i32>} : memref<240x128xf32, #tpu.memory_space<vmem>>, vector<8x125xf32>,
    %cst_309 = arith.constant 0.000000e+00 : f32
    %232 = vector.broadcast %cst_309 : f32 to vector<8x5xf32>
    %c136_310 = arith.constant 136 : index
    %c123_311 = arith.constant 123 : index
    %233 = vector.load %arg9[%c136_310, %c123_311] : memref<240x128xf32, #tpu.memory_space<vmem>>, vector<8x5xf32>
    tpu.vector_store %arg9[%c136_310, %c123_311], %232 {strides = array<i32>} : memref<240x128xf32, #tpu.memory_space<vmem>>, vector<8x5xf32>,
    %c0_312 = arith.constant 0 : index
    %c5_313 = arith.constant 5 : index
    %234 = vector.load %arg8[%c0_312, %c5_313] : memref<8x128xf32, #tpu.memory_space<vmem>>, vector<8x123xf32>
    %c136_314 = arith.constant 136 : index
    %c0_315 = arith.constant 0 : index
    %235 = vector.load %arg9[%c136_314, %c0_315] : memref<240x128xf32, #tpu.memory_space<vmem>>, vector<8x123xf32>
    tpu.vector_store %arg9[%c136_314, %c0_315], %234 {strides = array<i32>} : memref<240x128xf32, #tpu.memory_space<vmem>>, vector<8x123xf32>,
    %cst_316 = arith.constant 0.000000e+00 : f32
    %236 = vector.broadcast %cst_316 : f32 to vector<8x7xf32>
    %c144_317 = arith.constant 144 : index
    %c121_318 = arith.constant 121 : index
    %237 = vector.load %arg9[%c144_317, %c121_318] : memref<240x128xf32, #tpu.memory_space<vmem>>, vector<8x7xf32>
    tpu.vector_store %arg9[%c144_317, %c121_318], %236 {strides = array<i32>} : memref<240x128xf32, #tpu.memory_space<vmem>>, vector<8x7xf32>,
    %c0_319 = arith.constant 0 : index
    %c7_320 = arith.constant 7 : index
    %238 = vector.load %arg8[%c0_319, %c7_320] : memref<8x128xf32, #tpu.memory_space<vmem>>, vector<8x121xf32>
    %c144_321 = arith.constant 144 : index
    %c0_322 = arith.constant 0 : index
    %239 = vector.load %arg9[%c144_321, %c0_322] : memref<240x128xf32, #tpu.memory_space<vmem>>, vector<8x121xf32>
    tpu.vector_store %arg9[%c144_321, %c0_322], %238 {strides = array<i32>} : memref<240x128xf32, #tpu.memory_space<vmem>>, vector<8x121xf32>,
    %cst_323 = arith.constant 0.000000e+00 : f32
    %240 = vector.broadcast %cst_323 : f32 to vector<8x9xf32>
    %c152_324 = arith.constant 152 : index
    %c119_325 = arith.constant 119 : index
    %241 = vector.load %arg9[%c152_324, %c119_325] : memref<240x128xf32, #tpu.memory_space<vmem>>, vector<8x9xf32>
    tpu.vector_store %arg9[%c152_324, %c119_325], %240 {strides = array<i32>} : memref<240x128xf32, #tpu.memory_space<vmem>>, vector<8x9xf32>,
    %c0_326 = arith.constant 0 : index
    %c9_327 = arith.constant 9 : index
    %242 = vector.load %arg8[%c0_326, %c9_327] : memref<8x128xf32, #tpu.memory_space<vmem>>, vector<8x119xf32>
    %c152_328 = arith.constant 152 : index
    %c0_329 = arith.constant 0 : index
    %243 = vector.load %arg9[%c152_328, %c0_329] : memref<240x128xf32, #tpu.memory_space<vmem>>, vector<8x119xf32>
    tpu.vector_store %arg9[%c152_328, %c0_329], %242 {strides = array<i32>} : memref<240x128xf32, #tpu.memory_space<vmem>>, vector<8x119xf32>,
    %cst_330 = arith.constant 0.000000e+00 : f32
    %244 = vector.broadcast %cst_330 : f32 to vector<8x11xf32>
    %c160_331 = arith.constant 160 : index
    %c117_332 = arith.constant 117 : index
    %245 = vector.load %arg9[%c160_331, %c117_332] : memref<240x128xf32, #tpu.memory_space<vmem>>, vector<8x11xf32>
    tpu.vector_store %arg9[%c160_331, %c117_332], %244 {strides = array<i32>} : memref<240x128xf32, #tpu.memory_space<vmem>>, vector<8x11xf32>,
    %c0_333 = arith.constant 0 : index
    %c11_334 = arith.constant 11 : index
    %246 = vector.load %arg8[%c0_333, %c11_334] : memref<8x128xf32, #tpu.memory_space<vmem>>, vector<8x117xf32>
    %c160_335 = arith.constant 160 : index
    %c0_336 = arith.constant 0 : index
    %247 = vector.load %arg9[%c160_335, %c0_336] : memref<240x128xf32, #tpu.memory_space<vmem>>, vector<8x117xf32>
    tpu.vector_store %arg9[%c160_335, %c0_336], %246 {strides = array<i32>} : memref<240x128xf32, #tpu.memory_space<vmem>>, vector<8x117xf32>,
    %cst_337 = arith.constant 0.000000e+00 : f32
    %248 = vector.broadcast %cst_337 : f32 to vector<8x13xf32>
    %c168_338 = arith.constant 168 : index
    %c115_339 = arith.constant 115 : index
    %249 = vector.load %arg9[%c168_338, %c115_339] : memref<240x128xf32, #tpu.memory_space<vmem>>, vector<8x13xf32>
    tpu.vector_store %arg9[%c168_338, %c115_339], %248 {strides = array<i32>} : memref<240x128xf32, #tpu.memory_space<vmem>>, vector<8x13xf32>,
    %c0_340 = arith.constant 0 : index
    %c13_341 = arith.constant 13 : index
    %250 = vector.load %arg8[%c0_340, %c13_341] : memref<8x128xf32, #tpu.memory_space<vmem>>, vector<8x115xf32>
    %c168_342 = arith.constant 168 : index
    %c0_343 = arith.constant 0 : index
    %251 = vector.load %arg9[%c168_342, %c0_343] : memref<240x128xf32, #tpu.memory_space<vmem>>, vector<8x115xf32>
    tpu.vector_store %arg9[%c168_342, %c0_343], %250 {strides = array<i32>} : memref<240x128xf32, #tpu.memory_space<vmem>>, vector<8x115xf32>,
    %cst_344 = arith.constant 0.000000e+00 : f32
    %252 = vector.broadcast %cst_344 : f32 to vector<8x15xf32>
    %c176_345 = arith.constant 176 : index
    %c113_346 = arith.constant 113 : index
    %253 = vector.load %arg9[%c176_345, %c113_346] : memref<240x128xf32, #tpu.memory_space<vmem>>, vector<8x15xf32>
    tpu.vector_store %arg9[%c176_345, %c113_346], %252 {strides = array<i32>} : memref<240x128xf32, #tpu.memory_space<vmem>>, vector<8x15xf32>,
    %c0_347 = arith.constant 0 : index
    %c15_348 = arith.constant 15 : index
    %254 = vector.load %arg8[%c0_347, %c15_348] : memref<8x128xf32, #tpu.memory_space<vmem>>, vector<8x113xf32>
    %c176_349 = arith.constant 176 : index
    %c0_350 = arith.constant 0 : index
    %255 = vector.load %arg9[%c176_349, %c0_350] : memref<240x128xf32, #tpu.memory_space<vmem>>, vector<8x113xf32>
    tpu.vector_store %arg9[%c176_349, %c0_350], %254 {strides = array<i32>} : memref<240x128xf32, #tpu.memory_space<vmem>>, vector<8x113xf32>,
    %cst_351 = arith.constant 0.000000e+00 : f32
    %256 = vector.broadcast %cst_351 : f32 to vector<8x17xf32>
    %c184_352 = arith.constant 184 : index
    %c111_353 = arith.constant 111 : index
    %257 = vector.load %arg9[%c184_352, %c111_353] : memref<240x128xf32, #tpu.memory_space<vmem>>, vector<8x17xf32>
    tpu.vector_store %arg9[%c184_352, %c111_353], %256 {strides = array<i32>} : memref<240x128xf32, #tpu.memory_space<vmem>>, vector<8x17xf32>,
    %c0_354 = arith.constant 0 : index
    %c17_355 = arith.constant 17 : index
    %258 = vector.load %arg8[%c0_354, %c17_355] : memref<8x128xf32, #tpu.memory_space<vmem>>, vector<8x111xf32>
    %c184_356 = arith.constant 184 : index
    %c0_357 = arith.constant 0 : index
    %259 = vector.load %arg9[%c184_356, %c0_357] : memref<240x128xf32, #tpu.memory_space<vmem>>, vector<8x111xf32>
    tpu.vector_store %arg9[%c184_356, %c0_357], %258 {strides = array<i32>} : memref<240x128xf32, #tpu.memory_space<vmem>>, vector<8x111xf32>,
    %cst_358 = arith.constant 0.000000e+00 : f32
    %260 = vector.broadcast %cst_358 : f32 to vector<8x19xf32>
    %c192_359 = arith.constant 192 : index
    %c109_360 = arith.constant 109 : index
    %261 = vector.load %arg9[%c192_359, %c109_360] : memref<240x128xf32, #tpu.memory_space<vmem>>, vector<8x19xf32>
    tpu.vector_store %arg9[%c192_359, %c109_360], %260 {strides = array<i32>} : memref<240x128xf32, #tpu.memory_space<vmem>>, vector<8x19xf32>,
    %c0_361 = arith.constant 0 : index
    %c19_362 = arith.constant 19 : index
    %262 = vector.load %arg8[%c0_361, %c19_362] : memref<8x128xf32, #tpu.memory_space<vmem>>, vector<8x109xf32>
    %c192_363 = arith.constant 192 : index
    %c0_364 = arith.constant 0 : index
    %263 = vector.load %arg9[%c192_363, %c0_364] : memref<240x128xf32, #tpu.memory_space<vmem>>, vector<8x109xf32>
    tpu.vector_store %arg9[%c192_363, %c0_364], %262 {strides = array<i32>} : memref<240x128xf32, #tpu.memory_space<vmem>>, vector<8x109xf32>,
    %cst_365 = arith.constant 0.000000e+00 : f32
    %264 = vector.broadcast %cst_365 : f32 to vector<8x21xf32>
    %c200_366 = arith.constant 200 : index
    %c107_367 = arith.constant 107 : index
    %265 = vector.load %arg9[%c200_366, %c107_367] : memref<240x128xf32, #tpu.memory_space<vmem>>, vector<8x21xf32>
    tpu.vector_store %arg9[%c200_366, %c107_367], %264 {strides = array<i32>} : memref<240x128xf32, #tpu.memory_space<vmem>>, vector<8x21xf32>,
    %c0_368 = arith.constant 0 : index
    %c21_369 = arith.constant 21 : index
    %266 = vector.load %arg8[%c0_368, %c21_369] : memref<8x128xf32, #tpu.memory_space<vmem>>, vector<8x107xf32>
    %c200_370 = arith.constant 200 : index
    %c0_371 = arith.constant 0 : index
    %267 = vector.load %arg9[%c200_370, %c0_371] : memref<240x128xf32, #tpu.memory_space<vmem>>, vector<8x107xf32>
    tpu.vector_store %arg9[%c200_370, %c0_371], %266 {strides = array<i32>} : memref<240x128xf32, #tpu.memory_space<vmem>>, vector<8x107xf32>,
    %cst_372 = arith.constant 0.000000e+00 : f32
    %268 = vector.broadcast %cst_372 : f32 to vector<8x23xf32>
    %c208_373 = arith.constant 208 : index
    %c105_374 = arith.constant 105 : index
    %269 = vector.load %arg9[%c208_373, %c105_374] : memref<240x128xf32, #tpu.memory_space<vmem>>, vector<8x23xf32>
    tpu.vector_store %arg9[%c208_373, %c105_374], %268 {strides = array<i32>} : memref<240x128xf32, #tpu.memory_space<vmem>>, vector<8x23xf32>,
    %c0_375 = arith.constant 0 : index
    %c23_376 = arith.constant 23 : index
    %270 = vector.load %arg8[%c0_375, %c23_376] : memref<8x128xf32, #tpu.memory_space<vmem>>, vector<8x105xf32>
    %c208_377 = arith.constant 208 : index
    %c0_378 = arith.constant 0 : index
    %271 = vector.load %arg9[%c208_377, %c0_378] : memref<240x128xf32, #tpu.memory_space<vmem>>, vector<8x105xf32>
    tpu.vector_store %arg9[%c208_377, %c0_378], %270 {strides = array<i32>} : memref<240x128xf32, #tpu.memory_space<vmem>>, vector<8x105xf32>,
    %cst_379 = arith.constant 0.000000e+00 : f32
    %272 = vector.broadcast %cst_379 : f32 to vector<8x25xf32>
    %c216_380 = arith.constant 216 : index
    %c103_381 = arith.constant 103 : index
    %273 = vector.load %arg9[%c216_380, %c103_381] : memref<240x128xf32, #tpu.memory_space<vmem>>, vector<8x25xf32>
    tpu.vector_store %arg9[%c216_380, %c103_381], %272 {strides = array<i32>} : memref<240x128xf32, #tpu.memory_space<vmem>>, vector<8x25xf32>,
    %c0_382 = arith.constant 0 : index
    %c25_383 = arith.constant 25 : index
    %274 = vector.load %arg8[%c0_382, %c25_383] : memref<8x128xf32, #tpu.memory_space<vmem>>, vector<8x103xf32>
    %c216_384 = arith.constant 216 : index
    %c0_385 = arith.constant 0 : index
    %275 = vector.load %arg9[%c216_384, %c0_385] : memref<240x128xf32, #tpu.memory_space<vmem>>, vector<8x103xf32>
    tpu.vector_store %arg9[%c216_384, %c0_385], %274 {strides = array<i32>} : memref<240x128xf32, #tpu.memory_space<vmem>>, vector<8x103xf32>,
    %cst_386 = arith.constant 0.000000e+00 : f32
    %276 = vector.broadcast %cst_386 : f32 to vector<8x27xf32>
    %c224_387 = arith.constant 224 : index
    %c101_388 = arith.constant 101 : index
    %277 = vector.load %arg9[%c224_387, %c101_388] : memref<240x128xf32, #tpu.memory_space<vmem>>, vector<8x27xf32>
    tpu.vector_store %arg9[%c224_387, %c101_388], %276 {strides = array<i32>} : memref<240x128xf32, #tpu.memory_space<vmem>>, vector<8x27xf32>,
    %c0_389 = arith.constant 0 : index
    %c27_390 = arith.constant 27 : index
    %278 = vector.load %arg8[%c0_389, %c27_390] : memref<8x128xf32, #tpu.memory_space<vmem>>, vector<8x101xf32>
    %c224_391 = arith.constant 224 : index
    %c0_392 = arith.constant 0 : index
    %279 = vector.load %arg9[%c224_391, %c0_392] : memref<240x128xf32, #tpu.memory_space<vmem>>, vector<8x101xf32>
    tpu.vector_store %arg9[%c224_391, %c0_392], %278 {strides = array<i32>} : memref<240x128xf32, #tpu.memory_space<vmem>>, vector<8x101xf32>,
    %cst_393 = arith.constant 0.000000e+00 : f32
    %280 = vector.broadcast %cst_393 : f32 to vector<8x29xf32>
    %c232_394 = arith.constant 232 : index
    %c99_395 = arith.constant 99 : index
    %281 = vector.load %arg9[%c232_394, %c99_395] : memref<240x128xf32, #tpu.memory_space<vmem>>, vector<8x29xf32>
    tpu.vector_store %arg9[%c232_394, %c99_395], %280 {strides = array<i32>} : memref<240x128xf32, #tpu.memory_space<vmem>>, vector<8x29xf32>,
    %c0_396 = arith.constant 0 : index
    %c29_397 = arith.constant 29 : index
    %282 = vector.load %arg8[%c0_396, %c29_397] : memref<8x128xf32, #tpu.memory_space<vmem>>, vector<8x99xf32>
    %c232_398 = arith.constant 232 : index
    %c0_399 = arith.constant 0 : index
    %283 = vector.load %arg9[%c232_398, %c0_399] : memref<240x128xf32, #tpu.memory_space<vmem>>, vector<8x99xf32>
    tpu.vector_store %arg9[%c232_398, %c0_399], %282 {strides = array<i32>} : memref<240x128xf32, #tpu.memory_space<vmem>>, vector<8x99xf32>,
    %c0_400 = arith.constant 0 : index
    %c0_401 = arith.constant 0 : index
    %284 = vector.load %arg4[%c0_400, %c0_401] : memref<8x240xf32, #tpu.memory_space<vmem>>, vector<8x240xf32>
    %c0_402 = arith.constant 0 : index
    %c0_403 = arith.constant 0 : index
    %285 = vector.load %arg9[%c0_402, %c0_403] : memref<240x128xf32, #tpu.memory_space<vmem>>, vector<240x128xf32>
    %cst_404 = arith.constant dense<0.000000e+00> : vector<8x128xf32>
    %286 = tpu.matmul %284, %285, %cst_404 {dimension_numbers = #tpu.dot_dimension_numbers<[1], [0], [0], [1], [0, 0, 1, 1], [], []>} : vector<8x240xf32>, vector<240x128xf32>, vector<8x128xf32> -> vector<8x128xf32>
    %c0_405 = arith.constant 0 : index
    %c0_406 = arith.constant 0 : index
    %287 = vector.load %arg5[%c0_405, %c0_406] : memref<8x1xf32, #tpu.memory_space<vmem>>, vector<8x1xf32>
    %288 = vector.broadcast %287 : vector<8x1xf32> to vector<8x128xf32>
    %289 = arith.addf %286, %288 : vector<8x128xf32>
    %cst_407 = arith.constant 0.000000e+00 : f32
    %290 = vector.broadcast %cst_407 : f32 to vector<8x128xf32>
    %291 = arith.subf %290, %289 : vector<8x128xf32>
    %292 = math.exp %291 : vector<8x128xf32>
    %cst_408 = arith.constant 1.000000e+00 : f32
    %293 = vector.broadcast %cst_408 : f32 to vector<8x128xf32>
    %294 = arith.addf %293, %292 : vector<8x128xf32>
    %295 = tpu.reciprocal %294 {approx = true} : vector<8x128xf32> -> vector<8x128xf32>
    %296 = arith.mulf %289, %295 : vector<8x128xf32>
    %c0_409 = arith.constant 0 : index
    %c0_410 = arith.constant 0 : index
    %297 = vector.load %arg8[%c0_409, %c0_410] : memref<8x128xf32, #tpu.memory_space<vmem>>, vector<8x128xf32>
    %298 = arith.addf %297, %296 : vector<8x128xf32>
    %c0_411 = arith.constant 0 : index
    %c0_412 = arith.constant 0 : index
    %c0_413 = arith.constant 0 : index
    %299 = vector.load %arg6[%c0_411, %c0_412, %c0_413] : memref<1x8x128xf32, #tpu.memory_space<vmem>>, vector<1x8x128xf32>
    %300 = vector.shape_cast %299 : vector<1x8x128xf32> to vector<8x128xf32>
    %301 = vector.shape_cast %298 : vector<8x128xf32> to vector<1x8x128xf32>
    tpu.vector_store %arg6[%c0_411, %c0_412, %c0_413], %301 {strides = array<i32>} : memref<1x8x128xf32, #tpu.memory_space<vmem>>, vector<1x8x128xf32>,
    return
  }
  func.func @transform_0(%arg0: i32) -> (i32, i32, i32) {
    %c6_i32 = arith.constant 6 : i32
    %c0_i32 = arith.constant 0 : i32
    %c0_i32_0 = arith.constant 0 : i32
    return %arg0, %c6_i32, %c0_i32 : i32, i32, i32
  }
  func.func @transform_1(%arg0: i32) -> (i32, i32) {
    %c0_i32 = arith.constant 0 : i32
    %c0_i32_0 = arith.constant 0 : i32
    %c0_i32_1 = arith.constant 0 : i32
    return %c0_i32, %c0_i32_0 : i32, i32
  }
  func.func @transform_2(%arg0: i32) -> (i32, i32) {
    %c0_i32 = arith.constant 0 : i32
    %c0_i32_0 = arith.constant 0 : i32
    %c0_i32_1 = arith.constant 0 : i32
    return %c0_i32, %c0_i32_0 : i32, i32
  }
  func.func @transform_3(%arg0: i32) -> (i32, i32) {
    %c0_i32 = arith.constant 0 : i32
    %c0_i32_0 = arith.constant 0 : i32
    %c0_i32_1 = arith.constant 0 : i32
    return %c0_i32, %c0_i32_0 : i32, i32
  }
  func.func @transform_4(%arg0: i32) -> (i32, i32) {
    %c0_i32 = arith.constant 0 : i32
    %c0_i32_0 = arith.constant 0 : i32
    %c0_i32_1 = arith.constant 0 : i32
    return %c0_i32, %c0_i32_0 : i32, i32
  }
  func.func @transform_5(%arg0: i32) -> (i32, i32, i32) {
    %c7_i32 = arith.constant 7 : i32
    %c0_i32 = arith.constant 0 : i32
    %c0_i32_0 = arith.constant 0 : i32
    return %arg0, %c7_i32, %c0_i32 : i32, i32, i32
  }
}

</mosaic_0001>

<llo_original>
// kernel: seq_encoder2_forward.4
$region0: #{seq_encoder2_forward.4}
  #allocation0 [shape = 'u32[]', space=smem, size = 0x4, offset = 0x4, fixed_abs, tag = 'smem constant byte address 0x4 - core index']
  #allocation1 [shape = 'u32[144,128]{1,0:T(1,128)}', space=vmem, size = 0x12000, scoped, tag = 'internal scratch']
  #allocation2 [shape = 'f32[24,128]{1,0:T(8,128)}', space=vmem, size = 0x3000, scoped, tag = 'scratch operand']
  #allocation3 [shape = 'f32[32,128]{1,0:T(8,128)}', space=vmem, size = 0x4000, scoped, tag = 'scratch operand']
  #allocation4 [shape = 'f32[96,128]{1,0:T(8,128)}', space=vmem, size = 0xc000, scoped, tag = 'scratch operand']
  %s0 = inlined_call_operand.vmem [shape: f32[2,8,128], index: 0, kind: input, shape index: {}]
  %s1 = inlined_call_operand.vmem [shape: f32[32,24], index: 1, kind: input, shape index: {}]
  %s2 = inlined_call_operand.vmem [shape: f32[32,1], index: 2, kind: input, shape index: {}]
  %s3 = inlined_call_operand.vmem [shape: f32[32,96], index: 3, kind: input, shape index: {}]
  %s4 = inlined_call_operand.vmem [shape: f32[32,1], index: 4, kind: input, shape index: {}]
  %s5 = inlined_call_operand.vmem [shape: f32[2,64,128], index: 5, kind: output, shape index: {}]
  %s6 = sld [smem:[#allocation0]]
  $region53: #{seq_encoder2_forward.4} parent=0
    _
  %s8 = ssub.s32 1, %s6
  %s9 = scalar_select 0, %s8, %s6
  loop: start=0, step=1, limit=4
  $region2: #{seq_encoder2_forward.4} parent=0 // loop_pre_header
    _
  $region3: #{seq_encoder2_forward.4} parent=0 // loop_header
    %s11 = sphi 0, %s15
    %p12 = scmp.ge.s32.totalorder %s11, 4
    %s21 = sphi 0, %s23
    %s24 = sphi 0, %s21
    %s25 = sphi 0, %s24
    %s41 = sphi 0, %s25
    %s45 = sphi 0, %s45
    %s47 = sphi 0, %s45
    %s48 = sphi 0, %s47
    %s62 = sphi 0, %s48
    %s66 = sphi 0, %s66
    %s68 = sphi 0, %s66
    %s69 = sphi 0, %s68
    %s83 = sphi 0, %s69
    %s87 = sphi 0, %s87
    %s89 = sphi 0, %s87
    %s90 = sphi 0, %s89
    %s104 = sphi 0, %s90
    %s108 = sphi 0, %s108
    %s110 = sphi 0, %s108
    %s111 = sphi 0, %s110
    %s125 = sphi 0, %s111
    %s131 = sphi 0, %s133
    %s134 = sphi 0, %s131
    %s135 = sphi 0, %s134
    %s151 = sphi 0, %s135
  $region4: #{seq_encoder2_forward.4} parent=0 // loop_header_branch
    %14 = sbr.rel (%p12) target = $region8
  $region5: #{seq_encoder2_forward.4} parent=0 // loop_body
    %s16 = ssub.s32 %s11, 1
    %s17 = ssub.s32 %s11, 2
    %s18 = sadd.s32 %s11, 1
    %s19 = ssub.s32 %s11, %s18
    %p20 = scmp.eq.s32.totalorder %s19, 0
    %s22 = sadd.s32 %s21, 1
    %s23 = scalar_select %p20, %s21, %s22
    %p26 = pneg %p20
    %p27 = scmp.eq.s32.totalorder %s11, 1
    %p28 = por %p26, %p27
    %p29 = scmp.ne.s32.totalorder %s21, %s24
    %p30 = scmp.eq.s32.totalorder %s11, 0
    %p31 = por %p29, %p30
    %p32 = scmp.ne.s32.totalorder %s21, %s24
    %p33 = scmp.eq.s32.totalorder %s16, 1
    %p34 = por %p32, %p33
    %p35 = scmp.ne.s32.totalorder %s24, %s25
    %p36 = scmp.eq.s32.totalorder %s16, 0
    %p37 = por %p35, %p36
    %p38 = scmp.ne.s32.totalorder %s24, %s25
    %p39 = scmp.eq.s32.totalorder %s17, 1
    %p40 = por %p38, %p39
    %p42 = scmp.ne.s32.totalorder %s25, %s41
    %p43 = scmp.eq.s32.totalorder %s17, 0
    %p44 = por %p42, %p43
    %s46 = sadd.s32 %s45, 1
    %p49 = scmp.eq.s32.totalorder %s11, 1
    %p50 = scmp.ne.s32.totalorder %s45, %s47
    %p51 = scmp.eq.s32.totalorder %s11, 0
    %p52 = por %p50, %p51
    %p53 = scmp.ne.s32.totalorder %s45, %s47
    %p54 = scmp.eq.s32.totalorder %s16, 1
    %p55 = por %p53, %p54
    %p56 = scmp.ne.s32.totalorder %s47, %s48
    %p57 = scmp.eq.s32.totalorder %s16, 0
    %p58 = por %p56, %p57
    %p59 = scmp.ne.s32.totalorder %s47, %s48
    %p60 = scmp.eq.s32.totalorder %s17, 1
    %p61 = por %p59, %p60
    %p63 = scmp.ne.s32.totalorder %s48, %s62
    %p64 = scmp.eq.s32.totalorder %s17, 0
    %p65 = por %p63, %p64
    %s67 = sadd.s32 %s66, 1
    %p70 = scmp.eq.s32.totalorder %s11, 1
    %p71 = scmp.ne.s32.totalorder %s66, %s68
    %p72 = scmp.eq.s32.totalorder %s11, 0
    %p73 = por %p71, %p72
    %p74 = scmp.ne.s32.totalorder %s66, %s68
    %p75 = scmp.eq.s32.totalorder %s16, 1
    %p76 = por %p74, %p75
    %p77 = scmp.ne.s32.totalorder %s68, %s69
    %p78 = scmp.eq.s32.totalorder %s16, 0
    %p79 = por %p77, %p78
    %p80 = scmp.ne.s32.totalorder %s68, %s69
    %p81 = scmp.eq.s32.totalorder %s17, 1
    %p82 = por %p80, %p81
    %p84 = scmp.ne.s32.totalorder %s69, %s83
    %p85 = scmp.eq.s32.totalorder %s17, 0
    %p86 = por %p84, %p85
    %s88 = sadd.s32 %s87, 1
    %p91 = scmp.eq.s32.totalorder %s11, 1
    %p92 = scmp.ne.s32.totalorder %s87, %s89
    %p93 = scmp.eq.s32.totalorder %s11, 0
    %p94 = por %p92, %p93
    %p95 = scmp.ne.s32.totalorder %s87, %s89
    %p96 = scmp.eq.s32.totalorder %s16, 1
    %p97 = por %p95, %p96
    %p98 = scmp.ne.s32.totalorder %s89, %s90
    %p99 = scmp.eq.s32.totalorder %s16, 0
    %p100 = por %p98, %p99
    %p101 = scmp.ne.s32.totalorder %s89, %s90
    %p102 = scmp.eq.s32.totalorder %s17, 1
    %p103 = por %p101, %p102
    %p105 = scmp.ne.s32.totalorder %s90, %s104
    %p106 = scmp.eq.s32.totalorder %s17, 0
    %p107 = por %p105, %p106
    %s109 = sadd.s32 %s108, 1
    %p112 = scmp.eq.s32.totalorder %s11, 1
    %p113 = scmp.ne.s32.totalorder %s108, %s110
    %p114 = scmp.eq.s32.totalorder %s11, 0
    %p115 = por %p113, %p114
    %p116 = scmp.ne.s32.totalorder %s108, %s110
    %p117 = scmp.eq.s32.totalorder %s16, 1
    %p118 = por %p116, %p117
    %p119 = scmp.ne.s32.totalorder %s110, %s111
    %p120 = scmp.eq.s32.totalorder %s16, 0
    %p121 = por %p119, %p120
    %p122 = scmp.ne.s32.totalorder %s110, %s111
    %p123 = scmp.eq.s32.totalorder %s17, 1
    %p124 = por %p122, %p123
    %p126 = scmp.ne.s32.totalorder %s111, %s125
    %p127 = scmp.eq.s32.totalorder %s17, 0
    %p128 = por %p126, %p127
    %s129 = ssub.s32 %s11, %s18
    %p130 = scmp.eq.s32.totalorder %s129, 0
    %s132 = sadd.s32 %s131, 1
    %s133 = scalar_select %p130, %s131, %s132
    %p136 = pneg %p130
    %p137 = scmp.eq.s32.totalorder %s11, 1
    %p138 = por %p136, %p137
    %p139 = scmp.ne.s32.totalorder %s131, %s134
    %p140 = scmp.eq.s32.totalorder %s11, 0
    %p141 = por %p139, %p140
    %p142 = scmp.ne.s32.totalorder %s131, %s134
    %p143 = scmp.eq.s32.totalorder %s16, 1
    %p144 = por %p142, %p143
    %p145 = scmp.ne.s32.totalorder %s134, %s135
    %p146 = scmp.eq.s32.totalorder %s16, 0
    %p147 = por %p145, %p146
    %p148 = scmp.ne.s32.totalorder %s134, %s135
    %p149 = scmp.eq.s32.totalorder %s17, 1
    %p150 = por %p148, %p149
    %p152 = scmp.ne.s32.totalorder %s135, %s151
    %p153 = scmp.eq.s32.totalorder %s17, 0
    %p154 = por %p152, %p153
    %p155 = scmp.le.s32.totalorder 1, %s11
    %p156 = scmp.lt.s32.totalorder %s11, 3
    %p157 = pnand %p155, %p156
    %p158 = pneg %p157
    // Predicated region
    $region9: #{seq_encoder2_forward.4} parent=5 // pred_check
      _
    $region10: #{seq_encoder2_forward.4} parent=5 // pred_check_branch
      %160 = sbr.rel (%p157) target = $region12
    $region11: #{seq_encoder2_forward.4} parent=5 // pred_region
      %s161 = ssub.s32 %s11, 1
      // Predicated region
      $region13: #{seq_encoder2_forward.4} parent=11 // pred_check
        %p162 = pneg %p58
      $region14: #{seq_encoder2_forward.4} parent=11 // pred_check_branch
        %164 = sbr.rel (%p162) target = $region16
      $region15: #{seq_encoder2_forward.4} parent=11 // pred_region
        _
      $region16: #{seq_encoder2_forward.4} parent=11 // pred_fallthru
        _
      // Predicated region
      $region17: #{seq_encoder2_forward.4} parent=11 // pred_check
        %p165 = pneg %p79
      $region18: #{seq_encoder2_forward.4} parent=11 // pred_check_branch
        %167 = sbr.rel (%p165) target = $region20
      $region19: #{seq_encoder2_forward.4} parent=11 // pred_region
        _
      $region20: #{seq_encoder2_forward.4} parent=11 // pred_fallthru
        _
      // Predicated region
      $region21: #{seq_encoder2_forward.4} parent=11 // pred_check
        %p168 = pneg %p100
      $region22: #{seq_encoder2_forward.4} parent=11 // pred_check_branch
        %170 = sbr.rel (%p168) target = $region24
      $region23: #{seq_encoder2_forward.4} parent=11 // pred_region
        _
      $region24: #{seq_encoder2_forward.4} parent=11 // pred_fallthru
        _
      // Predicated region
      $region25: #{seq_encoder2_forward.4} parent=11 // pred_check
        %p171 = pneg %p121
      $region26: #{seq_encoder2_forward.4} parent=11 // pred_check_branch
        %173 = sbr.rel (%p171) target = $region28
      $region27: #{seq_encoder2_forward.4} parent=11 // pred_region
        _
      $region28: #{seq_encoder2_forward.4} parent=11 // pred_fallthru
        _
    $region12: #{seq_encoder2_forward.4} parent=5 // pred_fallthru
      _
    %p174 = scmp.lt.s32.totalorder %s11, 2
    // Predicated region
    $region29: #{seq_encoder2_forward.4} parent=5 // pred_check
      %p175 = pneg %p174
    $region30: #{seq_encoder2_forward.4} parent=5 // pred_check_branch
      %177 = sbr.rel (%p175) target = $region32
    $region31: #{seq_encoder2_forward.4} parent=5 // pred_region
      // Predicated region
      $region33: #{seq_encoder2_forward.4} parent=31 // pred_check
        %p178 = pneg %p31
      $region34: #{seq_encoder2_forward.4} parent=31 // pred_check_branch
        %180 = sbr.rel (%p178) target = $region36
      $region35: #{seq_encoder2_forward.4} parent=31 // pred_region
        %p181 = scmp.lt.s32.totalorder %s11, 1
        %s182 = scalar_select %p181, %s11, 1
        %s183 = smul.addr %s182, 8
        %s184 = scalar_lea.vmem %s0, %s183
      $region36: #{seq_encoder2_forward.4} parent=31 // pred_fallthru
        _
    $region32: #{seq_encoder2_forward.4} parent=5 // pred_fallthru
      _
    %p185 = scmp.le.s32.totalorder 1, %s11
    %p186 = scmp.lt.s32.totalorder %s11, 3
    %p187 = pnand %p185, %p186
    %p188 = pneg %p187
    // Predicated region
    $region37: #{seq_encoder2_forward.4} parent=5 // pred_check
      _
    $region38: #{seq_encoder2_forward.4} parent=5 // pred_check_branch
      %190 = sbr.rel (%p187) target = $region40
    $region39: #{seq_encoder2_forward.4} parent=5 // pred_region
      %s191 = ssub.s32 %s11, 1
      %p192 = scmp.lt.s32.totalorder %s16, 1
      %s193 = scalar_select %p192, %s16, 1
      %s194 = smul.addr %s193, 8
      %s195 = scalar_lea.vmem %s0, %s194
      %p196 = pneg %p37
      %p197 = pneg %p34
      %p198 = pneg %p58
      %p199 = pneg %p55
      %p200 = pneg %p79
      %p201 = pneg %p76
      %p202 = pneg %p100
      %p203 = pneg %p97
      %p204 = pneg %p121
      %p205 = pneg %p118
      %p206 = pneg %p147
      %p207 = pneg %p144
      %p208 = scmp.lt.s32.totalorder %s16, 1
      %s209 = scalar_select %p208, %s16, 1
      %s210 = smul.addr %s209, 8
      %s211 = smul.addr %s210, 8
      %s212 = scalar_lea.vmem %s5, %s211
      %p213 = scmp.lt.s32.totalorder %s16, 1
      %s214 = scalar_select %p213, %s16, 1
      %s215 = smul.addr %s214, 8
      %s216 = scalar_lea.vmem %s0, %s215
      %p217 = scmp.lt.s32.totalorder %s16, 1
      %s218 = scalar_select %p217, %s16, 1
      %s219 = smul.addr %s218, 8
      %s220 = smul.addr %s219, 8
      %s221 = scalar_lea.vmem %s5, %s220
      %vm222 = vcmask 7168
      %223 = vst.msk [vmem:[#allocation2] sm:$0xff] %vm222, 0.0
      %v224 = vld [vmem:[%s216] sm:$0xff]
      %226 = vrot.lane.b32.xlu0 %v224, 1
      %v227 = vpop.permute.xlu0 %226
      %vm229 = vcmask 1047560
      %230 = vst.msk [vmem:[#allocation2] sm:$0xff] %vm229, %v227
      %v231 = vld [vmem:[%s216] sm:$0xff]
      %232 = vst [vmem:[#allocation2 + $0x8] sm:$0xff] %v231
      %vm233 = vcmask 1048568
      %234 = vst.msk [vmem:[#allocation2 + $0x10] sm:$0xff] %vm233, 0.0
      %v235 = vld [vmem:[%s216] sm:$0xff]
      %237 = vrot.lane.b32.xlu0 %v235, 127
      %v238 = vpop.permute.xlu0 %237
      %vm240 = vcmask 1039360
      %241 = vst.msk [vmem:[#allocation2 + $0x10] sm:$0xff] %vm240, %v238
      %v242 = vld [vmem:[%s1] sm:$0xff]
      %v243 = vld [vmem:[%s1 + $0x8] sm:$0xff]
      %v244 = vld [vmem:[%s1 + $0x10] sm:$0xff]
      %v245 = vld [vmem:[%s1 + $0x18] sm:$0xff]
      %v246 = vld [vmem:[#allocation2] sm:$0xff]
      %v247 = vld [vmem:[#allocation2 + $0x8] sm:$0xff]
      %v248 = vld [vmem:[#allocation2 + $0x10] sm:$0xff]
      %v249 = vld [vmem:[%s2] sm:$0xff]
      %v250 = vld [vmem:[%s2 + $0x8] sm:$0xff]
      %v251 = vld [vmem:[%s2 + $0x10] sm:$0xff]
      %v252 = vld [vmem:[%s2 + $0x18] sm:$0xff]
      %254 = vset.pattern.permute.xlu0 0
      %255 = vperm.xlu0 %254, %v249
      %v256 = vpop.permute.xlu0 %255
      %259 = vset.pattern.permute.xlu0 0
      %260 = vperm.xlu0 %259, %v250
      %v261 = vpop.permute.xlu0 %260
      %264 = vset.pattern.permute.xlu0 0
      %265 = vperm.xlu0 %264, %v251
      %v266 = vpop.permute.xlu0 %265
      %269 = vset.pattern.permute.xlu0 0
      %270 = vperm.xlu0 %269, %v252
      %v271 = vpop.permute.xlu0 %270
      %vm273 = vcmask 195584
      %v275 = vsel %vm273, %v242, 0
      %v278 = vsel %vm273, %v243, 0
      %v281 = vsel %vm273, %v244, 0
      %v284 = vsel %vm273, %v245, 0
      %286 = vmatprep.subr.mxu0 0.0
      %287 = vmatpush1.msra.mxu0 %v246
      %288 = vmatprep.subr.mxu0 0.0
      %289 = vmatpush1.msra.mxu0 %v247
      %290 = vmatprep.subr.mxu0 0.0
      %291 = vmatpush1.msra.mxu0 %v248
      %292 = vmatprep.subr.mxu0 0.0
      %293 = vmatpush1.msra.mxu0 0.0
      %294 = vmatprep.subr.mxu0 0.0
      %295 = vmatpush1.msra.mxu0 0.0
      %296 = vmatprep.subr.mxu0 0.0
      %297 = vmatpush1.msra.mxu0 0.0
      %298 = vmatprep.subr.mxu0 0.0
      %299 = vmatpush1.msra.mxu0 0.0
      %300 = vmatprep.subr.mxu0 0.0
      %301 = vmatpush1.msra.mxu0 0.0
      %302 = vmatprep.subr.mxu0 0.0
      %303 = vmatpush1.msra.mxu0 0.0
      %304 = vmatprep.subr.mxu0 0.0
      %305 = vmatpush1.msra.mxu0 0.0
      %306 = vmatprep.subr.mxu0 0.0
      %307 = vmatpush1.msra.mxu0 0.0
      %308 = vmatprep.subr.mxu0 0.0
      %309 = vmatpush1.msra.mxu0 0.0
      %310 = vmatprep.subr.mxu0 0.0
      %311 = vmatpush1.msra.mxu0 0.0
      %312 = vmatprep.subr.mxu0 0.0
      %313 = vmatpush1.msra.mxu0 0.0
      %314 = vmatprep.subr.mxu0 0.0
      %315 = vmatpush1.msra.mxu0 0.0
      %316 = vmatprep.subr.mxu0 0.0
      %317 = vmatpush1.msra.mxu0 0.0
      %318 = vmatprep.subr.mxu0 0.0
      %319 = vmatpush1.msra.mxu0 0.0
      %320 = vmatprep.subr.mxu0 0.0
      %321 = vmatpush1.msra.mxu0 0.0
      %322 = vmatprep.subr.mxu0 0.0
      %323 = vmatpush1.msra.mxu0 0.0
      %324 = vmatprep.subr.mxu0 0.0
      %325 = vmatpush1.msra.mxu0 0.0
      %326 = vmatprep.subr.mxu0 0.0
      %327 = vmatpush1.msra.mxu0 0.0
      %328 = vmatprep.subr.mxu0 0.0
      %329 = vmatpush1.msra.mxu0 0.0
      %330 = vmatprep.subr.mxu0 0.0
      %331 = vmatpush1.msra.mxu0 0.0
      %332 = vmatprep.subr.mxu0 0.0
      %333 = vmatpush1.msra.mxu0 0.0
      %334 = vmatprep.subr.mxu0 0.0
      %335 = vmatpush1.msra.mxu0 0.0
      %336 = vmatprep.subr.mxu0 0.0
      %337 = vmatpush1.msra.mxu0 0.0
      %338 = vmatprep.subr.mxu0 0.0
      %339 = vmatpush1.msra.mxu0 0.0
      %340 = vmatprep.subr.mxu0 0.0
      %341 = vmatpush1.msra.mxu0 0.0
      %342 = vmatprep.subr.mxu0 0.0
      %343 = vmatpush1.msra.mxu0 0.0
      %344 = vmatprep.subr.mxu0 0.0
      %345 = vmatpush1.msra.mxu0 0.0
      %346 = vmatprep.subr.mxu0 0.0
      %347 = vmatpush1.msra.mxu0 0.0
      %348 = vmatprep.subr.mxu0 0.0
      %349 = vmatpush1.msra.mxu0 0.0
      %350 = vmatprep.mubr.f32.mxu0 0.0
      %351 = vmatmul.mubr.f32.gmra.mrb[0].mxu0 %v275
      %v352 = vpop.f32.mrb[0].mxu0
      %v353 = vadd.f32 %v256, %v352
      %v354 = vpop.f32.mrb[0].mxu0
      %355 = vmatprep.mubr.f32.mxu0 0.0
      %356 = vmatmul.mubr.f32.gmra.mrb[0].mxu0 %v278
      %v357 = vpop.f32.mrb[0].mxu0
      %v358 = vadd.f32 %v261, %v357
      %v359 = vpop.f32.mrb[0].mxu0
      %360 = vmatprep.mubr.f32.mxu0 0.0
      %361 = vmatmul.mubr.f32.gmra.mrb[0].mxu0 %v281
      %v362 = vpop.f32.mrb[0].mxu0
      %v363 = vadd.f32 %v266, %v362
      %v364 = vpop.f32.mrb[0].mxu0
      %365 = vmatprep.mubr.f32.mxu0 0.0
      %366 = vmatmul.mubr.f32.gmra.mrb[0].mxu0 %v284
      %v367 = vpop.f32.mrb[0].mxu0
      %v368 = vadd.f32 %v271, %v367
      %v369 = vpop.f32.mrb[0].mxu0
      %370 = vdwg.mxu0
      %v371 = vsub.f32 0.0, %v353
      %v372 = vsub.f32 0.0, %v358
      %v373 = vsub.f32 0.0, %v363
      %v374 = vsub.f32 0.0, %v368
      %v375 = vmul.f32 %v371, 1.442695
      %v376 = vpow.pop %v375
      %v377 = vmul.f32 %v372, 1.442695
      %v378 = vpow.pop %v377
      %v379 = vmul.f32 %v373, 1.442695
      %v380 = vpow.pop %v379
      %v381 = vmul.f32 %v374, 1.442695
      %v382 = vpow.pop %v381
      %v383 = vadd.f32 %v376, 1.0
      %v384 = vadd.f32 %v378, 1.0
      %v385 = vadd.f32 %v380, 1.0
      %v386 = vadd.f32 %v382, 1.0
      %v387 = vrcp.pop %v383
      %v388 = vrcp.pop %v384
      %v389 = vrcp.pop %v385
      %v390 = vrcp.pop %v386
      %v391 = vmul.f32 %v353, %v387
      %v392 = vmul.f32 %v358, %v388
      %v393 = vmul.f32 %v363, %v389
      %v394 = vmul.f32 %v368, %v390
      %395 = vst [vmem:[#allocation3] sm:$0xff] %v391
      %396 = vst [vmem:[#allocation3 + $0x8] sm:$0xff] %v392
      %397 = vst [vmem:[#allocation3 + $0x10] sm:$0xff] %v393
      %398 = vst [vmem:[#allocation3 + $0x18] sm:$0xff] %v394
      %399 = vst.msk [vmem:[#allocation4] sm:$0xff] %vm222, 0.0
      %400 = vst.msk [vmem:[#allocation4 + $0x8] sm:$0xff] %vm222, 0.0
      %401 = vst.msk [vmem:[#allocation4 + $0x10] sm:$0xff] %vm222, 0.0
      %402 = vst.msk [vmem:[#allocation4 + $0x18] sm:$0xff] %vm222, 0.0
      %v403 = vld [vmem:[#allocation3] sm:$0xff]
      %v404 = vld [vmem:[#allocation3 + $0x8] sm:$0xff]
      %v405 = vld [vmem:[#allocation3 + $0x10] sm:$0xff]
      %v406 = vld [vmem:[#allocation3 + $0x18] sm:$0xff]
      %411 = vrot.lane.b32.xlu0 %v403, 1
      %v412 = vpop.permute.xlu0 %411
      %413 = vrot.lane.b32.xlu0 %v404, 1
      %v414 = vpop.permute.xlu0 %413
      %415 = vrot.lane.b32.xlu0 %v405, 1
      %v416 = vpop.permute.xlu0 %415
      %417 = vrot.lane.b32.xlu0 %v406, 1
      %v418 = vpop.permute.xlu0 %417
      %423 = vst.msk [vmem:[#allocation4] sm:$0xff] %vm229, %v412
      %424 = vst.msk [vmem:[#allocation4 + $0x8] sm:$0xff] %vm229, %v414
      %425 = vst.msk [vmem:[#allocation4 + $0x10] sm:$0xff] %vm229, %v416
      %426 = vst.msk [vmem:[#allocation4 + $0x18] sm:$0xff] %vm229, %v418
      %v427 = vld [vmem:[#allocation3] sm:$0xff]
      %v428 = vld [vmem:[#allocation3 + $0x8] sm:$0xff]
      %v429 = vld [vmem:[#allocation3 + $0x10] sm:$0xff]
      %v430 = vld [vmem:[#allocation3 + $0x18] sm:$0xff]
      %431 = vst [vmem:[#allocation4 + $0x20] sm:$0xff] %v427
      %432 = vst [vmem:[#allocation4 + $0x28] sm:$0xff] %v428
      %433 = vst [vmem:[#allocation4 + $0x30] sm:$0xff] %v429
      %434 = vst [vmem:[#allocation4 + $0x38] sm:$0xff] %v430
      %435 = vst.msk [vmem:[#allocation4 + $0x40] sm:$0xff] %vm233, 0.0
      %436 = vst.msk [vmem:[#allocation4 + $0x48] sm:$0xff] %vm233, 0.0
      %437 = vst.msk [vmem:[#allocation4 + $0x50] sm:$0xff] %vm233, 0.0
      %438 = vst.msk [vmem:[#allocation4 + $0x58] sm:$0xff] %vm233, 0.0
      %v439 = vld [vmem:[#allocation3] sm:$0xff]
      %v440 = vld [vmem:[#allocation3 + $0x8] sm:$0xff]
      %v441 = vld [vmem:[#allocation3 + $0x10] sm:$0xff]
      %v442 = vld [vmem:[#allocation3 + $0x18] sm:$0xff]
      %447 = vrot.lane.b32.xlu0 %v439, 127
      %v448 = vpop.permute.xlu0 %447
      %449 = vrot.lane.b32.xlu0 %v440, 127
      %v450 = vpop.permute.xlu0 %449
      %451 = vrot.lane.b32.xlu0 %v441, 127
      %v452 = vpop.permute.xlu0 %451
      %453 = vrot.lane.b32.xlu0 %v442, 127
      %v454 = vpop.permute.xlu0 %453
      %459 = vst.msk [vmem:[#allocation4 + $0x40] sm:$0xff] %vm240, %v448
      %460 = vst.msk [vmem:[#allocation4 + $0x48] sm:$0xff] %vm240, %v450
      %461 = vst.msk [vmem:[#allocation4 + $0x50] sm:$0xff] %vm240, %v452
      %462 = vst.msk [vmem:[#allocation4 + $0x58] sm:$0xff] %vm240, %v454
      %v463 = vld [vmem:[%s3] sm:$0xff]
      %v464 = vld [vmem:[%s3 + $0x8] sm:$0xff]
      %v465 = vld [vmem:[%s3 + $0x10] sm:$0xff]
      %v466 = vld [vmem:[%s3 + $0x18] sm:$0xff]
      %v467 = vld [vmem:[#allocation4] sm:$0xff]
      %v468 = vld [vmem:[#allocation4 + $0x8] sm:$0xff]
      %v469 = vld [vmem:[#allocation4 + $0x10] sm:$0xff]
      %v470 = vld [vmem:[#allocation4 + $0x18] sm:$0xff]
      %v471 = vld [vmem:[#allocation4 + $0x20] sm:$0xff]
      %v472 = vld [vmem:[#allocation4 + $0x28] sm:$0xff]
      %v473 = vld [vmem:[#allocation4 + $0x30] sm:$0xff]
      %v474 = vld [vmem:[#allocation4 + $0x38] sm:$0xff]
      %v475 = vld [vmem:[#allocation4 + $0x40] sm:$0xff]
      %v476 = vld [vmem:[#allocation4 + $0x48] sm:$0xff]
      %v477 = vld [vmem:[#allocation4 + $0x50] sm:$0xff]
      %v478 = vld [vmem:[#allocation4 + $0x58] sm:$0xff]
      %v479 = vld [vmem:[%s4] sm:$0xff]
      %v480 = vld [vmem:[%s4 + $0x8] sm:$0xff]
      %v481 = vld [vmem:[%s4 + $0x10] sm:$0xff]
      %v482 = vld [vmem:[%s4 + $0x18] sm:$0xff]
      %484 = vset.pattern.permute.xlu0 0
      %485 = vperm.xlu0 %484, %v479
      %v486 = vpop.permute.xlu0 %485
      %489 = vset.pattern.permute.xlu0 0
      %490 = vperm.xlu0 %489, %v480
      %v491 = vpop.permute.xlu0 %490
      %494 = vset.pattern.permute.xlu0 0
      %495 = vperm.xlu0 %494, %v481
      %v496 = vpop.permute.xlu0 %495
      %499 = vset.pattern.permute.xlu0 0
      %500 = vperm.xlu0 %499, %v482
      %v501 = vpop.permute.xlu0 %500
      %vm503 = vcmask 785408
      %v505 = vsel %vm503, %v463, 0
      %v508 = vsel %vm503, %v464, 0
      %v511 = vsel %vm503, %v465, 0
      %v514 = vsel %vm503, %v466, 0
      %516 = vmatprep.subr.mxu0 0.0
      %517 = vmatpush1.msra.mxu0 %v467
      %518 = vmatprep.subr.mxu0 0.0
      %519 = vmatpush1.msra.mxu0 %v468
      %520 = vmatprep.subr.mxu0 0.0
      %521 = vmatpush1.msra.mxu0 %v469
      %522 = vmatprep.subr.mxu0 0.0
      %523 = vmatpush1.msra.mxu0 %v470
      %524 = vmatprep.subr.mxu0 0.0
      %525 = vmatpush1.msra.mxu0 %v471
      %526 = vmatprep.subr.mxu0 0.0
      %527 = vmatpush1.msra.mxu0 %v472
      %528 = vmatprep.subr.mxu0 0.0
      %529 = vmatpush1.msra.mxu0 %v473
      %530 = vmatprep.subr.mxu0 0.0
      %531 = vmatpush1.msra.mxu0 %v474
      %532 = vmatprep.subr.mxu0 0.0
      %533 = vmatpush1.msra.mxu0 %v475
      %534 = vmatprep.subr.mxu0 0.0
      %535 = vmatpush1.msra.mxu0 %v476
      %536 = vmatprep.subr.mxu0 0.0
      %537 = vmatpush1.msra.mxu0 %v477
      %538 = vmatprep.subr.mxu0 0.0
      %539 = vmatpush1.msra.mxu0 %v478
      %540 = vmatprep.subr.mxu0 0.0
      %541 = vmatpush1.msra.mxu0 0.0
      %542 = vmatprep.subr.mxu0 0.0
      %543 = vmatpush1.msra.mxu0 0.0
      %544 = vmatprep.subr.mxu0 0.0
      %545 = vmatpush1.msra.mxu0 0.0
      %546 = vmatprep.subr.mxu0 0.0
      %547 = vmatpush1.msra.mxu0 0.0
      %548 = vmatprep.subr.mxu0 0.0
      %549 = vmatpush1.msra.mxu0 0.0
      %550 = vmatprep.subr.mxu0 0.0
      %551 = vmatpush1.msra.mxu0 0.0
      %552 = vmatprep.subr.mxu0 0.0
      %553 = vmatpush1.msra.mxu0 0.0
      %554 = vmatprep.subr.mxu0 0.0
      %555 = vmatpush1.msra.mxu0 0.0
      %556 = vmatprep.subr.mxu0 0.0
      %557 = vmatpush1.msra.mxu0 0.0
      %558 = vmatprep.subr.mxu0 0.0
      %559 = vmatpush1.msra.mxu0 0.0
      %560 = vmatprep.subr.mxu0 0.0
      %561 = vmatpush1.msra.mxu0 0.0
      %562 = vmatprep.subr.mxu0 0.0
      %563 = vmatpush1.msra.mxu0 0.0
      %564 = vmatprep.subr.mxu0 0.0
      %565 = vmatpush1.msra.mxu0 0.0
      %566 = vmatprep.subr.mxu0 0.0
      %567 = vmatpush1.msra.mxu0 0.0
      %568 = vmatprep.subr.mxu0 0.0
      %569 = vmatpush1.msra.mxu0 0.0
      %570 = vmatprep.subr.mxu0 0.0
      %571 = vmatpush1.msra.mxu0 0.0
      %572 = vmatprep.subr.mxu0 0.0
      %573 = vmatpush1.msra.mxu0 0.0
      %574 = vmatprep.subr.mxu0 0.0
      %575 = vmatpush1.msra.mxu0 0.0
      %576 = vmatprep.subr.mxu0 0.0
      %577 = vmatpush1.msra.mxu0 0.0
      %578 = vmatprep.subr.mxu0 0.0
      %579 = vmatpush1.msra.mxu0 0.0
      %580 = vmatprep.mubr.f32.mxu0 0.0
      %581 = vmatmul.mubr.f32.gmra.mrb[0].mxu0 %v505
      %v582 = vpop.f32.mrb[0].mxu0
      %v583 = vadd.f32 %v486, %v582
      %v584 = vpop.f32.mrb[0].mxu0
      %585 = vmatprep.mubr.f32.mxu0 0.0
      %586 = vmatmul.mubr.f32.gmra.mrb[0].mxu0 %v508
      %v587 = vpop.f32.mrb[0].mxu0
      %v588 = vadd.f32 %v491, %v587
      %v589 = vpop.f32.mrb[0].mxu0
      %590 = vmatprep.mubr.f32.mxu0 0.0
      %591 = vmatmul.mubr.f32.gmra.mrb[0].mxu0 %v511
      %v592 = vpop.f32.mrb[0].mxu0
      %v593 = vadd.f32 %v496, %v592
      %v594 = vpop.f32.mrb[0].mxu0
      %595 = vmatprep.mubr.f32.mxu0 0.0
      %596 = vmatmul.mubr.f32.gmra.mrb[0].mxu0 %v514
      %v597 = vpop.f32.mrb[0].mxu0
      %v598 = vadd.f32 %v501, %v597
      %v599 = vpop.f32.mrb[0].mxu0
      %600 = vdwg.mxu0
      %v601 = vsub.f32 0.0, %v583
      %v602 = vsub.f32 0.0, %v588
      %v603 = vsub.f32 0.0, %v593
      %v604 = vsub.f32 0.0, %v598
      %v605 = vmul.f32 %v601, 1.442695
      %v606 = vpow.pop %v605
      %v607 = vmul.f32 %v602, 1.442695
      %v608 = vpow.pop %v607
      %v609 = vmul.f32 %v603, 1.442695
      %v610 = vpow.pop %v609
      %v611 = vmul.f32 %v604, 1.442695
      %v612 = vpow.pop %v611
      %v613 = vadd.f32 %v606, 1.0
      %v614 = vadd.f32 %v608, 1.0
      %v615 = vadd.f32 %v610, 1.0
      %v616 = vadd.f32 %v612, 1.0
      %v617 = vrcp.pop %v613
      %v618 = vrcp.pop %v614
      %v619 = vrcp.pop %v615
      %v620 = vrcp.pop %v616
      %v621 = vmul.f32 %v583, %v617
      %v622 = vmul.f32 %v588, %v618
      %v623 = vmul.f32 %v593, %v619
      %v624 = vmul.f32 %v598, %v620
      %v625 = vld [vmem:[#allocation3] sm:$0xff]
      %v626 = vld [vmem:[#allocation3 + $0x8] sm:$0xff]
      %v627 = vld [vmem:[#allocation3 + $0x10] sm:$0xff]
      %v628 = vld [vmem:[#allocation3 + $0x18] sm:$0xff]
      %v629 = vadd.f32 %v625, %v621
      %v630 = vadd.f32 %v626, %v622
      %v631 = vadd.f32 %v627, %v623
      %v632 = vadd.f32 %v628, %v624
      %633 = vst [vmem:[%s221] sm:$0xff] %v629
      %634 = vst [vmem:[%s221 + $0x8] sm:$0xff] %v630
      %635 = vst [vmem:[%s221 + $0x10] sm:$0xff] %v631
      %636 = vst [vmem:[%s221 + $0x18] sm:$0xff] %v632
      %p637 = scmp.lt.s32.totalorder %s16, 1
      %s638 = scalar_select %p637, %s16, 1
      %s639 = smul.addr %s638, 8
      %s640 = smul.addr %s639, 8
      %s641 = scalar_lea.vmem %s5, %s640
      // Predicated region
      $region41: #{seq_encoder2_forward.4} parent=39 // pred_check
        %p642 = pneg %p144
      $region42: #{seq_encoder2_forward.4} parent=39 // pred_check_branch
        %644 = sbr.rel (%p642) target = $region44
      $region43: #{seq_encoder2_forward.4} parent=39 // pred_region
        _
      $region44: #{seq_encoder2_forward.4} parent=39 // pred_fallthru
        _
    $region40: #{seq_encoder2_forward.4} parent=5 // pred_fallthru
      _
    %p645 = scmp.le.s32.totalorder 2, %s11
    // Predicated region
    $region45: #{seq_encoder2_forward.4} parent=5 // pred_check
      %p646 = pneg %p645
    $region46: #{seq_encoder2_forward.4} parent=5 // pred_check_branch
      %648 = sbr.rel (%p646) target = $region48
    $region47: #{seq_encoder2_forward.4} parent=5 // pred_region
      %s649 = ssub.s32 %s11, 2
      // Predicated region
      $region49: #{seq_encoder2_forward.4} parent=47 // pred_check
        %p650 = pneg %p150
      $region50: #{seq_encoder2_forward.4} parent=47 // pred_check_branch
        %652 = sbr.rel (%p650) target = $region52
      $region51: #{seq_encoder2_forward.4} parent=47 // pred_region
        %p653 = scmp.lt.s32.totalorder %s17, 1
        %s654 = scalar_select %p653, %s17, 1
        %s655 = smul.addr %s654, 8
        %s656 = smul.addr %s655, 8
        %s657 = scalar_lea.vmem %s5, %s656
      $region52: #{seq_encoder2_forward.4} parent=47 // pred_fallthru
        _
    $region48: #{seq_encoder2_forward.4} parent=5 // pred_fallthru
      _
  $region6: #{seq_encoder2_forward.4} parent=0 // loop_footer
    %s15 = sadd.s32 1, %s11
  $region7: #{seq_encoder2_forward.4} parent=0 // loop_footer_branch
    %10 = sbr.rel target = $region3
  $region8: #{seq_encoder2_forward.4} parent=0 // loop_exit
    _

// kernel: seq_encoder2_forward.5
$region0: #{seq_encoder2_forward.5}
  #allocation0 [shape = 'u32[]', space=smem, size = 0x4, offset = 0x4, fixed_abs, tag = 'smem constant byte address 0x4 - core index']
  #allocation1 [shape = 'u32[144,128]{1,0:T(1,128)}', space=vmem, size = 0x12000, scoped, tag = 'internal scratch']
  #allocation2 [shape = 'f32[192,128]{1,0:T(8,128)}', space=vmem, size = 0x18000, scoped, tag = 'scratch operand']
  #allocation3 [shape = 'f32[16,128]{1,0:T(8,128)}', space=vmem, size = 0x2000, scoped, tag = 'scratch operand']
  #allocation4 [shape = 'f32[96,128]{1,0:T(8,128)}', space=vmem, size = 0xc000, scoped, tag = 'scratch operand']
  %s0 = inlined_call_operand.vmem [shape: f32[2,64,128], index: 0, kind: input, shape index: {}, may-alias: {0,5}]
  %s1 = inlined_call_operand.vmem [shape: f32[16,192], index: 1, kind: input, shape index: {}]
  %s2 = inlined_call_operand.vmem [shape: f32[16,1], index: 2, kind: input, shape index: {}]
  %s3 = inlined_call_operand.vmem [shape: f32[16,96], index: 3, kind: input, shape index: {}]
  %s4 = inlined_call_operand.vmem [shape: f32[16,1], index: 4, kind: input, shape index: {}]
  %s5 = inlined_call_operand.vmem [shape: f32[2,64,128], index: 5, kind: output, shape index: {}, may-alias: {0,5}]
  %s6 = sld [smem:[#allocation0]]
  $region53: #{seq_encoder2_forward.5} parent=0
    _
  %s8 = ssub.s32 1, %s6
  %s9 = scalar_select 0, %s8, %s6
  loop: start=0, step=1, limit=4
  $region2: #{seq_encoder2_forward.5} parent=0 // loop_pre_header
    _
  $region3: #{seq_encoder2_forward.5} parent=0 // loop_header
    %s11 = sphi 0, %s15
    %p12 = scmp.ge.s32.totalorder %s11, 4
    %s21 = sphi 0, %s23
    %s24 = sphi 0, %s21
    %s25 = sphi 0, %s24
    %s41 = sphi 0, %s25
    %s45 = sphi 0, %s45
    %s47 = sphi 0, %s45
    %s48 = sphi 0, %s47
    %s62 = sphi 0, %s48
    %s66 = sphi 0, %s66
    %s68 = sphi 0, %s66
    %s69 = sphi 0, %s68
    %s83 = sphi 0, %s69
    %s87 = sphi 0, %s87
    %s89 = sphi 0, %s87
    %s90 = sphi 0, %s89
    %s104 = sphi 0, %s90
    %s108 = sphi 0, %s108
    %s110 = sphi 0, %s108
    %s111 = sphi 0, %s110
    %s125 = sphi 0, %s111
    %s131 = sphi 0, %s133
    %s134 = sphi 0, %s131
    %s135 = sphi 0, %s134
    %s151 = sphi 0, %s135
  $region4: #{seq_encoder2_forward.5} parent=0 // loop_header_branch
    %14 = sbr.rel (%p12) target = $region8
  $region5: #{seq_encoder2_forward.5} parent=0 // loop_body
    %s16 = ssub.s32 %s11, 1
    %s17 = ssub.s32 %s11, 2
    %s18 = sadd.s32 %s11, 1
    %s19 = ssub.s32 %s11, %s18
    %p20 = scmp.eq.s32.totalorder %s19, 0
    %s22 = sadd.s32 %s21, 1
    %s23 = scalar_select %p20, %s21, %s22
    %p26 = pneg %p20
    %p27 = scmp.eq.s32.totalorder %s11, 1
    %p28 = por %p26, %p27
    %p29 = scmp.ne.s32.totalorder %s21, %s24
    %p30 = scmp.eq.s32.totalorder %s11, 0
    %p31 = por %p29, %p30
    %p32 = scmp.ne.s32.totalorder %s21, %s24
    %p33 = scmp.eq.s32.totalorder %s16, 1
    %p34 = por %p32, %p33
    %p35 = scmp.ne.s32.totalorder %s24, %s25
    %p36 = scmp.eq.s32.totalorder %s16, 0
    %p37 = por %p35, %p36
    %p38 = scmp.ne.s32.totalorder %s24, %s25
    %p39 = scmp.eq.s32.totalorder %s17, 1
    %p40 = por %p38, %p39
    %p42 = scmp.ne.s32.totalorder %s25, %s41
    %p43 = scmp.eq.s32.totalorder %s17, 0
    %p44 = por %p42, %p43
    %s46 = sadd.s32 %s45, 1
    %p49 = scmp.eq.s32.totalorder %s11, 1
    %p50 = scmp.ne.s32.totalorder %s45, %s47
    %p51 = scmp.eq.s32.totalorder %s11, 0
    %p52 = por %p50, %p51
    %p53 = scmp.ne.s32.totalorder %s45, %s47
    %p54 = scmp.eq.s32.totalorder %s16, 1
    %p55 = por %p53, %p54
    %p56 = scmp.ne.s32.totalorder %s47, %s48
    %p57 = scmp.eq.s32.totalorder %s16, 0
    %p58 = por %p56, %p57
    %p59 = scmp.ne.s32.totalorder %s47, %s48
    %p60 = scmp.eq.s32.totalorder %s17, 1
    %p61 = por %p59, %p60
    %p63 = scmp.ne.s32.totalorder %s48, %s62
    %p64 = scmp.eq.s32.totalorder %s17, 0
    %p65 = por %p63, %p64
    %s67 = sadd.s32 %s66, 1
    %p70 = scmp.eq.s32.totalorder %s11, 1
    %p71 = scmp.ne.s32.totalorder %s66, %s68
    %p72 = scmp.eq.s32.totalorder %s11, 0
    %p73 = por %p71, %p72
    %p74 = scmp.ne.s32.totalorder %s66, %s68
    %p75 = scmp.eq.s32.totalorder %s16, 1
    %p76 = por %p74, %p75
    %p77 = scmp.ne.s32.totalorder %s68, %s69
    %p78 = scmp.eq.s32.totalorder %s16, 0
    %p79 = por %p77, %p78
    %p80 = scmp.ne.s32.totalorder %s68, %s69
    %p81 = scmp.eq.s32.totalorder %s17, 1
    %p82 = por %p80, %p81
    %p84 = scmp.ne.s32.totalorder %s69, %s83
    %p85 = scmp.eq.s32.totalorder %s17, 0
    %p86 = por %p84, %p85
    %s88 = sadd.s32 %s87, 1
    %p91 = scmp.eq.s32.totalorder %s11, 1
    %p92 = scmp.ne.s32.totalorder %s87, %s89
    %p93 = scmp.eq.s32.totalorder %s11, 0
    %p94 = por %p92, %p93
    %p95 = scmp.ne.s32.totalorder %s87, %s89
    %p96 = scmp.eq.s32.totalorder %s16, 1
    %p97 = por %p95, %p96
    %p98 = scmp.ne.s32.totalorder %s89, %s90
    %p99 = scmp.eq.s32.totalorder %s16, 0
    %p100 = por %p98, %p99
    %p101 = scmp.ne.s32.totalorder %s89, %s90
    %p102 = scmp.eq.s32.totalorder %s17, 1
    %p103 = por %p101, %p102
    %p105 = scmp.ne.s32.totalorder %s90, %s104
    %p106 = scmp.eq.s32.totalorder %s17, 0
    %p107 = por %p105, %p106
    %s109 = sadd.s32 %s108, 1
    %p112 = scmp.eq.s32.totalorder %s11, 1
    %p113 = scmp.ne.s32.totalorder %s108, %s110
    %p114 = scmp.eq.s32.totalorder %s11, 0
    %p115 = por %p113, %p114
    %p116 = scmp.ne.s32.totalorder %s108, %s110
    %p117 = scmp.eq.s32.totalorder %s16, 1
    %p118 = por %p116, %p117
    %p119 = scmp.ne.s32.totalorder %s110, %s111
    %p120 = scmp.eq.s32.totalorder %s16, 0
    %p121 = por %p119, %p120
    %p122 = scmp.ne.s32.totalorder %s110, %s111
    %p123 = scmp.eq.s32.totalorder %s17, 1
    %p124 = por %p122, %p123
    %p126 = scmp.ne.s32.totalorder %s111, %s125
    %p127 = scmp.eq.s32.totalorder %s17, 0
    %p128 = por %p126, %p127
    %s129 = ssub.s32 %s11, %s18
    %p130 = scmp.eq.s32.totalorder %s129, 0
    %s132 = sadd.s32 %s131, 1
    %s133 = scalar_select %p130, %s131, %s132
    %p136 = pneg %p130
    %p137 = scmp.eq.s32.totalorder %s11, 1
    %p138 = por %p136, %p137
    %p139 = scmp.ne.s32.totalorder %s131, %s134
    %p140 = scmp.eq.s32.totalorder %s11, 0
    %p141 = por %p139, %p140
    %p142 = scmp.ne.s32.totalorder %s131, %s134
    %p143 = scmp.eq.s32.totalorder %s16, 1
    %p144 = por %p142, %p143
    %p145 = scmp.ne.s32.totalorder %s134, %s135
    %p146 = scmp.eq.s32.totalorder %s16, 0
    %p147 = por %p145, %p146
    %p148 = scmp.ne.s32.totalorder %s134, %s135
    %p149 = scmp.eq.s32.totalorder %s17, 1
    %p150 = por %p148, %p149
    %p152 = scmp.ne.s32.totalorder %s135, %s151
    %p153 = scmp.eq.s32.totalorder %s17, 0
    %p154 = por %p152, %p153
    %p155 = scmp.le.s32.totalorder 1, %s11
    %p156 = scmp.lt.s32.totalorder %s11, 3
    %p157 = pnand %p155, %p156
    %p158 = pneg %p157
    // Predicated region
    $region9: #{seq_encoder2_forward.5} parent=5 // pred_check
      _
    $region10: #{seq_encoder2_forward.5} parent=5 // pred_check_branch
      %160 = sbr.rel (%p157) target = $region12
    $region11: #{seq_encoder2_forward.5} parent=5 // pred_region
      %s161 = ssub.s32 %s11, 1
      // Predicated region
      $region13: #{seq_encoder2_forward.5} parent=11 // pred_check
        %p162 = pneg %p58
      $region14: #{seq_encoder2_forward.5} parent=11 // pred_check_branch
        %164 = sbr.rel (%p162) target = $region16
      $region15: #{seq_encoder2_forward.5} parent=11 // pred_region
        _
      $region16: #{seq_encoder2_forward.5} parent=11 // pred_fallthru
        _
      // Predicated region
      $region17: #{seq_encoder2_forward.5} parent=11 // pred_check
        %p165 = pneg %p79
      $region18: #{seq_encoder2_forward.5} parent=11 // pred_check_branch
        %167 = sbr.rel (%p165) target = $region20
      $region19: #{seq_encoder2_forward.5} parent=11 // pred_region
        _
      $region20: #{seq_encoder2_forward.5} parent=11 // pred_fallthru
        _
      // Predicated region
      $region21: #{seq_encoder2_forward.5} parent=11 // pred_check
        %p168 = pneg %p100
      $region22: #{seq_encoder2_forward.5} parent=11 // pred_check_branch
        %170 = sbr.rel (%p168) target = $region24
      $region23: #{seq_encoder2_forward.5} parent=11 // pred_region
        _
      $region24: #{seq_encoder2_forward.5} parent=11 // pred_fallthru
        _
      // Predicated region
      $region25: #{seq_encoder2_forward.5} parent=11 // pred_check
        %p171 = pneg %p121
      $region26: #{seq_encoder2_forward.5} parent=11 // pred_check_branch
        %173 = sbr.rel (%p171) target = $region28
      $region27: #{seq_encoder2_forward.5} parent=11 // pred_region
        _
      $region28: #{seq_encoder2_forward.5} parent=11 // pred_fallthru
        _
    $region12: #{seq_encoder2_forward.5} parent=5 // pred_fallthru
      _
    %p174 = scmp.lt.s32.totalorder %s11, 2
    // Predicated region
    $region29: #{seq_encoder2_forward.5} parent=5 // pred_check
      %p175 = pneg %p174
    $region30: #{seq_encoder2_forward.5} parent=5 // pred_check_branch
      %177 = sbr.rel (%p175) target = $region32
    $region31: #{seq_encoder2_forward.5} parent=5 // pred_region
      // Predicated region
      $region33: #{seq_encoder2_forward.5} parent=31 // pred_check
        %p178 = pneg %p31
      $region34: #{seq_encoder2_forward.5} parent=31 // pred_check_branch
        %180 = sbr.rel (%p178) target = $region36
      $region35: #{seq_encoder2_forward.5} parent=31 // pred_region
        %p181 = scmp.lt.s32.totalorder %s11, 1
        %s182 = scalar_select %p181, %s11, 1
        %s183 = smul.addr %s182, 8
        %s184 = smul.addr %s183, 8
        %s185 = scalar_lea.vmem %s0, %s184
      $region36: #{seq_encoder2_forward.5} parent=31 // pred_fallthru
        _
    $region32: #{seq_encoder2_forward.5} parent=5 // pred_fallthru
      _
    %p186 = scmp.le.s32.totalorder 1, %s11
    %p187 = scmp.lt.s32.totalorder %s11, 3
    %p188 = pnand %p186, %p187
    %p189 = pneg %p188
    // Predicated region
    $region37: #{seq_encoder2_forward.5} parent=5 // pred_check
      _
    $region38: #{seq_encoder2_forward.5} parent=5 // pred_check_branch
      %191 = sbr.rel (%p188) target = $region40
    $region39: #{seq_encoder2_forward.5} parent=5 // pred_region
      %s192 = ssub.s32 %s11, 1
      %p193 = scmp.lt.s32.totalorder %s16, 1
      %s194 = scalar_select %p193, %s16, 1
      %s195 = smul.addr %s194, 8
      %s196 = smul.addr %s195, 8
      %s197 = scalar_lea.vmem %s0, %s196
      %p198 = pneg %p37
      %p199 = pneg %p34
      %p200 = pneg %p58
      %p201 = pneg %p55
      %p202 = pneg %p79
      %p203 = pneg %p76
      %p204 = pneg %p100
      %p205 = pneg %p97
      %p206 = pneg %p121
      %p207 = pneg %p118
      %p208 = pneg %p147
      %p209 = pneg %p144
      %p210 = scmp.lt.s32.totalorder %s16, 1
      %s211 = scalar_select %p210, %s16, 1
      %s212 = smul.addr %s211, 8
      %s213 = sadd.s32 4, %s212
      %s214 = smul.addr %s213, 8
      %s215 = scalar_lea.vmem %s5, %s214
      %p216 = scmp.lt.s32.totalorder %s16, 1
      %s217 = scalar_select %p216, %s16, 1
      %s218 = smul.addr %s217, 8
      %s219 = smul.addr %s218, 8
      %s220 = scalar_lea.vmem %s0, %s219
      %p221 = scmp.lt.s32.totalorder %s16, 1
      %s222 = scalar_select %p221, %s16, 1
      %s223 = smul.addr %s222, 8
      %s224 = sadd.s32 4, %s223
      %s225 = smul.addr %s224, 8
      %s226 = scalar_lea.vmem %s5, %s225
      %vm227 = vcmask 39936
      %228 = vst.msk [vmem:[#allocation2] sm:$0xff] %vm227, 0.0
      %229 = vst.msk [vmem:[#allocation2 + $0x8] sm:$0xff] %vm227, 0.0
      %230 = vst.msk [vmem:[#allocation2 + $0x10] sm:$0xff] %vm227, 0.0
      %231 = vst.msk [vmem:[#allocation2 + $0x18] sm:$0xff] %vm227, 0.0
      %v232 = vld [vmem:[%s220] sm:$0xff]
      %v233 = vld [vmem:[%s220 + $0x8] sm:$0xff]
      %v234 = vld [vmem:[%s220 + $0x10] sm:$0xff]
      %v235 = vld [vmem:[%s220 + $0x18] sm:$0xff]
      %240 = vrot.lane.b32.xlu0 %v232, 5
      %v241 = vpop.permute.xlu0 %240
      %242 = vrot.lane.b32.xlu0 %v233, 5
      %v243 = vpop.permute.xlu0 %242
      %244 = vrot.lane.b32.xlu0 %v234, 5
      %v245 = vpop.permute.xlu0 %244
      %246 = vrot.lane.b32.xlu0 %v235, 5
      %v247 = vpop.permute.xlu0 %246
      %vm252 = vcmask 1047592
      %253 = vst.msk [vmem:[#allocation2] sm:$0xff] %vm252, %v241
      %254 = vst.msk [vmem:[#allocation2 + $0x8] sm:$0xff] %vm252, %v243
      %255 = vst.msk [vmem:[#allocation2 + $0x10] sm:$0xff] %vm252, %v245
      %256 = vst.msk [vmem:[#allocation2 + $0x18] sm:$0xff] %vm252, %v247
      %vm257 = vcmask 23552
      %258 = vst.msk [vmem:[#allocation2 + $0x20] sm:$0xff] %vm257, 0.0
      %259 = vst.msk [vmem:[#allocation2 + $0x28] sm:$0xff] %vm257, 0.0
      %260 = vst.msk [vmem:[#allocation2 + $0x30] sm:$0xff] %vm257, 0.0
      %261 = vst.msk [vmem:[#allocation2 + $0x38] sm:$0xff] %vm257, 0.0
      %v262 = vld [vmem:[%s220] sm:$0xff]
      %v263 = vld [vmem:[%s220 + $0x8] sm:$0xff]
      %v264 = vld [vmem:[%s220 + $0x10] sm:$0xff]
      %v265 = vld [vmem:[%s220 + $0x18] sm:$0xff]
      %270 = vrot.lane.b32.xlu0 %v262, 3
      %v271 = vpop.permute.xlu0 %270
      %272 = vrot.lane.b32.xlu0 %v263, 3
      %v273 = vpop.permute.xlu0 %272
      %274 = vrot.lane.b32.xlu0 %v264, 3
      %v275 = vpop.permute.xlu0 %274
      %276 = vrot.lane.b32.xlu0 %v265, 3
      %v277 = vpop.permute.xlu0 %276
      %vm282 = vcmask 1047576
      %283 = vst.msk [vmem:[#allocation2 + $0x20] sm:$0xff] %vm282, %v271
      %284 = vst.msk [vmem:[#allocation2 + $0x28] sm:$0xff] %vm282, %v273
      %285 = vst.msk [vmem:[#allocation2 + $0x30] sm:$0xff] %vm282, %v275
      %286 = vst.msk [vmem:[#allocation2 + $0x38] sm:$0xff] %vm282, %v277
      %vm287 = vcmask 7168
      %288 = vst.msk [vmem:[#allocation2 + $0x40] sm:$0xff] %vm287, 0.0
      %289 = vst.msk [vmem:[#allocation2 + $0x48] sm:$0xff] %vm287, 0.0
      %290 = vst.msk [vmem:[#allocation2 + $0x50] sm:$0xff] %vm287, 0.0
      %291 = vst.msk [vmem:[#allocation2 + $0x58] sm:$0xff] %vm287, 0.0
      %v292 = vld [vmem:[%s220] sm:$0xff]
      %v293 = vld [vmem:[%s220 + $0x8] sm:$0xff]
      %v294 = vld [vmem:[%s220 + $0x10] sm:$0xff]
      %v295 = vld [vmem:[%s220 + $0x18] sm:$0xff]
      %300 = vrot.lane.b32.xlu0 %v292, 1
      %v301 = vpop.permute.xlu0 %300
      %302 = vrot.lane.b32.xlu0 %v293, 1
      %v303 = vpop.permute.xlu0 %302
      %304 = vrot.lane.b32.xlu0 %v294, 1
      %v305 = vpop.permute.xlu0 %304
      %306 = vrot.lane.b32.xlu0 %v295, 1
      %v307 = vpop.permute.xlu0 %306
      %vm312 = vcmask 1047560
      %313 = vst.msk [vmem:[#allocation2 + $0x40] sm:$0xff] %vm312, %v301
      %314 = vst.msk [vmem:[#allocation2 + $0x48] sm:$0xff] %vm312, %v303
      %315 = vst.msk [vmem:[#allocation2 + $0x50] sm:$0xff] %vm312, %v305
      %316 = vst.msk [vmem:[#allocation2 + $0x58] sm:$0xff] %vm312, %v307
      %vm317 = vcmask 1048568
      %318 = vst.msk [vmem:[#allocation2 + $0x60] sm:$0xff] %vm317, 0.0
      %319 = vst.msk [vmem:[#allocation2 + $0x68] sm:$0xff] %vm317, 0.0
      %320 = vst.msk [vmem:[#allocation2 + $0x70] sm:$0xff] %vm317, 0.0
      %321 = vst.msk [vmem:[#allocation2 + $0x78] sm:$0xff] %vm317, 0.0
      %v322 = vld [vmem:[%s220] sm:$0xff]
      %v323 = vld [vmem:[%s220 + $0x8] sm:$0xff]
      %v324 = vld [vmem:[%s220 + $0x10] sm:$0xff]
      %v325 = vld [vmem:[%s220 + $0x18] sm:$0xff]
      %330 = vrot.lane.b32.xlu0 %v322, 127
      %v331 = vpop.permute.xlu0 %330
      %332 = vrot.lane.b32.xlu0 %v323, 127
      %v333 = vpop.permute.xlu0 %332
      %334 = vrot.lane.b32.xlu0 %v324, 127
      %v335 = vpop.permute.xlu0 %334
      %336 = vrot.lane.b32.xlu0 %v325, 127
      %v337 = vpop.permute.xlu0 %336
      %vm342 = vcmask 1039360
      %343 = vst.msk [vmem:[#allocation2 + $0x60] sm:$0xff] %vm342, %v331
      %344 = vst.msk [vmem:[#allocation2 + $0x68] sm:$0xff] %vm342, %v333
      %345 = vst.msk [vmem:[#allocation2 + $0x70] sm:$0xff] %vm342, %v335
      %346 = vst.msk [vmem:[#allocation2 + $0x78] sm:$0xff] %vm342, %v337
      %vm347 = vcmask 1048552
      %348 = vst.msk [vmem:[#allocation2 + $0x80] sm:$0xff] %vm347, 0.0
      %349 = vst.msk [vmem:[#allocation2 + $0x88] sm:$0xff] %vm347, 0.0
      %350 = vst.msk [vmem:[#allocation2 + $0x90] sm:$0xff] %vm347, 0.0
      %351 = vst.msk [vmem:[#allocation2 + $0x98] sm:$0xff] %vm347, 0.0
      %v352 = vld [vmem:[%s220] sm:$0xff]
      %v353 = vld [vmem:[%s220 + $0x8] sm:$0xff]
      %v354 = vld [vmem:[%s220 + $0x10] sm:$0xff]
      %v355 = vld [vmem:[%s220 + $0x18] sm:$0xff]
      %360 = vrot.lane.b32.xlu0 %v352, 125
      %v361 = vpop.permute.xlu0 %360
      %362 = vrot.lane.b32.xlu0 %v353, 125
      %v363 = vpop.permute.xlu0 %362
      %364 = vrot.lane.b32.xlu0 %v354, 125
      %v365 = vpop.permute.xlu0 %364
      %366 = vrot.lane.b32.xlu0 %v355, 125
      %v367 = vpop.permute.xlu0 %366
      %vm372 = vcmask 1022976
      %373 = vst.msk [vmem:[#allocation2 + $0x80] sm:$0xff] %vm372, %v361
      %374 = vst.msk [vmem:[#allocation2 + $0x88] sm:$0xff] %vm372, %v363
      %375 = vst.msk [vmem:[#allocation2 + $0x90] sm:$0xff] %vm372, %v365
      %376 = vst.msk [vmem:[#allocation2 + $0x98] sm:$0xff] %vm372, %v367
      %vm377 = vcmask 1048536
      %378 = vst.msk [vmem:[#allocation2 + $0xa0] sm:$0xff] %vm377, 0.0
      %379 = vst.msk [vmem:[#allocation2 + $0xa8] sm:$0xff] %vm377, 0.0
      %380 = vst.msk [vmem:[#allocation2 + $0xb0] sm:$0xff] %vm377, 0.0
      %381 = vst.msk [vmem:[#allocation2 + $0xb8] sm:$0xff] %vm377, 0.0
      %v382 = vld [vmem:[%s220] sm:$0xff]
      %v383 = vld [vmem:[%s220 + $0x8] sm:$0xff]
      %v384 = vld [vmem:[%s220 + $0x10] sm:$0xff]
      %v385 = vld [vmem:[%s220 + $0x18] sm:$0xff]
      %390 = vrot.lane.b32.xlu0 %v382, 123
      %v391 = vpop.permute.xlu0 %390
      %392 = vrot.lane.b32.xlu0 %v383, 123
      %v393 = vpop.permute.xlu0 %392
      %394 = vrot.lane.b32.xlu0 %v384, 123
      %v395 = vpop.permute.xlu0 %394
      %396 = vrot.lane.b32.xlu0 %v385, 123
      %v397 = vpop.permute.xlu0 %396
      %vm402 = vcmask 1006592
      %403 = vst.msk [vmem:[#allocation2 + $0xa0] sm:$0xff] %vm402, %v391
      %404 = vst.msk [vmem:[#allocation2 + $0xa8] sm:$0xff] %vm402, %v393
      %405 = vst.msk [vmem:[#allocation2 + $0xb0] sm:$0xff] %vm402, %v395
      %406 = vst.msk [vmem:[#allocation2 + $0xb8] sm:$0xff] %vm402, %v397
      %v407 = vld [vmem:[%s1] sm:$0xff]
      %v408 = vld [vmem:[%s1 + $0x8] sm:$0xff]
      %v409 = vld [vmem:[%s1 + $0x10] sm:$0xff]
      %v410 = vld [vmem:[%s1 + $0x18] sm:$0xff]
      %v411 = vld [vmem:[#allocation2] sm:$0xff]
      %v412 = vld [vmem:[#allocation2 + $0x8] sm:$0xff]
      %v413 = vld [vmem:[#allocation2 + $0x10] sm:$0xff]
      %v414 = vld [vmem:[#allocation2 + $0x18] sm:$0xff]
      %v415 = vld [vmem:[#allocation2 + $0x20] sm:$0xff]
      %v416 = vld [vmem:[#allocation2 + $0x28] sm:$0xff]
      %v417 = vld [vmem:[#allocation2 + $0x30] sm:$0xff]
      %v418 = vld [vmem:[#allocation2 + $0x38] sm:$0xff]
      %v419 = vld [vmem:[#allocation2 + $0x40] sm:$0xff]
      %v420 = vld [vmem:[#allocation2 + $0x48] sm:$0xff]
      %v421 = vld [vmem:[#allocation2 + $0x50] sm:$0xff]
      %v422 = vld [vmem:[#allocation2 + $0x58] sm:$0xff]
      %v423 = vld [vmem:[#allocation2 + $0x60] sm:$0xff]
      %v424 = vld [vmem:[#allocation2 + $0x68] sm:$0xff]
      %v425 = vld [vmem:[#allocation2 + $0x70] sm:$0xff]
      %v426 = vld [vmem:[#allocation2 + $0x78] sm:$0xff]
      %v427 = vld [vmem:[#allocation2 + $0x80] sm:$0xff]
      %v428 = vld [vmem:[#allocation2 + $0x88] sm:$0xff]
      %v429 = vld [vmem:[#allocation2 + $0x90] sm:$0xff]
      %v430 = vld [vmem:[#allocation2 + $0x98] sm:$0xff]
      %v431 = vld [vmem:[#allocation2 + $0xa0] sm:$0xff]
      %v432 = vld [vmem:[#allocation2 + $0xa8] sm:$0xff]
      %v433 = vld [vmem:[#allocation2 + $0xb0] sm:$0xff]
      %v434 = vld [vmem:[#allocation2 + $0xb8] sm:$0xff]
      %v435 = vld [vmem:[%s2] sm:$0xff]
      %v436 = vld [vmem:[%s2 + $0x8] sm:$0xff]
      %438 = vset.pattern.permute.xlu0 0
      %439 = vperm.xlu0 %438, %v435
      %v440 = vpop.permute.xlu0 %439
      %443 = vset.pattern.permute.xlu0 0
      %444 = vperm.xlu0 %443, %v436
      %v445 = vpop.permute.xlu0 %444
      %vm447 = vcmask 523264
      %v449 = vsel %vm447, %v408, 0
      %v452 = vsel %vm447, %v410, 0
      %454 = vmatprep.subr.mxu0 0.0
      %455 = vmatpush1.msra.mxu0 %v411
      %456 = vmatprep.subr.mxu0 0.0
      %457 = vmatpush1.msra.mxu0 %v412
      %458 = vmatprep.subr.mxu0 0.0
      %459 = vmatpush1.msra.mxu0 %v413
      %460 = vmatprep.subr.mxu0 0.0
      %461 = vmatpush1.msra.mxu0 %v414
      %462 = vmatprep.subr.mxu0 0.0
      %463 = vmatpush1.msra.mxu0 %v415
      %464 = vmatprep.subr.mxu0 0.0
      %465 = vmatpush1.msra.mxu0 %v416
      %466 = vmatprep.subr.mxu0 0.0
      %467 = vmatpush1.msra.mxu0 %v417
      %468 = vmatprep.subr.mxu0 0.0
      %469 = vmatpush1.msra.mxu0 %v418
      %470 = vmatprep.subr.mxu0 0.0
      %471 = vmatpush1.msra.mxu0 %v419
      %472 = vmatprep.subr.mxu0 0.0
      %473 = vmatpush1.msra.mxu0 %v420
      %474 = vmatprep.subr.mxu0 0.0
      %475 = vmatpush1.msra.mxu0 %v421
      %476 = vmatprep.subr.mxu0 0.0
      %477 = vmatpush1.msra.mxu0 %v422
      %478 = vmatprep.subr.mxu0 0.0
      %479 = vmatpush1.msra.mxu0 %v423
      %480 = vmatprep.subr.mxu0 0.0
      %481 = vmatpush1.msra.mxu0 %v424
      %482 = vmatprep.subr.mxu0 0.0
      %483 = vmatpush1.msra.mxu0 %v425
      %484 = vmatprep.subr.mxu0 0.0
      %485 = vmatpush1.msra.mxu0 %v426
      %486 = vmatprep.subr.mxu0 0.0
      %487 = vmatpush1.msra.mxu0 %v427
      %488 = vmatprep.subr.mxu0 0.0
      %489 = vmatpush1.msra.mxu0 %v428
      %490 = vmatprep.subr.mxu0 0.0
      %491 = vmatpush1.msra.mxu0 %v429
      %492 = vmatprep.subr.mxu0 0.0
      %493 = vmatpush1.msra.mxu0 %v430
      %494 = vmatprep.subr.mxu0 0.0
      %495 = vmatpush1.msra.mxu0 %v431
      %496 = vmatprep.subr.mxu0 0.0
      %497 = vmatpush1.msra.mxu0 %v432
      %498 = vmatprep.subr.mxu0 0.0
      %499 = vmatpush1.msra.mxu0 %v433
      %500 = vmatprep.subr.mxu0 0.0
      %501 = vmatpush1.msra.mxu0 %v434
      %502 = vmatprep.subr.mxu0 0.0
      %503 = vmatpush1.msra.mxu0 0.0
      %504 = vmatprep.subr.mxu0 0.0
      %505 = vmatpush1.msra.mxu0 0.0
      %506 = vmatprep.subr.mxu0 0.0
      %507 = vmatpush1.msra.mxu0 0.0
      %508 = vmatprep.subr.mxu0 0.0
      %509 = vmatpush1.msra.mxu0 0.0
      %510 = vmatprep.subr.mxu0 0.0
      %511 = vmatpush1.msra.mxu0 0.0
      %512 = vmatprep.subr.mxu0 0.0
      %513 = vmatpush1.msra.mxu0 0.0
      %514 = vmatprep.subr.mxu0 0.0
      %515 = vmatpush1.msra.mxu0 0.0
      %516 = vmatprep.subr.mxu0 0.0
      %517 = vmatpush1.msra.mxu0 0.0
      %518 = vmatprep.mubr.f32.mxu0 %v449
      %519 = vmatmul.mubr.f32.gmra.mrb[0].mxu0 %v407
      %v520 = vpop.f32.mrb[0].mxu0
      %v521 = vadd.f32 %v440, %v520
      %v522 = vpop.f32.mrb[0].mxu0
      %523 = vmatprep.mubr.f32.mxu0 %v452
      %524 = vmatmul.mubr.f32.gmra.mrb[0].mxu0 %v409
      %v525 = vpop.f32.mrb[0].mxu0
      %v526 = vadd.f32 %v445, %v525
      %v527 = vpop.f32.mrb[0].mxu0
      %528 = vdwg.mxu0
      %v529 = vsub.f32 0.0, %v521
      %v530 = vsub.f32 0.0, %v526
      %v531 = vmul.f32 %v529, 1.442695
      %v532 = vpow.pop %v531
      %v533 = vmul.f32 %v530, 1.442695
      %v534 = vpow.pop %v533
      %v535 = vadd.f32 %v532, 1.0
      %v536 = vadd.f32 %v534, 1.0
      %v537 = vrcp.pop %v535
      %v538 = vrcp.pop %v536
      %v539 = vmul.f32 %v521, %v537
      %v540 = vmul.f32 %v526, %v538
      %541 = vst [vmem:[#allocation3] sm:$0xff] %v539
      %542 = vst [vmem:[#allocation3 + $0x8] sm:$0xff] %v540
      %543 = vst.msk [vmem:[#allocation4] sm:$0xff] %vm227, 0.0
      %544 = vst.msk [vmem:[#allocation4 + $0x8] sm:$0xff] %vm227, 0.0
      %v545 = vld [vmem:[#allocation3] sm:$0xff]
      %v546 = vld [vmem:[#allocation3 + $0x8] sm:$0xff]
      %549 = vrot.lane.b32.xlu0 %v545, 5
      %v550 = vpop.permute.xlu0 %549
      %551 = vrot.lane.b32.xlu0 %v546, 5
      %v552 = vpop.permute.xlu0 %551
      %555 = vst.msk [vmem:[#allocation4] sm:$0xff] %vm252, %v550
      %556 = vst.msk [vmem:[#allocation4 + $0x8] sm:$0xff] %vm252, %v552
      %557 = vst.msk [vmem:[#allocation4 + $0x10] sm:$0xff] %vm257, 0.0
      %558 = vst.msk [vmem:[#allocation4 + $0x18] sm:$0xff] %vm257, 0.0
      %v559 = vld [vmem:[#allocation3] sm:$0xff]
      %v560 = vld [vmem:[#allocation3 + $0x8] sm:$0xff]
      %563 = vrot.lane.b32.xlu0 %v559, 3
      %v564 = vpop.permute.xlu0 %563
      %565 = vrot.lane.b32.xlu0 %v560, 3
      %v566 = vpop.permute.xlu0 %565
      %569 = vst.msk [vmem:[#allocation4 + $0x10] sm:$0xff] %vm282, %v564
      %570 = vst.msk [vmem:[#allocation4 + $0x18] sm:$0xff] %vm282, %v566
      %571 = vst.msk [vmem:[#allocation4 + $0x20] sm:$0xff] %vm287, 0.0
      %572 = vst.msk [vmem:[#allocation4 + $0x28] sm:$0xff] %vm287, 0.0
      %v573 = vld [vmem:[#allocation3] sm:$0xff]
      %v574 = vld [vmem:[#allocation3 + $0x8] sm:$0xff]
      %577 = vrot.lane.b32.xlu0 %v573, 1
      %v578 = vpop.permute.xlu0 %577
      %579 = vrot.lane.b32.xlu0 %v574, 1
      %v580 = vpop.permute.xlu0 %579
      %583 = vst.msk [vmem:[#allocation4 + $0x20] sm:$0xff] %vm312, %v578
      %584 = vst.msk [vmem:[#allocation4 + $0x28] sm:$0xff] %vm312, %v580
      %585 = vst.msk [vmem:[#allocation4 + $0x30] sm:$0xff] %vm317, 0.0
      %586 = vst.msk [vmem:[#allocation4 + $0x38] sm:$0xff] %vm317, 0.0
      %v587 = vld [vmem:[#allocation3] sm:$0xff]
      %v588 = vld [vmem:[#allocation3 + $0x8] sm:$0xff]
      %591 = vrot.lane.b32.xlu0 %v587, 127
      %v592 = vpop.permute.xlu0 %591
      %593 = vrot.lane.b32.xlu0 %v588, 127
      %v594 = vpop.permute.xlu0 %593
      %597 = vst.msk [vmem:[#allocation4 + $0x30] sm:$0xff] %vm342, %v592
      %598 = vst.msk [vmem:[#allocation4 + $0x38] sm:$0xff] %vm342, %v594
      %599 = vst.msk [vmem:[#allocation4 + $0x40] sm:$0xff] %vm347, 0.0
      %600 = vst.msk [vmem:[#allocation4 + $0x48] sm:$0xff] %vm347, 0.0
      %v601 = vld [vmem:[#allocation3] sm:$0xff]
      %v602 = vld [vmem:[#allocation3 + $0x8] sm:$0xff]
      %605 = vrot.lane.b32.xlu0 %v601, 125
      %v606 = vpop.permute.xlu0 %605
      %607 = vrot.lane.b32.xlu0 %v602, 125
      %v608 = vpop.permute.xlu0 %607
      %611 = vst.msk [vmem:[#allocation4 + $0x40] sm:$0xff] %vm372, %v606
      %612 = vst.msk [vmem:[#allocation4 + $0x48] sm:$0xff] %vm372, %v608
      %613 = vst.msk [vmem:[#allocation4 + $0x50] sm:$0xff] %vm377, 0.0
      %614 = vst.msk [vmem:[#allocation4 + $0x58] sm:$0xff] %vm377, 0.0
      %v615 = vld [vmem:[#allocation3] sm:$0xff]
      %v616 = vld [vmem:[#allocation3 + $0x8] sm:$0xff]
      %619 = vrot.lane.b32.xlu0 %v615, 123
      %v620 = vpop.permute.xlu0 %619
      %621 = vrot.lane.b32.xlu0 %v616, 123
      %v622 = vpop.permute.xlu0 %621
      %625 = vst.msk [vmem:[#allocation4 + $0x50] sm:$0xff] %vm402, %v620
      %626 = vst.msk [vmem:[#allocation4 + $0x58] sm:$0xff] %vm402, %v622
      %v627 = vld [vmem:[%s3] sm:$0xff]
      %v628 = vld [vmem:[%s3 + $0x8] sm:$0xff]
      %v629 = vld [vmem:[#allocation4] sm:$0xff]
      %v630 = vld [vmem:[#allocation4 + $0x8] sm:$0xff]
      %v631 = vld [vmem:[#allocation4 + $0x10] sm:$0xff]
      %v632 = vld [vmem:[#allocation4 + $0x18] sm:$0xff]
      %v633 = vld [vmem:[#allocation4 + $0x20] sm:$0xff]
      %v634 = vld [vmem:[#allocation4 + $0x28] sm:$0xff]
      %v635 = vld [vmem:[#allocation4 + $0x30] sm:$0xff]
      %v636 = vld [vmem:[#allocation4 + $0x38] sm:$0xff]
      %v637 = vld [vmem:[#allocation4 + $0x40] sm:$0xff]
      %v638 = vld [vmem:[#allocation4 + $0x48] sm:$0xff]
      %v639 = vld [vmem:[#allocation4 + $0x50] sm:$0xff]
      %v640 = vld [vmem:[#allocation4 + $0x58] sm:$0xff]
      %v641 = vld [vmem:[%s4] sm:$0xff]
      %v642 = vld [vmem:[%s4 + $0x8] sm:$0xff]
      %644 = vset.pattern.permute.xlu0 0
      %645 = vperm.xlu0 %644, %v641
      %v646 = vpop.permute.xlu0 %645
      %649 = vset.pattern.permute.xlu0 0
      %650 = vperm.xlu0 %649, %v642
      %v651 = vpop.permute.xlu0 %650
      %vm653 = vcmask 785408
      %v655 = vsel %vm653, %v627, 0
      %v658 = vsel %vm653, %v628, 0
      %660 = vmatprep.subr.mxu0 0.0
      %661 = vmatpush1.msra.mxu0 %v629
      %662 = vmatprep.subr.mxu0 0.0
      %663 = vmatpush1.msra.mxu0 %v630
      %664 = vmatprep.subr.mxu0 0.0
      %665 = vmatpush1.msra.mxu0 %v631
      %666 = vmatprep.subr.mxu0 0.0
      %667 = vmatpush1.msra.mxu0 %v632
      %668 = vmatprep.subr.mxu0 0.0
      %669 = vmatpush1.msra.mxu0 %v633
      %670 = vmatprep.subr.mxu0 0.0
      %671 = vmatpush1.msra.mxu0 %v634
      %672 = vmatprep.subr.mxu0 0.0
      %673 = vmatpush1.msra.mxu0 %v635
      %674 = vmatprep.subr.mxu0 0.0
      %675 = vmatpush1.msra.mxu0 %v636
      %676 = vmatprep.subr.mxu0 0.0
      %677 = vmatpush1.msra.mxu0 %v637
      %678 = vmatprep.subr.mxu0 0.0
      %679 = vmatpush1.msra.mxu0 %v638
      %680 = vmatprep.subr.mxu0 0.0
      %681 = vmatpush1.msra.mxu0 %v639
      %682 = vmatprep.subr.mxu0 0.0
      %683 = vmatpush1.msra.mxu0 %v640
      %684 = vmatprep.subr.mxu0 0.0
      %685 = vmatpush1.msra.mxu0 0.0
      %686 = vmatprep.subr.mxu0 0.0
      %687 = vmatpush1.msra.mxu0 0.0
      %688 = vmatprep.subr.mxu0 0.0
      %689 = vmatpush1.msra.mxu0 0.0
      %690 = vmatprep.subr.mxu0 0.0
      %691 = vmatpush1.msra.mxu0 0.0
      %692 = vmatprep.subr.mxu0 0.0
      %693 = vmatpush1.msra.mxu0 0.0
      %694 = vmatprep.subr.mxu0 0.0
      %695 = vmatpush1.msra.mxu0 0.0
      %696 = vmatprep.subr.mxu0 0.0
      %697 = vmatpush1.msra.mxu0 0.0
      %698 = vmatprep.subr.mxu0 0.0
      %699 = vmatpush1.msra.mxu0 0.0
      %700 = vmatprep.subr.mxu0 0.0
      %701 = vmatpush1.msra.mxu0 0.0
      %702 = vmatprep.subr.mxu0 0.0
      %703 = vmatpush1.msra.mxu0 0.0
      %704 = vmatprep.subr.mxu0 0.0
      %705 = vmatpush1.msra.mxu0 0.0
      %706 = vmatprep.subr.mxu0 0.0
      %707 = vmatpush1.msra.mxu0 0.0
      %708 = vmatprep.subr.mxu0 0.0
      %709 = vmatpush1.msra.mxu0 0.0
      %710 = vmatprep.subr.mxu0 0.0
      %711 = vmatpush1.msra.mxu0 0.0
      %712 = vmatprep.subr.mxu0 0.0
      %713 = vmatpush1.msra.mxu0 0.0
      %714 = vmatprep.subr.mxu0 0.0
      %715 = vmatpush1.msra.mxu0 0.0
      %716 = vmatprep.subr.mxu0 0.0
      %717 = vmatpush1.msra.mxu0 0.0
      %718 = vmatprep.subr.mxu0 0.0
      %719 = vmatpush1.msra.mxu0 0.0
      %720 = vmatprep.subr.mxu0 0.0
      %721 = vmatpush1.msra.mxu0 0.0
      %722 = vmatprep.subr.mxu0 0.0
      %723 = vmatpush1.msra.mxu0 0.0
      %724 = vmatprep.mubr.f32.mxu0 0.0
      %725 = vmatmul.mubr.f32.gmra.mrb[0].mxu0 %v655
      %v726 = vpop.f32.mrb[0].mxu0
      %v727 = vadd.f32 %v646, %v726
      %v728 = vpop.f32.mrb[0].mxu0
      %729 = vmatprep.mubr.f32.mxu0 0.0
      %730 = vmatmul.mubr.f32.gmra.mrb[0].mxu0 %v658
      %v731 = vpop.f32.mrb[0].mxu0
      %v732 = vadd.f32 %v651, %v731
      %v733 = vpop.f32.mrb[0].mxu0
      %734 = vdwg.mxu0
      %v735 = vsub.f32 0.0, %v727
      %v736 = vsub.f32 0.0, %v732
      %v737 = vmul.f32 %v735, 1.442695
      %v738 = vpow.pop %v737
      %v739 = vmul.f32 %v736, 1.442695
      %v740 = vpow.pop %v739
      %v741 = vadd.f32 %v738, 1.0
      %v742 = vadd.f32 %v740, 1.0
      %v743 = vrcp.pop %v741
      %v744 = vrcp.pop %v742
      %v745 = vmul.f32 %v727, %v743
      %v746 = vmul.f32 %v732, %v744
      %v747 = vld [vmem:[#allocation3] sm:$0xff]
      %v748 = vld [vmem:[#allocation3 + $0x8] sm:$0xff]
      %v749 = vadd.f32 %v747, %v745
      %v750 = vadd.f32 %v748, %v746
      %751 = vst [vmem:[%s226] sm:$0xff] %v749
      %752 = vst [vmem:[%s226 + $0x8] sm:$0xff] %v750
      %p753 = scmp.lt.s32.totalorder %s16, 1
      %s754 = scalar_select %p753, %s16, 1
      %s755 = smul.addr %s754, 8
      %s756 = sadd.s32 4, %s755
      %s757 = smul.addr %s756, 8
      %s758 = scalar_lea.vmem %s5, %s757
      // Predicated region
      $region41: #{seq_encoder2_forward.5} parent=39 // pred_check
        %p759 = pneg %p144
      $region42: #{seq_encoder2_forward.5} parent=39 // pred_check_branch
        %761 = sbr.rel (%p759) target = $region44
      $region43: #{seq_encoder2_forward.5} parent=39 // pred_region
        _
      $region44: #{seq_encoder2_forward.5} parent=39 // pred_fallthru
        _
    $region40: #{seq_encoder2_forward.5} parent=5 // pred_fallthru
      _
    %p762 = scmp.le.s32.totalorder 2, %s11
    // Predicated region
    $region45: #{seq_encoder2_forward.5} parent=5 // pred_check
      %p763 = pneg %p762
    $region46: #{seq_encoder2_forward.5} parent=5 // pred_check_branch
      %765 = sbr.rel (%p763) target = $region48
    $region47: #{seq_encoder2_forward.5} parent=5 // pred_region
      %s766 = ssub.s32 %s11, 2
      // Predicated region
      $region49: #{seq_encoder2_forward.5} parent=47 // pred_check
        %p767 = pneg %p150
      $region50: #{seq_encoder2_forward.5} parent=47 // pred_check_branch
        %769 = sbr.rel (%p767) target = $region52
      $region51: #{seq_encoder2_forward.5} parent=47 // pred_region
        %p770 = scmp.lt.s32.totalorder %s17, 1
        %s771 = scalar_select %p770, %s17, 1
        %s772 = smul.addr %s771, 8
        %s773 = sadd.s32 4, %s772
        %s774 = smul.addr %s773, 8
        %s775 = scalar_lea.vmem %s5, %s774
      $region52: #{seq_encoder2_forward.5} parent=47 // pred_fallthru
        _
    $region48: #{seq_encoder2_forward.5} parent=5 // pred_fallthru
      _
  $region6: #{seq_encoder2_forward.5} parent=0 // loop_footer
    %s15 = sadd.s32 1, %s11
  $region7: #{seq_encoder2_forward.5} parent=0 // loop_footer_branch
    %10 = sbr.rel target = $region3
  $region8: #{seq_encoder2_forward.5} parent=0 // loop_exit
    _

// kernel: seq_encoder2_forward.6
$region0: #{seq_encoder2_forward.6}
  #allocation0 [shape = 'u32[]', space=smem, size = 0x4, offset = 0x4, fixed_abs, tag = 'smem constant byte address 0x4 - core index']
  #allocation1 [shape = 'u32[144,128]{1,0:T(1,128)}', space=vmem, size = 0x12000, scoped, tag = 'internal scratch']
  #allocation2 [shape = 'f32[240,128]{1,0:T(8,128)}', space=vmem, size = 0x1e000, scoped, tag = 'scratch operand']
  #allocation3 [shape = 'f32[8,128]{1,0:T(8,128)}', space=vmem, size = 0x1000, scoped, tag = 'scratch operand']
  #allocation4 [shape = 'f32[120,128]{1,0:T(8,128)}', space=vmem, size = 0xf000, scoped, tag = 'scratch operand']
  %s0 = inlined_call_operand.vmem [shape: f32[2,64,128], index: 0, kind: input, shape index: {}, may-alias: {0,5}]
  %s1 = inlined_call_operand.vmem [shape: f32[8,240], index: 1, kind: input, shape index: {}]
  %s2 = inlined_call_operand.vmem [shape: f32[8,1], index: 2, kind: input, shape index: {}]
  %s3 = inlined_call_operand.vmem [shape: f32[8,120], index: 3, kind: input, shape index: {}]
  %s4 = inlined_call_operand.vmem [shape: f32[8,1], index: 4, kind: input, shape index: {}]
  %s5 = inlined_call_operand.vmem [shape: f32[2,64,128], index: 5, kind: output, shape index: {}, may-alias: {0,5}]
  %s6 = sld [smem:[#allocation0]]
  $region53: #{seq_encoder2_forward.6} parent=0
    _
  %s8 = ssub.s32 1, %s6
  %s9 = scalar_select 0, %s8, %s6
  loop: start=0, step=1, limit=4
  $region2: #{seq_encoder2_forward.6} parent=0 // loop_pre_header
    _
  $region3: #{seq_encoder2_forward.6} parent=0 // loop_header
    %s11 = sphi 0, %s15
    %p12 = scmp.ge.s32.totalorder %s11, 4
    %s21 = sphi 0, %s23
    %s24 = sphi 0, %s21
    %s25 = sphi 0, %s24
    %s41 = sphi 0, %s25
    %s45 = sphi 0, %s45
    %s47 = sphi 0, %s45
    %s48 = sphi 0, %s47
    %s62 = sphi 0, %s48
    %s66 = sphi 0, %s66
    %s68 = sphi 0, %s66
    %s69 = sphi 0, %s68
    %s83 = sphi 0, %s69
    %s87 = sphi 0, %s87
    %s89 = sphi 0, %s87
    %s90 = sphi 0, %s89
    %s104 = sphi 0, %s90
    %s108 = sphi 0, %s108
    %s110 = sphi 0, %s108
    %s111 = sphi 0, %s110
    %s125 = sphi 0, %s111
    %s131 = sphi 0, %s133
    %s134 = sphi 0, %s131
    %s135 = sphi 0, %s134
    %s151 = sphi 0, %s135
  $region4: #{seq_encoder2_forward.6} parent=0 // loop_header_branch
    %14 = sbr.rel (%p12) target = $region8
  $region5: #{seq_encoder2_forward.6} parent=0 // loop_body
    %s16 = ssub.s32 %s11, 1
    %s17 = ssub.s32 %s11, 2
    %s18 = sadd.s32 %s11, 1
    %s19 = ssub.s32 %s11, %s18
    %p20 = scmp.eq.s32.totalorder %s19, 0
    %s22 = sadd.s32 %s21, 1
    %s23 = scalar_select %p20, %s21, %s22
    %p26 = pneg %p20
    %p27 = scmp.eq.s32.totalorder %s11, 1
    %p28 = por %p26, %p27
    %p29 = scmp.ne.s32.totalorder %s21, %s24
    %p30 = scmp.eq.s32.totalorder %s11, 0
    %p31 = por %p29, %p30
    %p32 = scmp.ne.s32.totalorder %s21, %s24
    %p33 = scmp.eq.s32.totalorder %s16, 1
    %p34 = por %p32, %p33
    %p35 = scmp.ne.s32.totalorder %s24, %s25
    %p36 = scmp.eq.s32.totalorder %s16, 0
    %p37 = por %p35, %p36
    %p38 = scmp.ne.s32.totalorder %s24, %s25
    %p39 = scmp.eq.s32.totalorder %s17, 1
    %p40 = por %p38, %p39
    %p42 = scmp.ne.s32.totalorder %s25, %s41
    %p43 = scmp.eq.s32.totalorder %s17, 0
    %p44 = por %p42, %p43
    %s46 = sadd.s32 %s45, 1
    %p49 = scmp.eq.s32.totalorder %s11, 1
    %p50 = scmp.ne.s32.totalorder %s45, %s47
    %p51 = scmp.eq.s32.totalorder %s11, 0
    %p52 = por %p50, %p51
    %p53 = scmp.ne.s32.totalorder %s45, %s47
    %p54 = scmp.eq.s32.totalorder %s16, 1
    %p55 = por %p53, %p54
    %p56 = scmp.ne.s32.totalorder %s47, %s48
    %p57 = scmp.eq.s32.totalorder %s16, 0
    %p58 = por %p56, %p57
    %p59 = scmp.ne.s32.totalorder %s47, %s48
    %p60 = scmp.eq.s32.totalorder %s17, 1
    %p61 = por %p59, %p60
    %p63 = scmp.ne.s32.totalorder %s48, %s62
    %p64 = scmp.eq.s32.totalorder %s17, 0
    %p65 = por %p63, %p64
    %s67 = sadd.s32 %s66, 1
    %p70 = scmp.eq.s32.totalorder %s11, 1
    %p71 = scmp.ne.s32.totalorder %s66, %s68
    %p72 = scmp.eq.s32.totalorder %s11, 0
    %p73 = por %p71, %p72
    %p74 = scmp.ne.s32.totalorder %s66, %s68
    %p75 = scmp.eq.s32.totalorder %s16, 1
    %p76 = por %p74, %p75
    %p77 = scmp.ne.s32.totalorder %s68, %s69
    %p78 = scmp.eq.s32.totalorder %s16, 0
    %p79 = por %p77, %p78
    %p80 = scmp.ne.s32.totalorder %s68, %s69
    %p81 = scmp.eq.s32.totalorder %s17, 1
    %p82 = por %p80, %p81
    %p84 = scmp.ne.s32.totalorder %s69, %s83
    %p85 = scmp.eq.s32.totalorder %s17, 0
    %p86 = por %p84, %p85
    %s88 = sadd.s32 %s87, 1
    %p91 = scmp.eq.s32.totalorder %s11, 1
    %p92 = scmp.ne.s32.totalorder %s87, %s89
    %p93 = scmp.eq.s32.totalorder %s11, 0
    %p94 = por %p92, %p93
    %p95 = scmp.ne.s32.totalorder %s87, %s89
    %p96 = scmp.eq.s32.totalorder %s16, 1
    %p97 = por %p95, %p96
    %p98 = scmp.ne.s32.totalorder %s89, %s90
    %p99 = scmp.eq.s32.totalorder %s16, 0
    %p100 = por %p98, %p99
    %p101 = scmp.ne.s32.totalorder %s89, %s90
    %p102 = scmp.eq.s32.totalorder %s17, 1
    %p103 = por %p101, %p102
    %p105 = scmp.ne.s32.totalorder %s90, %s104
    %p106 = scmp.eq.s32.totalorder %s17, 0
    %p107 = por %p105, %p106
    %s109 = sadd.s32 %s108, 1
    %p112 = scmp.eq.s32.totalorder %s11, 1
    %p113 = scmp.ne.s32.totalorder %s108, %s110
    %p114 = scmp.eq.s32.totalorder %s11, 0
    %p115 = por %p113, %p114
    %p116 = scmp.ne.s32.totalorder %s108, %s110
    %p117 = scmp.eq.s32.totalorder %s16, 1
    %p118 = por %p116, %p117
    %p119 = scmp.ne.s32.totalorder %s110, %s111
    %p120 = scmp.eq.s32.totalorder %s16, 0
    %p121 = por %p119, %p120
    %p122 = scmp.ne.s32.totalorder %s110, %s111
    %p123 = scmp.eq.s32.totalorder %s17, 1
    %p124 = por %p122, %p123
    %p126 = scmp.ne.s32.totalorder %s111, %s125
    %p127 = scmp.eq.s32.totalorder %s17, 0
    %p128 = por %p126, %p127
    %s129 = ssub.s32 %s11, %s18
    %p130 = scmp.eq.s32.totalorder %s129, 0
    %s132 = sadd.s32 %s131, 1
    %s133 = scalar_select %p130, %s131, %s132
    %p136 = pneg %p130
    %p137 = scmp.eq.s32.totalorder %s11, 1
    %p138 = por %p136, %p137
    %p139 = scmp.ne.s32.totalorder %s131, %s134
    %p140 = scmp.eq.s32.totalorder %s11, 0
    %p141 = por %p139, %p140
    %p142 = scmp.ne.s32.totalorder %s131, %s134
    %p143 = scmp.eq.s32.totalorder %s16, 1
    %p144 = por %p142, %p143
    %p145 = scmp.ne.s32.totalorder %s134, %s135
    %p146 = scmp.eq.s32.totalorder %s16, 0
    %p147 = por %p145, %p146
    %p148 = scmp.ne.s32.totalorder %s134, %s135
    %p149 = scmp.eq.s32.totalorder %s17, 1
    %p150 = por %p148, %p149
    %p152 = scmp.ne.s32.totalorder %s135, %s151
    %p153 = scmp.eq.s32.totalorder %s17, 0
    %p154 = por %p152, %p153
    %p155 = scmp.le.s32.totalorder 1, %s11
    %p156 = scmp.lt.s32.totalorder %s11, 3
    %p157 = pnand %p155, %p156
    %p158 = pneg %p157
    // Predicated region
    $region9: #{seq_encoder2_forward.6} parent=5 // pred_check
      _
    $region10: #{seq_encoder2_forward.6} parent=5 // pred_check_branch
      %160 = sbr.rel (%p157) target = $region12
    $region11: #{seq_encoder2_forward.6} parent=5 // pred_region
      %s161 = ssub.s32 %s11, 1
      // Predicated region
      $region13: #{seq_encoder2_forward.6} parent=11 // pred_check
        %p162 = pneg %p58
      $region14: #{seq_encoder2_forward.6} parent=11 // pred_check_branch
        %164 = sbr.rel (%p162) target = $region16
      $region15: #{seq_encoder2_forward.6} parent=11 // pred_region
        _
      $region16: #{seq_encoder2_forward.6} parent=11 // pred_fallthru
        _
      // Predicated region
      $region17: #{seq_encoder2_forward.6} parent=11 // pred_check
        %p165 = pneg %p79
      $region18: #{seq_encoder2_forward.6} parent=11 // pred_check_branch
        %167 = sbr.rel (%p165) target = $region20
      $region19: #{seq_encoder2_forward.6} parent=11 // pred_region
        _
      $region20: #{seq_encoder2_forward.6} parent=11 // pred_fallthru
        _
      // Predicated region
      $region21: #{seq_encoder2_forward.6} parent=11 // pred_check
        %p168 = pneg %p100
      $region22: #{seq_encoder2_forward.6} parent=11 // pred_check_branch
        %170 = sbr.rel (%p168) target = $region24
      $region23: #{seq_encoder2_forward.6} parent=11 // pred_region
        _
      $region24: #{seq_encoder2_forward.6} parent=11 // pred_fallthru
        _
      // Predicated region
      $region25: #{seq_encoder2_forward.6} parent=11 // pred_check
        %p171 = pneg %p121
      $region26: #{seq_encoder2_forward.6} parent=11 // pred_check_branch
        %173 = sbr.rel (%p171) target = $region28
      $region27: #{seq_encoder2_forward.6} parent=11 // pred_region
        _
      $region28: #{seq_encoder2_forward.6} parent=11 // pred_fallthru
        _
    $region12: #{seq_encoder2_forward.6} parent=5 // pred_fallthru
      _
    %p174 = scmp.lt.s32.totalorder %s11, 2
    // Predicated region
    $region29: #{seq_encoder2_forward.6} parent=5 // pred_check
      %p175 = pneg %p174
    $region30: #{seq_encoder2_forward.6} parent=5 // pred_check_branch
      %177 = sbr.rel (%p175) target = $region32
    $region31: #{seq_encoder2_forward.6} parent=5 // pred_region
      // Predicated region
      $region33: #{seq_encoder2_forward.6} parent=31 // pred_check
        %p178 = pneg %p31
      $region34: #{seq_encoder2_forward.6} parent=31 // pred_check_branch
        %180 = sbr.rel (%p178) target = $region36
      $region35: #{seq_encoder2_forward.6} parent=31 // pred_region
        %p181 = scmp.lt.s32.totalorder %s11, 1
        %s182 = scalar_select %p181, %s11, 1
        %s183 = smul.addr %s182, 8
        %s184 = sadd.s32 4, %s183
        %s185 = smul.addr %s184, 8
        %s186 = scalar_lea.vmem %s0, %s185
      $region36: #{seq_encoder2_forward.6} parent=31 // pred_fallthru
        _
    $region32: #{seq_encoder2_forward.6} parent=5 // pred_fallthru
      _
    %p187 = scmp.le.s32.totalorder 1, %s11
    %p188 = scmp.lt.s32.totalorder %s11, 3
    %p189 = pnand %p187, %p188
    %p190 = pneg %p189
    // Predicated region
    $region37: #{seq_encoder2_forward.6} parent=5 // pred_check
      _
    $region38: #{seq_encoder2_forward.6} parent=5 // pred_check_branch
      %192 = sbr.rel (%p189) target = $region40
    $region39: #{seq_encoder2_forward.6} parent=5 // pred_region
      %s193 = ssub.s32 %s11, 1
      %p194 = scmp.lt.s32.totalorder %s16, 1
      %s195 = scalar_select %p194, %s16, 1
      %s196 = smul.addr %s195, 8
      %s197 = sadd.s32 4, %s196
      %s198 = smul.addr %s197, 8
      %s199 = scalar_lea.vmem %s0, %s198
      %p200 = pneg %p37
      %p201 = pneg %p34
      %p202 = pneg %p58
      %p203 = pneg %p55
      %p204 = pneg %p79
      %p205 = pneg %p76
      %p206 = pneg %p100
      %p207 = pneg %p97
      %p208 = pneg %p121
      %p209 = pneg %p118
      %p210 = pneg %p147
      %p211 = pneg %p144
      %p212 = scmp.lt.s32.totalorder %s16, 1
      %s213 = scalar_select %p212, %s16, 1
      %s214 = smul.addr %s213, 8
      %s215 = sadd.s32 6, %s214
      %s216 = smul.addr %s215, 8
      %s217 = scalar_lea.vmem %s5, %s216
      %p218 = scmp.lt.s32.totalorder %s16, 1
      %s219 = scalar_select %p218, %s16, 1
      %s220 = smul.addr %s219, 8
      %s221 = sadd.s32 4, %s220
      %s222 = smul.addr %s221, 8
      %s223 = scalar_lea.vmem %s0, %s222
      %p224 = scmp.lt.s32.totalorder %s16, 1
      %s225 = scalar_select %p224, %s16, 1
      %s226 = smul.addr %s225, 8
      %s227 = sadd.s32 6, %s226
      %s228 = smul.addr %s227, 8
      %s229 = scalar_lea.vmem %s5, %s228
      %vm230 = vcmask 56320
      %231 = vst.msk [vmem:[#allocation2] sm:$0xff] %vm230, 0.0
      %232 = vst.msk [vmem:[#allocation2 + $0x8] sm:$0xff] %vm230, 0.0
      %v233 = vld [vmem:[%s223] sm:$0xff]
      %v234 = vld [vmem:[%s223 + $0x8] sm:$0xff]
      %237 = vrot.lane.b32.xlu0 %v233, 7
      %v238 = vpop.permute.xlu0 %237
      %239 = vrot.lane.b32.xlu0 %v234, 7
      %v240 = vpop.permute.xlu0 %239
      %vm243 = vcmask 1047608
      %244 = vst.msk [vmem:[#allocation2] sm:$0xff] %vm243, %v238
      %245 = vst.msk [vmem:[#allocation2 + $0x8] sm:$0xff] %vm243, %v240
      %vm246 = vcmask 48128
      %247 = vst.msk [vmem:[#allocation2 + $0x10] sm:$0xff] %vm246, 0.0
      %248 = vst.msk [vmem:[#allocation2 + $0x18] sm:$0xff] %vm246, 0.0
      %v249 = vld [vmem:[%s223] sm:$0xff]
      %v250 = vld [vmem:[%s223 + $0x8] sm:$0xff]
      %253 = vrot.lane.b32.xlu0 %v249, 6
      %v254 = vpop.permute.xlu0 %253
      %255 = vrot.lane.b32.xlu0 %v250, 6
      %v256 = vpop.permute.xlu0 %255
      %vm259 = vcmask 1047600
      %260 = vst.msk [vmem:[#allocation2 + $0x10] sm:$0xff] %vm259, %v254
      %261 = vst.msk [vmem:[#allocation2 + $0x18] sm:$0xff] %vm259, %v256
      %vm262 = vcmask 39936
      %263 = vst.msk [vmem:[#allocation2 + $0x20] sm:$0xff] %vm262, 0.0
      %264 = vst.msk [vmem:[#allocation2 + $0x28] sm:$0xff] %vm262, 0.0
      %v265 = vld [vmem:[%s223] sm:$0xff]
      %v266 = vld [vmem:[%s223 + $0x8] sm:$0xff]
      %269 = vrot.lane.b32.xlu0 %v265, 5
      %v270 = vpop.permute.xlu0 %269
      %271 = vrot.lane.b32.xlu0 %v266, 5
      %v272 = vpop.permute.xlu0 %271
      %vm275 = vcmask 1047592
      %276 = vst.msk [vmem:[#allocation2 + $0x20] sm:$0xff] %vm275, %v270
      %277 = vst.msk [vmem:[#allocation2 + $0x28] sm:$0xff] %vm275, %v272
      %vm278 = vcmask 31744
      %279 = vst.msk [vmem:[#allocation2 + $0x30] sm:$0xff] %vm278, 0.0
      %280 = vst.msk [vmem:[#allocation2 + $0x38] sm:$0xff] %vm278, 0.0
      %v281 = vld [vmem:[%s223] sm:$0xff]
      %v282 = vld [vmem:[%s223 + $0x8] sm:$0xff]
      %285 = vrot.lane.b32.xlu0 %v281, 4
      %v286 = vpop.permute.xlu0 %285
      %287 = vrot.lane.b32.xlu0 %v282, 4
      %v288 = vpop.permute.xlu0 %287
      %vm291 = vcmask 1047584
      %292 = vst.msk [vmem:[#allocation2 + $0x30] sm:$0xff] %vm291, %v286
      %293 = vst.msk [vmem:[#allocation2 + $0x38] sm:$0xff] %vm291, %v288
      %vm294 = vcmask 23552
      %295 = vst.msk [vmem:[#allocation2 + $0x40] sm:$0xff] %vm294, 0.0
      %296 = vst.msk [vmem:[#allocation2 + $0x48] sm:$0xff] %vm294, 0.0
      %v297 = vld [vmem:[%s223] sm:$0xff]
      %v298 = vld [vmem:[%s223 + $0x8] sm:$0xff]
      %301 = vrot.lane.b32.xlu0 %v297, 3
      %v302 = vpop.permute.xlu0 %301
      %303 = vrot.lane.b32.xlu0 %v298, 3
      %v304 = vpop.permute.xlu0 %303
      %vm307 = vcmask 1047576
      %308 = vst.msk [vmem:[#allocation2 + $0x40] sm:$0xff] %vm307, %v302
      %309 = vst.msk [vmem:[#allocation2 + $0x48] sm:$0xff] %vm307, %v304
      %vm310 = vcmask 15360
      %311 = vst.msk [vmem:[#allocation2 + $0x50] sm:$0xff] %vm310, 0.0
      %312 = vst.msk [vmem:[#allocation2 + $0x58] sm:$0xff] %vm310, 0.0
      %v313 = vld [vmem:[%s223] sm:$0xff]
      %v314 = vld [vmem:[%s223 + $0x8] sm:$0xff]
      %317 = vrot.lane.b32.xlu0 %v313, 2
      %v318 = vpop.permute.xlu0 %317
      %319 = vrot.lane.b32.xlu0 %v314, 2
      %v320 = vpop.permute.xlu0 %319
      %vm323 = vcmask 1047568
      %324 = vst.msk [vmem:[#allocation2 + $0x50] sm:$0xff] %vm323, %v318
      %325 = vst.msk [vmem:[#allocation2 + $0x58] sm:$0xff] %vm323, %v320
      %vm326 = vcmask 7168
      %327 = vst.msk [vmem:[#allocation2 + $0x60] sm:$0xff] %vm326, 0.0
      %328 = vst.msk [vmem:[#allocation2 + $0x68] sm:$0xff] %vm326, 0.0
      %v329 = vld [vmem:[%s223] sm:$0xff]
      %v330 = vld [vmem:[%s223 + $0x8] sm:$0xff]
      %333 = vrot.lane.b32.xlu0 %v329, 1
      %v334 = vpop.permute.xlu0 %333
      %335 = vrot.lane.b32.xlu0 %v330, 1
      %v336 = vpop.permute.xlu0 %335
      %vm339 = vcmask 1047560
      %340 = vst.msk [vmem:[#allocation2 + $0x60] sm:$0xff] %vm339, %v334
      %341 = vst.msk [vmem:[#allocation2 + $0x68] sm:$0xff] %vm339, %v336
      %v342 = vld [vmem:[%s223] sm:$0xff]
      %v343 = vld [vmem:[%s223 + $0x8] sm:$0xff]
      %344 = vst [vmem:[#allocation2 + $0x70] sm:$0xff] %v342
      %345 = vst [vmem:[#allocation2 + $0x78] sm:$0xff] %v343
      %vm346 = vcmask 1048568
      %347 = vst.msk [vmem:[#allocation2 + $0x80] sm:$0xff] %vm346, 0.0
      %348 = vst.msk [vmem:[#allocation2 + $0x88] sm:$0xff] %vm346, 0.0
      %v349 = vld [vmem:[%s223] sm:$0xff]
      %v350 = vld [vmem:[%s223 + $0x8] sm:$0xff]
      %353 = vrot.lane.b32.xlu0 %v349, 127
      %v354 = vpop.permute.xlu0 %353
      %355 = vrot.lane.b32.xlu0 %v350, 127
      %v356 = vpop.permute.xlu0 %355
      %vm359 = vcmask 1039360
      %360 = vst.msk [vmem:[#allocation2 + $0x80] sm:$0xff] %vm359, %v354
      %361 = vst.msk [vmem:[#allocation2 + $0x88] sm:$0xff] %vm359, %v356
      %vm362 = vcmask 1048560
      %363 = vst.msk [vmem:[#allocation2 + $0x90] sm:$0xff] %vm362, 0.0
      %364 = vst.msk [vmem:[#allocation2 + $0x98] sm:$0xff] %vm362, 0.0
      %v365 = vld [vmem:[%s223] sm:$0xff]
      %v366 = vld [vmem:[%s223 + $0x8] sm:$0xff]
      %369 = vrot.lane.b32.xlu0 %v365, 126
      %v370 = vpop.permute.xlu0 %369
      %371 = vrot.lane.b32.xlu0 %v366, 126
      %v372 = vpop.permute.xlu0 %371
      %vm375 = vcmask 1031168
      %376 = vst.msk [vmem:[#allocation2 + $0x90] sm:$0xff] %vm375, %v370
      %377 = vst.msk [vmem:[#allocation2 + $0x98] sm:$0xff] %vm375, %v372
      %vm378 = vcmask 1048552
      %379 = vst.msk [vmem:[#allocation2 + $0xa0] sm:$0xff] %vm378, 0.0
      %380 = vst.msk [vmem:[#allocation2 + $0xa8] sm:$0xff] %vm378, 0.0
      %v381 = vld [vmem:[%s223] sm:$0xff]
      %v382 = vld [vmem:[%s223 + $0x8] sm:$0xff]
      %385 = vrot.lane.b32.xlu0 %v381, 125
      %v386 = vpop.permute.xlu0 %385
      %387 = vrot.lane.b32.xlu0 %v382, 125
      %v388 = vpop.permute.xlu0 %387
      %vm391 = vcmask 1022976
      %392 = vst.msk [vmem:[#allocation2 + $0xa0] sm:$0xff] %vm391, %v386
      %393 = vst.msk [vmem:[#allocation2 + $0xa8] sm:$0xff] %vm391, %v388
      %vm394 = vcmask 1048544
      %395 = vst.msk [vmem:[#allocation2 + $0xb0] sm:$0xff] %vm394, 0.0
      %396 = vst.msk [vmem:[#allocation2 + $0xb8] sm:$0xff] %vm394, 0.0
      %v397 = vld [vmem:[%s223] sm:$0xff]
      %v398 = vld [vmem:[%s223 + $0x8] sm:$0xff]
      %401 = vrot.lane.b32.xlu0 %v397, 124
      %v402 = vpop.permute.xlu0 %401
      %403 = vrot.lane.b32.xlu0 %v398, 124
      %v404 = vpop.permute.xlu0 %403
      %vm407 = vcmask 1014784
      %408 = vst.msk [vmem:[#allocation2 + $0xb0] sm:$0xff] %vm407, %v402
      %409 = vst.msk [vmem:[#allocation2 + $0xb8] sm:$0xff] %vm407, %v404
      %vm410 = vcmask 1048536
      %411 = vst.msk [vmem:[#allocation2 + $0xc0] sm:$0xff] %vm410, 0.0
      %412 = vst.msk [vmem:[#allocation2 + $0xc8] sm:$0xff] %vm410, 0.0
      %v413 = vld [vmem:[%s223] sm:$0xff]
      %v414 = vld [vmem:[%s223 + $0x8] sm:$0xff]
      %417 = vrot.lane.b32.xlu0 %v413, 123
      %v418 = vpop.permute.xlu0 %417
      %419 = vrot.lane.b32.xlu0 %v414, 123
      %v420 = vpop.permute.xlu0 %419
      %vm423 = vcmask 1006592
      %424 = vst.msk [vmem:[#allocation2 + $0xc0] sm:$0xff] %vm423, %v418
      %425 = vst.msk [vmem:[#allocation2 + $0xc8] sm:$0xff] %vm423, %v420
      %vm426 = vcmask 1048528
      %427 = vst.msk [vmem:[#allocation2 + $0xd0] sm:$0xff] %vm426, 0.0
      %428 = vst.msk [vmem:[#allocation2 + $0xd8] sm:$0xff] %vm426, 0.0
      %v429 = vld [vmem:[%s223] sm:$0xff]
      %v430 = vld [vmem:[%s223 + $0x8] sm:$0xff]
      %433 = vrot.lane.b32.xlu0 %v429, 122
      %v434 = vpop.permute.xlu0 %433
      %435 = vrot.lane.b32.xlu0 %v430, 122
      %v436 = vpop.permute.xlu0 %435
      %vm439 = vcmask 998400
      %440 = vst.msk [vmem:[#allocation2 + $0xd0] sm:$0xff] %vm439, %v434
      %441 = vst.msk [vmem:[#allocation2 + $0xd8] sm:$0xff] %vm439, %v436
      %vm442 = vcmask 1048520
      %443 = vst.msk [vmem:[#allocation2 + $0xe0] sm:$0xff] %vm442, 0.0
      %444 = vst.msk [vmem:[#allocation2 + $0xe8] sm:$0xff] %vm442, 0.0
      %v445 = vld [vmem:[%s223] sm:$0xff]
      %v446 = vld [vmem:[%s223 + $0x8] sm:$0xff]
      %449 = vrot.lane.b32.xlu0 %v445, 121
      %v450 = vpop.permute.xlu0 %449
      %451 = vrot.lane.b32.xlu0 %v446, 121
      %v452 = vpop.permute.xlu0 %451
      %vm455 = vcmask 990208
      %456 = vst.msk [vmem:[#allocation2 + $0xe0] sm:$0xff] %vm455, %v450
      %457 = vst.msk [vmem:[#allocation2 + $0xe8] sm:$0xff] %vm455, %v452
      %v458 = vld [vmem:[%s1] sm:$0xff]
      %v459 = vld [vmem:[%s1 + $0x8] sm:$0xff]
      %v460 = vld [vmem:[#allocation2] sm:$0xff]
      %v461 = vld [vmem:[#allocation2 + $0x8] sm:$0xff]
      %v462 = vld [vmem:[#allocation2 + $0x10] sm:$0xff]
      %v463 = vld [vmem:[#allocation2 + $0x18] sm:$0xff]
      %v464 = vld [vmem:[#allocation2 + $0x20] sm:$0xff]
      %v465 = vld [vmem:[#allocation2 + $0x28] sm:$0xff]
      %v466 = vld [vmem:[#allocation2 + $0x30] sm:$0xff]
      %v467 = vld [vmem:[#allocation2 + $0x38] sm:$0xff]
      %v468 = vld [vmem:[#allocation2 + $0x40] sm:$0xff]
      %v469 = vld [vmem:[#allocation2 + $0x48] sm:$0xff]
      %v470 = vld [vmem:[#allocation2 + $0x50] sm:$0xff]
      %v471 = vld [vmem:[#allocation2 + $0x58] sm:$0xff]
      %v472 = vld [vmem:[#allocation2 + $0x60] sm:$0xff]
      %v473 = vld [vmem:[#allocation2 + $0x68] sm:$0xff]
      %v474 = vld [vmem:[#allocation2 + $0x70] sm:$0xff]
      %v475 = vld [vmem:[#allocation2 + $0x78] sm:$0xff]
      %v476 = vld [vmem:[#allocation2 + $0x80] sm:$0xff]
      %v477 = vld [vmem:[#allocation2 + $0x88] sm:$0xff]
      %v478 = vld [vmem:[#allocation2 + $0x90] sm:$0xff]
      %v479 = vld [vmem:[#allocation2 + $0x98] sm:$0xff]
      %v480 = vld [vmem:[#allocation2 + $0xa0] sm:$0xff]
      %v481 = vld [vmem:[#allocation2 + $0xa8] sm:$0xff]
      %v482 = vld [vmem:[#allocation2 + $0xb0] sm:$0xff]
      %v483 = vld [vmem:[#allocation2 + $0xb8] sm:$0xff]
      %v484 = vld [vmem:[#allocation2 + $0xc0] sm:$0xff]
      %v485 = vld [vmem:[#allocation2 + $0xc8] sm:$0xff]
      %v486 = vld [vmem:[#allocation2 + $0xd0] sm:$0xff]
      %v487 = vld [vmem:[#allocation2 + $0xd8] sm:$0xff]
      %v488 = vld [vmem:[#allocation2 + $0xe0] sm:$0xff]
      %v489 = vld [vmem:[#allocation2 + $0xe8] sm:$0xff]
      %v490 = vld [vmem:[%s2] sm:$0xff]
      %492 = vset.pattern.permute.xlu0 0
      %493 = vperm.xlu0 %492, %v490
      %v494 = vpop.permute.xlu0 %493
      %vm496 = vcmask 916480
      %v498 = vsel %vm496, %v459, 0
      %500 = vmatprep.subr.mxu0 0.0
      %501 = vmatpush1.msra.mxu0 %v460
      %502 = vmatprep.subr.mxu0 0.0
      %503 = vmatpush1.msra.mxu0 %v461
      %504 = vmatprep.subr.mxu0 0.0
      %505 = vmatpush1.msra.mxu0 %v462
      %506 = vmatprep.subr.mxu0 0.0
      %507 = vmatpush1.msra.mxu0 %v463
      %508 = vmatprep.subr.mxu0 0.0
      %509 = vmatpush1.msra.mxu0 %v464
      %510 = vmatprep.subr.mxu0 0.0
      %511 = vmatpush1.msra.mxu0 %v465
      %512 = vmatprep.subr.mxu0 0.0
      %513 = vmatpush1.msra.mxu0 %v466
      %514 = vmatprep.subr.mxu0 0.0
      %515 = vmatpush1.msra.mxu0 %v467
      %516 = vmatprep.subr.mxu0 0.0
      %517 = vmatpush1.msra.mxu0 %v468
      %518 = vmatprep.subr.mxu0 0.0
      %519 = vmatpush1.msra.mxu0 %v469
      %520 = vmatprep.subr.mxu0 0.0
      %521 = vmatpush1.msra.mxu0 %v470
      %522 = vmatprep.subr.mxu0 0.0
      %523 = vmatpush1.msra.mxu0 %v471
      %524 = vmatprep.subr.mxu0 0.0
      %525 = vmatpush1.msra.mxu0 %v472
      %526 = vmatprep.subr.mxu0 0.0
      %527 = vmatpush1.msra.mxu0 %v473
      %528 = vmatprep.subr.mxu0 0.0
      %529 = vmatpush1.msra.mxu0 %v474
      %530 = vmatprep.subr.mxu0 0.0
      %531 = vmatpush1.msra.mxu0 %v475
      %532 = vmatprep.subr.mxu0 0.0
      %533 = vmatpush1.msra.mxu0 %v476
      %534 = vmatprep.subr.mxu0 0.0
      %535 = vmatpush1.msra.mxu0 %v477
      %536 = vmatprep.subr.mxu0 0.0
      %537 = vmatpush1.msra.mxu0 %v478
      %538 = vmatprep.subr.mxu0 0.0
      %539 = vmatpush1.msra.mxu0 %v479
      %540 = vmatprep.subr.mxu0 0.0
      %541 = vmatpush1.msra.mxu0 %v480
      %542 = vmatprep.subr.mxu0 0.0
      %543 = vmatpush1.msra.mxu0 %v481
      %544 = vmatprep.subr.mxu0 0.0
      %545 = vmatpush1.msra.mxu0 %v482
      %546 = vmatprep.subr.mxu0 0.0
      %547 = vmatpush1.msra.mxu0 %v483
      %548 = vmatprep.subr.mxu0 0.0
      %549 = vmatpush1.msra.mxu0 %v484
      %550 = vmatprep.subr.mxu0 0.0
      %551 = vmatpush1.msra.mxu0 %v485
      %552 = vmatprep.subr.mxu0 0.0
      %553 = vmatpush1.msra.mxu0 %v486
      %554 = vmatprep.subr.mxu0 0.0
      %555 = vmatpush1.msra.mxu0 %v487
      %556 = vmatprep.subr.mxu0 0.0
      %557 = vmatpush1.msra.mxu0 %v488
      %558 = vmatprep.subr.mxu0 0.0
      %559 = vmatpush1.msra.mxu0 %v489
      %560 = vmatprep.subr.mxu0 0.0
      %561 = vmatpush1.msra.mxu0 0.0
      %562 = vmatprep.subr.mxu0 0.0
      %563 = vmatpush1.msra.mxu0 0.0
      %564 = vmatprep.mubr.f32.mxu0 %v498
      %565 = vmatmul.mubr.f32.gmra.mrb[0].mxu0 %v458
      %v566 = vpop.f32.mrb[0].mxu0
      %v567 = vadd.f32 %v494, %v566
      %v568 = vpop.f32.mrb[0].mxu0
      %569 = vdwg.mxu0
      %v570 = vsub.f32 0.0, %v567
      %v571 = vmul.f32 %v570, 1.442695
      %v572 = vpow.pop %v571
      %v573 = vadd.f32 %v572, 1.0
      %v574 = vrcp.pop %v573
      %v575 = vmul.f32 %v567, %v574
      %576 = vst [vmem:[#allocation3] sm:$0xff] %v575
      %577 = vst.msk [vmem:[#allocation4] sm:$0xff] %vm230, 0.0
      %v578 = vld [vmem:[#allocation3] sm:$0xff]
      %580 = vrot.lane.b32.xlu0 %v578, 7
      %v581 = vpop.permute.xlu0 %580
      %583 = vst.msk [vmem:[#allocation4] sm:$0xff] %vm243, %v581
      %584 = vst.msk [vmem:[#allocation4 + $0x8] sm:$0xff] %vm246, 0.0
      %v585 = vld [vmem:[#allocation3] sm:$0xff]
      %587 = vrot.lane.b32.xlu0 %v585, 6
      %v588 = vpop.permute.xlu0 %587
      %590 = vst.msk [vmem:[#allocation4 + $0x8] sm:$0xff] %vm259, %v588
      %591 = vst.msk [vmem:[#allocation4 + $0x10] sm:$0xff] %vm262, 0.0
      %v592 = vld [vmem:[#allocation3] sm:$0xff]
      %594 = vrot.lane.b32.xlu0 %v592, 5
      %v595 = vpop.permute.xlu0 %594
      %597 = vst.msk [vmem:[#allocation4 + $0x10] sm:$0xff] %vm275, %v595
      %598 = vst.msk [vmem:[#allocation4 + $0x18] sm:$0xff] %vm278, 0.0
      %v599 = vld [vmem:[#allocation3] sm:$0xff]
      %601 = vrot.lane.b32.xlu0 %v599, 4
      %v602 = vpop.permute.xlu0 %601
      %604 = vst.msk [vmem:[#allocation4 + $0x18] sm:$0xff] %vm291, %v602
      %605 = vst.msk [vmem:[#allocation4 + $0x20] sm:$0xff] %vm294, 0.0
      %v606 = vld [vmem:[#allocation3] sm:$0xff]
      %608 = vrot.lane.b32.xlu0 %v606, 3
      %v609 = vpop.permute.xlu0 %608
      %611 = vst.msk [vmem:[#allocation4 + $0x20] sm:$0xff] %vm307, %v609
      %612 = vst.msk [vmem:[#allocation4 + $0x28] sm:$0xff] %vm310, 0.0
      %v613 = vld [vmem:[#allocation3] sm:$0xff]
      %615 = vrot.lane.b32.xlu0 %v613, 2
      %v616 = vpop.permute.xlu0 %615
      %618 = vst.msk [vmem:[#allocation4 + $0x28] sm:$0xff] %vm323, %v616
      %619 = vst.msk [vmem:[#allocation4 + $0x30] sm:$0xff] %vm326, 0.0
      %v620 = vld [vmem:[#allocation3] sm:$0xff]
      %622 = vrot.lane.b32.xlu0 %v620, 1
      %v623 = vpop.permute.xlu0 %622
      %625 = vst.msk [vmem:[#allocation4 + $0x30] sm:$0xff] %vm339, %v623
      %v626 = vld [vmem:[#allocation3] sm:$0xff]
      %627 = vst [vmem:[#allocation4 + $0x38] sm:$0xff] %v626
      %628 = vst.msk [vmem:[#allocation4 + $0x40] sm:$0xff] %vm346, 0.0
      %v629 = vld [vmem:[#allocation3] sm:$0xff]
      %631 = vrot.lane.b32.xlu0 %v629, 127
      %v632 = vpop.permute.xlu0 %631
      %634 = vst.msk [vmem:[#allocation4 + $0x40] sm:$0xff] %vm359, %v632
      %635 = vst.msk [vmem:[#allocation4 + $0x48] sm:$0xff] %vm362, 0.0
      %v636 = vld [vmem:[#allocation3] sm:$0xff]
      %638 = vrot.lane.b32.xlu0 %v636, 126
      %v639 = vpop.permute.xlu0 %638
      %641 = vst.msk [vmem:[#allocation4 + $0x48] sm:$0xff] %vm375, %v639
      %642 = vst.msk [vmem:[#allocation4 + $0x50] sm:$0xff] %vm378, 0.0
      %v643 = vld [vmem:[#allocation3] sm:$0xff]
      %645 = vrot.lane.b32.xlu0 %v643, 125
      %v646 = vpop.permute.xlu0 %645
      %648 = vst.msk [vmem:[#allocation4 + $0x50] sm:$0xff] %vm391, %v646
      %649 = vst.msk [vmem:[#allocation4 + $0x58] sm:$0xff] %vm394, 0.0
      %v650 = vld [vmem:[#allocation3] sm:$0xff]
      %652 = vrot.lane.b32.xlu0 %v650, 124
      %v653 = vpop.permute.xlu0 %652
      %655 = vst.msk [vmem:[#allocation4 + $0x58] sm:$0xff] %vm407, %v653
      %656 = vst.msk [vmem:[#allocation4 + $0x60] sm:$0xff] %vm410, 0.0
      %v657 = vld [vmem:[#allocation3] sm:$0xff]
      %659 = vrot.lane.b32.xlu0 %v657, 123
      %v660 = vpop.permute.xlu0 %659
      %662 = vst.msk [vmem:[#allocation4 + $0x60] sm:$0xff] %vm423, %v660
      %663 = vst.msk [vmem:[#allocation4 + $0x68] sm:$0xff] %vm426, 0.0
      %v664 = vld [vmem:[#allocation3] sm:$0xff]
      %666 = vrot.lane.b32.xlu0 %v664, 122
      %v667 = vpop.permute.xlu0 %666
      %669 = vst.msk [vmem:[#allocation4 + $0x68] sm:$0xff] %vm439, %v667
      %670 = vst.msk [vmem:[#allocation4 + $0x70] sm:$0xff] %vm442, 0.0
      %v671 = vld [vmem:[#allocation3] sm:$0xff]
      %673 = vrot.lane.b32.xlu0 %v671, 121
      %v674 = vpop.permute.xlu0 %673
      %676 = vst.msk [vmem:[#allocation4 + $0x70] sm:$0xff] %vm455, %v674
      %v677 = vld [vmem:[%s3] sm:$0xff]
      %v678 = vld [vmem:[#allocation4] sm:$0xff]
      %v679 = vld [vmem:[#allocation4 + $0x8] sm:$0xff]
      %v680 = vld [vmem:[#allocation4 + $0x10] sm:$0xff]
      %v681 = vld [vmem:[#allocation4 + $0x18] sm:$0xff]
      %v682 = vld [vmem:[#allocation4 + $0x20] sm:$0xff]
      %v683 = vld [vmem:[#allocation4 + $0x28] sm:$0xff]
      %v684 = vld [vmem:[#allocation4 + $0x30] sm:$0xff]
      %v685 = vld [vmem:[#allocation4 + $0x38] sm:$0xff]
      %v686 = vld [vmem:[#allocation4 + $0x40] sm:$0xff]
      %v687 = vld [vmem:[#allocation4 + $0x48] sm:$0xff]
      %v688 = vld [vmem:[#allocation4 + $0x50] sm:$0xff]
      %v689 = vld [vmem:[#allocation4 + $0x58] sm:$0xff]
      %v690 = vld [vmem:[#allocation4 + $0x60] sm:$0xff]
      %v691 = vld [vmem:[#allocation4 + $0x68] sm:$0xff]
      %v692 = vld [vmem:[#allocation4 + $0x70] sm:$0xff]
      %v693 = vld [vmem:[%s4] sm:$0xff]
      %695 = vset.pattern.permute.xlu0 0
      %696 = vperm.xlu0 %695, %v693
      %v697 = vpop.permute.xlu0 %696
      %vm699 = vcmask 982016
      %v701 = vsel %vm699, %v677, 0
      %703 = vmatprep.subr.mxu0 0.0
      %704 = vmatpush1.msra.mxu0 %v678
      %705 = vmatprep.subr.mxu0 0.0
      %706 = vmatpush1.msra.mxu0 %v679
      %707 = vmatprep.subr.mxu0 0.0
      %708 = vmatpush1.msra.mxu0 %v680
      %709 = vmatprep.subr.mxu0 0.0
      %710 = vmatpush1.msra.mxu0 %v681
      %711 = vmatprep.subr.mxu0 0.0
      %712 = vmatpush1.msra.mxu0 %v682
      %713 = vmatprep.subr.mxu0 0.0
      %714 = vmatpush1.msra.mxu0 %v683
      %715 = vmatprep.subr.mxu0 0.0
      %716 = vmatpush1.msra.mxu0 %v684
      %717 = vmatprep.subr.mxu0 0.0
      %718 = vmatpush1.msra.mxu0 %v685
      %719 = vmatprep.subr.mxu0 0.0
      %720 = vmatpush1.msra.mxu0 %v686
      %721 = vmatprep.subr.mxu0 0.0
      %722 = vmatpush1.msra.mxu0 %v687
      %723 = vmatprep.subr.mxu0 0.0
      %724 = vmatpush1.msra.mxu0 %v688
      %725 = vmatprep.subr.mxu0 0.0
      %726 = vmatpush1.msra.mxu0 %v689
      %727 = vmatprep.subr.mxu0 0.0
      %728 = vmatpush1.msra.mxu0 %v690
      %729 = vmatprep.subr.mxu0 0.0
      %730 = vmatpush1.msra.mxu0 %v691
      %731 = vmatprep.subr.mxu0 0.0
      %732 = vmatpush1.msra.mxu0 %v692
      %733 = vmatprep.subr.mxu0 0.0
      %734 = vmatpush1.msra.mxu0 0.0
      %735 = vmatprep.subr.mxu0 0.0
      %736 = vmatpush1.msra.mxu0 0.0
      %737 = vmatprep.subr.mxu0 0.0
      %738 = vmatpush1.msra.mxu0 0.0
      %739 = vmatprep.subr.mxu0 0.0
      %740 = vmatpush1.msra.mxu0 0.0
      %741 = vmatprep.subr.mxu0 0.0
      %742 = vmatpush1.msra.mxu0 0.0
      %743 = vmatprep.subr.mxu0 0.0
      %744 = vmatpush1.msra.mxu0 0.0
      %745 = vmatprep.subr.mxu0 0.0
      %746 = vmatpush1.msra.mxu0 0.0
      %747 = vmatprep.subr.mxu0 0.0
      %748 = vmatpush1.msra.mxu0 0.0
      %749 = vmatprep.subr.mxu0 0.0
      %750 = vmatpush1.msra.mxu0 0.0
      %751 = vmatprep.subr.mxu0 0.0
      %752 = vmatpush1.msra.mxu0 0.0
      %753 = vmatprep.subr.mxu0 0.0
      %754 = vmatpush1.msra.mxu0 0.0
      %755 = vmatprep.subr.mxu0 0.0
      %756 = vmatpush1.msra.mxu0 0.0
      %757 = vmatprep.subr.mxu0 0.0
      %758 = vmatpush1.msra.mxu0 0.0
      %759 = vmatprep.subr.mxu0 0.0
      %760 = vmatpush1.msra.mxu0 0.0
      %761 = vmatprep.subr.mxu0 0.0
      %762 = vmatpush1.msra.mxu0 0.0
      %763 = vmatprep.subr.mxu0 0.0
      %764 = vmatpush1.msra.mxu0 0.0
      %765 = vmatprep.subr.mxu0 0.0
      %766 = vmatpush1.msra.mxu0 0.0
      %767 = vmatprep.mubr.f32.mxu0 0.0
      %768 = vmatmul.mubr.f32.gmra.mrb[0].mxu0 %v701
      %v769 = vpop.f32.mrb[0].mxu0
      %v770 = vadd.f32 %v697, %v769
      %v771 = vpop.f32.mrb[0].mxu0
      %772 = vdwg.mxu0
      %v773 = vsub.f32 0.0, %v770
      %v774 = vmul.f32 %v773, 1.442695
      %v775 = vpow.pop %v774
      %v776 = vadd.f32 %v775, 1.0
      %v777 = vrcp.pop %v776
      %v778 = vmul.f32 %v770, %v777
      %v779 = vld [vmem:[#allocation3] sm:$0xff]
      %v780 = vadd.f32 %v779, %v778
      %781 = vst [vmem:[%s229] sm:$0xff] %v780
      %p782 = scmp.lt.s32.totalorder %s16, 1
      %s783 = scalar_select %p782, %s16, 1
      %s784 = smul.addr %s783, 8
      %s785 = sadd.s32 6, %s784
      %s786 = smul.addr %s785, 8
      %s787 = scalar_lea.vmem %s5, %s786
      // Predicated region
      $region41: #{seq_encoder2_forward.6} parent=39 // pred_check
        %p788 = pneg %p144
      $region42: #{seq_encoder2_forward.6} parent=39 // pred_check_branch
        %790 = sbr.rel (%p788) target = $region44
      $region43: #{seq_encoder2_forward.6} parent=39 // pred_region
        _
      $region44: #{seq_encoder2_forward.6} parent=39 // pred_fallthru
        _
    $region40: #{seq_encoder2_forward.6} parent=5 // pred_fallthru
      _
    %p791 = scmp.le.s32.totalorder 2, %s11
    // Predicated region
    $region45: #{seq_encoder2_forward.6} parent=5 // pred_check
      %p792 = pneg %p791
    $region46: #{seq_encoder2_forward.6} parent=5 // pred_check_branch
      %794 = sbr.rel (%p792) target = $region48
    $region47: #{seq_encoder2_forward.6} parent=5 // pred_region
      %s795 = ssub.s32 %s11, 2
      // Predicated region
      $region49: #{seq_encoder2_forward.6} parent=47 // pred_check
        %p796 = pneg %p150
      $region50: #{seq_encoder2_forward.6} parent=47 // pred_check_branch
        %798 = sbr.rel (%p796) target = $region52
      $region51: #{seq_encoder2_forward.6} parent=47 // pred_region
        %p799 = scmp.lt.s32.totalorder %s17, 1
        %s800 = scalar_select %p799, %s17, 1
        %s801 = smul.addr %s800, 8
        %s802 = sadd.s32 6, %s801
        %s803 = smul.addr %s802, 8
        %s804 = scalar_lea.vmem %s5, %s803
      $region52: #{seq_encoder2_forward.6} parent=47 // pred_fallthru
        _
    $region48: #{seq_encoder2_forward.6} parent=5 // pred_fallthru
      _
  $region6: #{seq_encoder2_forward.6} parent=0 // loop_footer
    %s15 = sadd.s32 1, %s11
  $region7: #{seq_encoder2_forward.6} parent=0 // loop_footer_branch
    %10 = sbr.rel target = $region3
  $region8: #{seq_encoder2_forward.6} parent=0 // loop_exit
    _

// kernel: seq_encoder2_forward.7
$region0: #{seq_encoder2_forward.7}
  #allocation0 [shape = 'u32[]', space=smem, size = 0x4, offset = 0x4, fixed_abs, tag = 'smem constant byte address 0x4 - core index']
  #allocation1 [shape = 'u32[144,128]{1,0:T(1,128)}', space=vmem, size = 0x12000, scoped, tag = 'internal scratch']
  #allocation2 [shape = 'f32[240,128]{1,0:T(8,128)}', space=vmem, size = 0x1e000, scoped, tag = 'scratch operand']
  #allocation3 [shape = 'f32[8,128]{1,0:T(8,128)}', space=vmem, size = 0x1000, scoped, tag = 'scratch operand']
  #allocation4 [shape = 'f32[240,128]{1,0:T(8,128)}', space=vmem, size = 0x1e000, scoped, tag = 'scratch operand']
  %s0 = inlined_call_operand.hbm [shape: f32[2,64,128], index: 0, kind: input, shape index: {}, may-alias: {0,5}]
  %s1 = inlined_call_operand.vmem [shape: f32[8,240], index: 1, kind: input, shape index: {}]
  %s2 = inlined_call_operand.vmem [shape: f32[8,1], index: 2, kind: input, shape index: {}]
  %s3 = inlined_call_operand.vmem [shape: f32[8,240], index: 3, kind: input, shape index: {}]
  %s4 = inlined_call_operand.vmem [shape: f32[8,1], index: 4, kind: input, shape index: {}]
  %s5 = inlined_call_operand.hbm [shape: f32[2,64,128], index: 5, kind: output, shape index: {}, may-alias: {0,5}]
  %s6 = sld [smem:[#allocation0]]
  $region57: #{seq_encoder2_forward.7} parent=0
    _
  %s8 = ssub.s32 1, %s6
  %s9 = scalar_select 0, %s8, %s6
  $region1: #{seq_encoder2_forward.7} parent=0
    #allocation5 [shape = 'u8[8192]{0}', space=vmem, size = 0x2000, scoped, tag = 'input window, operand 0']
    #allocation6 [shape = 's32[2]{0}', space=sflag, size = 0x8, scoped, tag = 'scoped memory for seq_encoder2_forward.7']
    #allocation7 [shape = 's32[2]{0}', space=sflag, size = 0x8, scoped, tag = 'scoped memory for seq_encoder2_forward.7']
    #allocation8 [shape = 'u8[8192]{0}', space=vmem, size = 0x2000, scoped, tag = 'output window, operand 0']
    %10 = vsyncpa [#allocation6], 0
    %s11 = scalar_lea.sflag [#allocation6], 1
    %12 = vsyncpa %s11, 0
    %13 = vsyncpa [#allocation7], 0
    %s14 = scalar_lea.sflag [#allocation7], 1
    %15 = vsyncpa %s14, 0
    loop: start=0, step=1, limit=4
    $region2: #{seq_encoder2_forward.7} parent=1 // loop_pre_header
      _
    $region3: #{seq_encoder2_forward.7} parent=1 // loop_header
      %s17 = sphi 0, %s21
      %p18 = scmp.ge.s32.totalorder %s17, 4
      %s27 = sphi 0, %s29
      %s30 = sphi 0, %s27
      %s31 = sphi 0, %s30
      %s47 = sphi 0, %s31
      %s51 = sphi 0, %s51
      %s53 = sphi 0, %s51
      %s54 = sphi 0, %s53
      %s68 = sphi 0, %s54
      %s72 = sphi 0, %s72
      %s74 = sphi 0, %s72
      %s75 = sphi 0, %s74
      %s89 = sphi 0, %s75
      %s93 = sphi 0, %s93
      %s95 = sphi 0, %s93
      %s96 = sphi 0, %s95
      %s110 = sphi 0, %s96
      %s114 = sphi 0, %s114
      %s116 = sphi 0, %s114
      %s117 = sphi 0, %s116
      %s131 = sphi 0, %s117
      %s137 = sphi 0, %s139
      %s140 = sphi 0, %s137
      %s141 = sphi 0, %s140
      %s157 = sphi 0, %s141
    $region4: #{seq_encoder2_forward.7} parent=1 // loop_header_branch
      %20 = sbr.rel (%p18) target = $region8
    $region5: #{seq_encoder2_forward.7} parent=1 // loop_body
      %s22 = ssub.s32 %s17, 1
      %s23 = ssub.s32 %s17, 2
      %s24 = sadd.s32 %s17, 1
      %s25 = ssub.s32 %s17, %s24
      %p26 = scmp.eq.s32.totalorder %s25, 0
      %s28 = sadd.s32 %s27, 1
      %s29 = scalar_select %p26, %s27, %s28
      %p32 = pneg %p26
      %p33 = scmp.eq.s32.totalorder %s17, 1
      %p34 = por %p32, %p33
      %p35 = scmp.ne.s32.totalorder %s27, %s30
      %p36 = scmp.eq.s32.totalorder %s17, 0
      %p37 = por %p35, %p36
      %p38 = scmp.ne.s32.totalorder %s27, %s30
      %p39 = scmp.eq.s32.totalorder %s22, 1
      %p40 = por %p38, %p39
      %p41 = scmp.ne.s32.totalorder %s30, %s31
      %p42 = scmp.eq.s32.totalorder %s22, 0
      %p43 = por %p41, %p42
      %p44 = scmp.ne.s32.totalorder %s30, %s31
      %p45 = scmp.eq.s32.totalorder %s23, 1
      %p46 = por %p44, %p45
      %p48 = scmp.ne.s32.totalorder %s31, %s47
      %p49 = scmp.eq.s32.totalorder %s23, 0
      %p50 = por %p48, %p49
      %s52 = sadd.s32 %s51, 1
      %p55 = scmp.eq.s32.totalorder %s17, 1
      %p56 = scmp.ne.s32.totalorder %s51, %s53
      %p57 = scmp.eq.s32.totalorder %s17, 0
      %p58 = por %p56, %p57
      %p59 = scmp.ne.s32.totalorder %s51, %s53
      %p60 = scmp.eq.s32.totalorder %s22, 1
      %p61 = por %p59, %p60
      %p62 = scmp.ne.s32.totalorder %s53, %s54
      %p63 = scmp.eq.s32.totalorder %s22, 0
      %p64 = por %p62, %p63
      %p65 = scmp.ne.s32.totalorder %s53, %s54
      %p66 = scmp.eq.s32.totalorder %s23, 1
      %p67 = por %p65, %p66
      %p69 = scmp.ne.s32.totalorder %s54, %s68
      %p70 = scmp.eq.s32.totalorder %s23, 0
      %p71 = por %p69, %p70
      %s73 = sadd.s32 %s72, 1
      %p76 = scmp.eq.s32.totalorder %s17, 1
      %p77 = scmp.ne.s32.totalorder %s72, %s74
      %p78 = scmp.eq.s32.totalorder %s17, 0
      %p79 = por %p77, %p78
      %p80 = scmp.ne.s32.totalorder %s72, %s74
      %p81 = scmp.eq.s32.totalorder %s22, 1
      %p82 = por %p80, %p81
      %p83 = scmp.ne.s32.totalorder %s74, %s75
      %p84 = scmp.eq.s32.totalorder %s22, 0
      %p85 = por %p83, %p84
      %p86 = scmp.ne.s32.totalorder %s74, %s75
      %p87 = scmp.eq.s32.totalorder %s23, 1
      %p88 = por %p86, %p87
      %p90 = scmp.ne.s32.totalorder %s75, %s89
      %p91 = scmp.eq.s32.totalorder %s23, 0
      %p92 = por %p90, %p91
      %s94 = sadd.s32 %s93, 1
      %p97 = scmp.eq.s32.totalorder %s17, 1
      %p98 = scmp.ne.s32.totalorder %s93, %s95
      %p99 = scmp.eq.s32.totalorder %s17, 0
      %p100 = por %p98, %p99
      %p101 = scmp.ne.s32.totalorder %s93, %s95
      %p102 = scmp.eq.s32.totalorder %s22, 1
      %p103 = por %p101, %p102
      %p104 = scmp.ne.s32.totalorder %s95, %s96
      %p105 = scmp.eq.s32.totalorder %s22, 0
      %p106 = por %p104, %p105
      %p107 = scmp.ne.s32.totalorder %s95, %s96
      %p108 = scmp.eq.s32.totalorder %s23, 1
      %p109 = por %p107, %p108
      %p111 = scmp.ne.s32.totalorder %s96, %s110
      %p112 = scmp.eq.s32.totalorder %s23, 0
      %p113 = por %p111, %p112
      %s115 = sadd.s32 %s114, 1
      %p118 = scmp.eq.s32.totalorder %s17, 1
      %p119 = scmp.ne.s32.totalorder %s114, %s116
      %p120 = scmp.eq.s32.totalorder %s17, 0
      %p121 = por %p119, %p120
      %p122 = scmp.ne.s32.totalorder %s114, %s116
      %p123 = scmp.eq.s32.totalorder %s22, 1
      %p124 = por %p122, %p123
      %p125 = scmp.ne.s32.totalorder %s116, %s117
      %p126 = scmp.eq.s32.totalorder %s22, 0
      %p127 = por %p125, %p126
      %p128 = scmp.ne.s32.totalorder %s116, %s117
      %p129 = scmp.eq.s32.totalorder %s23, 1
      %p130 = por %p128, %p129
      %p132 = scmp.ne.s32.totalorder %s117, %s131
      %p133 = scmp.eq.s32.totalorder %s23, 0
      %p134 = por %p132, %p133
      %s135 = ssub.s32 %s17, %s24
      %p136 = scmp.eq.s32.totalorder %s135, 0
      %s138 = sadd.s32 %s137, 1
      %s139 = scalar_select %p136, %s137, %s138
      %p142 = pneg %p136
      %p143 = scmp.eq.s32.totalorder %s17, 1
      %p144 = por %p142, %p143
      %p145 = scmp.ne.s32.totalorder %s137, %s140
      %p146 = scmp.eq.s32.totalorder %s17, 0
      %p147 = por %p145, %p146
      %p148 = scmp.ne.s32.totalorder %s137, %s140
      %p149 = scmp.eq.s32.totalorder %s22, 1
      %p150 = por %p148, %p149
      %p151 = scmp.ne.s32.totalorder %s140, %s141
      %p152 = scmp.eq.s32.totalorder %s22, 0
      %p153 = por %p151, %p152
      %p154 = scmp.ne.s32.totalorder %s140, %s141
      %p155 = scmp.eq.s32.totalorder %s23, 1
      %p156 = por %p154, %p155
      %p158 = scmp.ne.s32.totalorder %s141, %s157
      %p159 = scmp.eq.s32.totalorder %s23, 0
      %p160 = por %p158, %p159
      %p161 = scmp.le.s32.totalorder 1, %s17
      %p162 = scmp.lt.s32.totalorder %s17, 3
      %p163 = pnand %p161, %p162
      %p164 = pneg %p163
      // Predicated region
      $region9: #{seq_encoder2_forward.7} parent=5 // pred_check
        _
      $region10: #{seq_encoder2_forward.7} parent=5 // pred_check_branch
        %166 = sbr.rel (%p163) target = $region12
      $region11: #{seq_encoder2_forward.7} parent=5 // pred_region
        %s167 = ssub.s32 %s17, 1
        // Predicated region
        $region13: #{seq_encoder2_forward.7} parent=11 // pred_check
          %p168 = pneg %p64
        $region14: #{seq_encoder2_forward.7} parent=11 // pred_check_branch
          %170 = sbr.rel (%p168) target = $region16
        $region15: #{seq_encoder2_forward.7} parent=11 // pred_region
          _
        $region16: #{seq_encoder2_forward.7} parent=11 // pred_fallthru
          _
        // Predicated region
        $region17: #{seq_encoder2_forward.7} parent=11 // pred_check
          %p171 = pneg %p85
        $region18: #{seq_encoder2_forward.7} parent=11 // pred_check_branch
          %173 = sbr.rel (%p171) target = $region20
        $region19: #{seq_encoder2_forward.7} parent=11 // pred_region
          _
        $region20: #{seq_encoder2_forward.7} parent=11 // pred_fallthru
          _
        // Predicated region
        $region21: #{seq_encoder2_forward.7} parent=11 // pred_check
          %p174 = pneg %p106
        $region22: #{seq_encoder2_forward.7} parent=11 // pred_check_branch
          %176 = sbr.rel (%p174) target = $region24
        $region23: #{seq_encoder2_forward.7} parent=11 // pred_region
          _
        $region24: #{seq_encoder2_forward.7} parent=11 // pred_fallthru
          _
        // Predicated region
        $region25: #{seq_encoder2_forward.7} parent=11 // pred_check
          %p177 = pneg %p127
        $region26: #{seq_encoder2_forward.7} parent=11 // pred_check_branch
          %179 = sbr.rel (%p177) target = $region28
        $region27: #{seq_encoder2_forward.7} parent=11 // pred_region
          _
        $region28: #{seq_encoder2_forward.7} parent=11 // pred_fallthru
          _
      $region12: #{seq_encoder2_forward.7} parent=5 // pred_fallthru
        _
      %p180 = scmp.lt.s32.totalorder %s17, 2
      // Predicated region
      $region29: #{seq_encoder2_forward.7} parent=5 // pred_check
        %p181 = pneg %p180
      $region30: #{seq_encoder2_forward.7} parent=5 // pred_check_branch
        %183 = sbr.rel (%p181) target = $region32
      $region31: #{seq_encoder2_forward.7} parent=5 // pred_region
        // Predicated region
        $region33: #{seq_encoder2_forward.7} parent=31 // pred_check
          %p184 = pneg %p37
        $region34: #{seq_encoder2_forward.7} parent=31 // pred_check_branch
          %186 = sbr.rel (%p184) target = $region36
        $region35: #{seq_encoder2_forward.7} parent=31 // pred_region
          %s187 = sand.u32 %s27, 1
          %s188 = scalar_lea.sflag [#allocation6], %s187
          %s189 = sand.u32 %s27, 1
          %s190 = smul.addr %s189, 8
          %s191 = scalar_lea.vmem [#allocation5], %s190
          %s193 = ssub.s32 128, 128
          %194 = vsyncadd %s188, %s193
          %s195 = smul.addr %s17, 8
          %s196 = sadd.s32 6, %s195
          %s197 = smul.addr %s196, 128
          %s198 = scalar_lea.hbm %s0, %s197
          %s200 = sshll.u32 %s191, 4
          %s201 = int_to_ptr.vmem [resolvable:$true] %s200
          %203 = dma.hbm_to_vmem [thread:$0]  %s198, 128, %s201, %s188
        $region36: #{seq_encoder2_forward.7} parent=31 // pred_fallthru
          _
      $region32: #{seq_encoder2_forward.7} parent=5 // pred_fallthru
        _
      %p204 = scmp.le.s32.totalorder 1, %s17
      %p205 = scmp.lt.s32.totalorder %s17, 3
      %p206 = pnand %p204, %p205
      %p207 = pneg %p206
      // Predicated region
      $region37: #{seq_encoder2_forward.7} parent=5 // pred_check
        _
      $region38: #{seq_encoder2_forward.7} parent=5 // pred_check_branch
        %209 = sbr.rel (%p206) target = $region40
      $region39: #{seq_encoder2_forward.7} parent=5 // pred_region
        %s210 = ssub.s32 %s17, 1
        %s211 = sand.u32 %s30, 1
        %s212 = scalar_lea.sflag [#allocation6], %s211
        %s213 = sand.u32 %s30, 1
        %s214 = smul.addr %s213, 8
        %s215 = scalar_lea.vmem [#allocation5], %s214
        // Predicated region
        $region41: #{seq_encoder2_forward.7} parent=39 // pred_check
          %p216 = pneg %p43
        $region42: #{seq_encoder2_forward.7} parent=39 // pred_check_branch
          %218 = sbr.rel (%p216) target = $region44
        $region43: #{seq_encoder2_forward.7} parent=39 // pred_region
          %219 = dma.done %s212, 128
        $region44: #{seq_encoder2_forward.7} parent=39 // pred_fallthru
          _
        %s220 = sand.u32 %s30, 1
        %s221 = scalar_lea.sflag [#allocation6], %s220
        %s222 = sand.u32 %s30, 1
        %s223 = smul.addr %s222, 8
        %s224 = scalar_lea.vmem [#allocation5], %s223
        %p225 = pneg %p43
        %p226 = pneg %p40
        %p227 = pneg %p64
        %p228 = pneg %p61
        %p229 = pneg %p85
        %p230 = pneg %p82
        %p231 = pneg %p106
        %p232 = pneg %p103
        %p233 = pneg %p127
        %p234 = pneg %p124
        %p235 = pneg %p153
        %p236 = pneg %p150
        %s237 = sand.u32 %s140, 1
        %s238 = scalar_lea.sflag [#allocation7], %s237
        %s239 = sand.u32 %s140, 1
        %s240 = smul.addr %s239, 8
        %s241 = scalar_lea.vmem [#allocation8], %s240
        %vm242 = vcmask 236544
        %243 = vst.msk [vmem:[#allocation2] sm:$0xff] %vm242, 0.0
        %v244 = vld [vmem:[%s215] sm:$0xff]
        %246 = vrot.lane.b32.xlu0 %v244, 29
        %v247 = vpop.permute.xlu0 %246
        %vm249 = vcmask 1047784
        %250 = vst.msk [vmem:[#allocation2] sm:$0xff] %vm249, %v247
        %vm251 = vcmask 220160
        %252 = vst.msk [vmem:[#allocation2 + $0x8] sm:$0xff] %vm251, 0.0
        %v253 = vld [vmem:[%s215] sm:$0xff]
        %255 = vrot.lane.b32.xlu0 %v253, 27
        %v256 = vpop.permute.xlu0 %255
        %vm258 = vcmask 1047768
        %259 = vst.msk [vmem:[#allocation2 + $0x8] sm:$0xff] %vm258, %v256
        %vm260 = vcmask 203776
        %261 = vst.msk [vmem:[#allocation2 + $0x10] sm:$0xff] %vm260, 0.0
        %v262 = vld [vmem:[%s215] sm:$0xff]
        %264 = vrot.lane.b32.xlu0 %v262, 25
        %v265 = vpop.permute.xlu0 %264
        %vm267 = vcmask 1047752
        %268 = vst.msk [vmem:[#allocation2 + $0x10] sm:$0xff] %vm267, %v265
        %vm269 = vcmask 187392
        %270 = vst.msk [vmem:[#allocation2 + $0x18] sm:$0xff] %vm269, 0.0
        %v271 = vld [vmem:[%s215] sm:$0xff]
        %273 = vrot.lane.b32.xlu0 %v271, 23
        %v274 = vpop.permute.xlu0 %273
        %vm276 = vcmask 1047736
        %277 = vst.msk [vmem:[#allocation2 + $0x18] sm:$0xff] %vm276, %v274
        %vm278 = vcmask 171008
        %279 = vst.msk [vmem:[#allocation2 + $0x20] sm:$0xff] %vm278, 0.0
        %v280 = vld [vmem:[%s215] sm:$0xff]
        %282 = vrot.lane.b32.xlu0 %v280, 21
        %v283 = vpop.permute.xlu0 %282
        %vm285 = vcmask 1047720
        %286 = vst.msk [vmem:[#allocation2 + $0x20] sm:$0xff] %vm285, %v283
        %vm287 = vcmask 154624
        %288 = vst.msk [vmem:[#allocation2 + $0x28] sm:$0xff] %vm287, 0.0
        %v289 = vld [vmem:[%s215] sm:$0xff]
        %291 = vrot.lane.b32.xlu0 %v289, 19
        %v292 = vpop.permute.xlu0 %291
        %vm294 = vcmask 1047704
        %295 = vst.msk [vmem:[#allocation2 + $0x28] sm:$0xff] %vm294, %v292
        %vm296 = vcmask 138240
        %297 = vst.msk [vmem:[#allocation2 + $0x30] sm:$0xff] %vm296, 0.0
        %v298 = vld [vmem:[%s215] sm:$0xff]
        %300 = vrot.lane.b32.xlu0 %v298, 17
        %v301 = vpop.permute.xlu0 %300
        %vm303 = vcmask 1047688
        %304 = vst.msk [vmem:[#allocation2 + $0x30] sm:$0xff] %vm303, %v301
        %vm305 = vcmask 121856
        %306 = vst.msk [vmem:[#allocation2 + $0x38] sm:$0xff] %vm305, 0.0
        %v307 = vld [vmem:[%s215] sm:$0xff]
        %309 = vrot.lane.b32.xlu0 %v307, 15
        %v310 = vpop.permute.xlu0 %309
        %vm312 = vcmask 1047672
        %313 = vst.msk [vmem:[#allocation2 + $0x38] sm:$0xff] %vm312, %v310
        %vm314 = vcmask 105472
        %315 = vst.msk [vmem:[#allocation2 + $0x40] sm:$0xff] %vm314, 0.0
        %v316 = vld [vmem:[%s215] sm:$0xff]
        %318 = vrot.lane.b32.xlu0 %v316, 13
        %v319 = vpop.permute.xlu0 %318
        %vm321 = vcmask 1047656
        %322 = vst.msk [vmem:[#allocation2 + $0x40] sm:$0xff] %vm321, %v319
        %vm323 = vcmask 89088
        %324 = vst.msk [vmem:[#allocation2 + $0x48] sm:$0xff] %vm323, 0.0
        %v325 = vld [vmem:[%s215] sm:$0xff]
        %327 = vrot.lane.b32.xlu0 %v325, 11
        %v328 = vpop.permute.xlu0 %327
        %vm330 = vcmask 1047640
        %331 = vst.msk [vmem:[#allocation2 + $0x48] sm:$0xff] %vm330, %v328
        %vm332 = vcmask 72704
        %333 = vst.msk [vmem:[#allocation2 + $0x50] sm:$0xff] %vm332, 0.0
        %v334 = vld [vmem:[%s215] sm:$0xff]
        %336 = vrot.lane.b32.xlu0 %v334, 9
        %v337 = vpop.permute.xlu0 %336
        %vm339 = vcmask 1047624
        %340 = vst.msk [vmem:[#allocation2 + $0x50] sm:$0xff] %vm339, %v337
        %vm341 = vcmask 56320
        %342 = vst.msk [vmem:[#allocation2 + $0x58] sm:$0xff] %vm341, 0.0
        %v343 = vld [vmem:[%s215] sm:$0xff]
        %345 = vrot.lane.b32.xlu0 %v343, 7
        %v346 = vpop.permute.xlu0 %345
        %vm348 = vcmask 1047608
        %349 = vst.msk [vmem:[#allocation2 + $0x58] sm:$0xff] %vm348, %v346
        %vm350 = vcmask 39936
        %351 = vst.msk [vmem:[#allocation2 + $0x60] sm:$0xff] %vm350, 0.0
        %v352 = vld [vmem:[%s215] sm:$0xff]
        %354 = vrot.lane.b32.xlu0 %v352, 5
        %v355 = vpop.permute.xlu0 %354
        %vm357 = vcmask 1047592
        %358 = vst.msk [vmem:[#allocation2 + $0x60] sm:$0xff] %vm357, %v355
        %vm359 = vcmask 23552
        %360 = vst.msk [vmem:[#allocation2 + $0x68] sm:$0xff] %vm359, 0.0
        %v361 = vld [vmem:[%s215] sm:$0xff]
        %363 = vrot.lane.b32.xlu0 %v361, 3
        %v364 = vpop.permute.xlu0 %363
        %vm366 = vcmask 1047576
        %367 = vst.msk [vmem:[#allocation2 + $0x68] sm:$0xff] %vm366, %v364
        %vm368 = vcmask 7168
        %369 = vst.msk [vmem:[#allocation2 + $0x70] sm:$0xff] %vm368, 0.0
        %v370 = vld [vmem:[%s215] sm:$0xff]
        %372 = vrot.lane.b32.xlu0 %v370, 1
        %v373 = vpop.permute.xlu0 %372
        %vm375 = vcmask 1047560
        %376 = vst.msk [vmem:[#allocation2 + $0x70] sm:$0xff] %vm375, %v373
        %vm377 = vcmask 1048568
        %378 = vst.msk [vmem:[#allocation2 + $0x78] sm:$0xff] %vm377, 0.0
        %v379 = vld [vmem:[%s215] sm:$0xff]
        %381 = vrot.lane.b32.xlu0 %v379, 127
        %v382 = vpop.permute.xlu0 %381
        %vm384 = vcmask 1039360
        %385 = vst.msk [vmem:[#allocation2 + $0x78] sm:$0xff] %vm384, %v382
        %vm386 = vcmask 1048552
        %387 = vst.msk [vmem:[#allocation2 + $0x80] sm:$0xff] %vm386, 0.0
        %v388 = vld [vmem:[%s215] sm:$0xff]
        %390 = vrot.lane.b32.xlu0 %v388, 125
        %v391 = vpop.permute.xlu0 %390
        %vm393 = vcmask 1022976
        %394 = vst.msk [vmem:[#allocation2 + $0x80] sm:$0xff] %vm393, %v391
        %vm395 = vcmask 1048536
        %396 = vst.msk [vmem:[#allocation2 + $0x88] sm:$0xff] %vm395, 0.0
        %v397 = vld [vmem:[%s215] sm:$0xff]
        %399 = vrot.lane.b32.xlu0 %v397, 123
        %v400 = vpop.permute.xlu0 %399
        %vm402 = vcmask 1006592
        %403 = vst.msk [vmem:[#allocation2 + $0x88] sm:$0xff] %vm402, %v400
        %vm404 = vcmask 1048520
        %405 = vst.msk [vmem:[#allocation2 + $0x90] sm:$0xff] %vm404, 0.0
        %v406 = vld [vmem:[%s215] sm:$0xff]
        %408 = vrot.lane.b32.xlu0 %v406, 121
        %v409 = vpop.permute.xlu0 %408
        %vm411 = vcmask 990208
        %412 = vst.msk [vmem:[#allocation2 + $0x90] sm:$0xff] %vm411, %v409
        %vm413 = vcmask 1048504
        %414 = vst.msk [vmem:[#allocation2 + $0x98] sm:$0xff] %vm413, 0.0
        %v415 = vld [vmem:[%s215] sm:$0xff]
        %417 = vrot.lane.b32.xlu0 %v415, 119
        %v418 = vpop.permute.xlu0 %417
        %vm420 = vcmask 973824
        %421 = vst.msk [vmem:[#allocation2 + $0x98] sm:$0xff] %vm420, %v418
        %vm422 = vcmask 1048488
        %423 = vst.msk [vmem:[#allocation2 + $0xa0] sm:$0xff] %vm422, 0.0
        %v424 = vld [vmem:[%s215] sm:$0xff]
        %426 = vrot.lane.b32.xlu0 %v424, 117
        %v427 = vpop.permute.xlu0 %426
        %vm429 = vcmask 957440
        %430 = vst.msk [vmem:[#allocation2 + $0xa0] sm:$0xff] %vm429, %v427
        %vm431 = vcmask 1048472
        %432 = vst.msk [vmem:[#allocation2 + $0xa8] sm:$0xff] %vm431, 0.0
        %v433 = vld [vmem:[%s215] sm:$0xff]
        %435 = vrot.lane.b32.xlu0 %v433, 115
        %v436 = vpop.permute.xlu0 %435
        %vm438 = vcmask 941056
        %439 = vst.msk [vmem:[#allocation2 + $0xa8] sm:$0xff] %vm438, %v436
        %vm440 = vcmask 1048456
        %441 = vst.msk [vmem:[#allocation2 + $0xb0] sm:$0xff] %vm440, 0.0
        %v442 = vld [vmem:[%s215] sm:$0xff]
        %444 = vrot.lane.b32.xlu0 %v442, 113
        %v445 = vpop.permute.xlu0 %444
        %vm447 = vcmask 924672
        %448 = vst.msk [vmem:[#allocation2 + $0xb0] sm:$0xff] %vm447, %v445
        %vm449 = vcmask 1048440
        %450 = vst.msk [vmem:[#allocation2 + $0xb8] sm:$0xff] %vm449, 0.0
        %v451 = vld [vmem:[%s215] sm:$0xff]
        %453 = vrot.lane.b32.xlu0 %v451, 111
        %v454 = vpop.permute.xlu0 %453
        %vm456 = vcmask 908288
        %457 = vst.msk [vmem:[#allocation2 + $0xb8] sm:$0xff] %vm456, %v454
        %vm458 = vcmask 1048424
        %459 = vst.msk [vmem:[#allocation2 + $0xc0] sm:$0xff] %vm458, 0.0
        %v460 = vld [vmem:[%s215] sm:$0xff]
        %462 = vrot.lane.b32.xlu0 %v460, 109
        %v463 = vpop.permute.xlu0 %462
        %vm465 = vcmask 891904
        %466 = vst.msk [vmem:[#allocation2 + $0xc0] sm:$0xff] %vm465, %v463
        %vm467 = vcmask 1048408
        %468 = vst.msk [vmem:[#allocation2 + $0xc8] sm:$0xff] %vm467, 0.0
        %v469 = vld [vmem:[%s215] sm:$0xff]
        %471 = vrot.lane.b32.xlu0 %v469, 107
        %v472 = vpop.permute.xlu0 %471
        %vm474 = vcmask 875520
        %475 = vst.msk [vmem:[#allocation2 + $0xc8] sm:$0xff] %vm474, %v472
        %vm476 = vcmask 1048392
        %477 = vst.msk [vmem:[#allocation2 + $0xd0] sm:$0xff] %vm476, 0.0
        %v478 = vld [vmem:[%s215] sm:$0xff]
        %480 = vrot.lane.b32.xlu0 %v478, 105
        %v481 = vpop.permute.xlu0 %480
        %vm483 = vcmask 859136
        %484 = vst.msk [vmem:[#allocation2 + $0xd0] sm:$0xff] %vm483, %v481
        %vm485 = vcmask 1048376
        %486 = vst.msk [vmem:[#allocation2 + $0xd8] sm:$0xff] %vm485, 0.0
        %v487 = vld [vmem:[%s215] sm:$0xff]
        %489 = vrot.lane.b32.xlu0 %v487, 103
        %v490 = vpop.permute.xlu0 %489
        %vm492 = vcmask 842752
        %493 = vst.msk [vmem:[#allocation2 + $0xd8] sm:$0xff] %vm492, %v490
        %vm494 = vcmask 1048360
        %495 = vst.msk [vmem:[#allocation2 + $0xe0] sm:$0xff] %vm494, 0.0
        %v496 = vld [vmem:[%s215] sm:$0xff]
        %498 = vrot.lane.b32.xlu0 %v496, 101
        %v499 = vpop.permute.xlu0 %498
        %vm501 = vcmask 826368
        %502 = vst.msk [vmem:[#allocation2 + $0xe0] sm:$0xff] %vm501, %v499
        %vm503 = vcmask 1048344
        %504 = vst.msk [vmem:[#allocation2 + $0xe8] sm:$0xff] %vm503, 0.0
        %v505 = vld [vmem:[%s215] sm:$0xff]
        %507 = vrot.lane.b32.xlu0 %v505, 99
        %v508 = vpop.permute.xlu0 %507
        %vm510 = vcmask 809984
        %511 = vst.msk [vmem:[#allocation2 + $0xe8] sm:$0xff] %vm510, %v508
        %v512 = vld [vmem:[%s1] sm:$0xff]
        %v513 = vld [vmem:[%s1 + $0x8] sm:$0xff]
        %v514 = vld [vmem:[#allocation2] sm:$0xff]
        %v515 = vld [vmem:[#allocation2 + $0x8] sm:$0xff]
        %v516 = vld [vmem:[#allocation2 + $0x10] sm:$0xff]
        %v517 = vld [vmem:[#allocation2 + $0x18] sm:$0xff]
        %v518 = vld [vmem:[#allocation2 + $0x20] sm:$0xff]
        %v519 = vld [vmem:[#allocation2 + $0x28] sm:$0xff]
        %v520 = vld [vmem:[#allocation2 + $0x30] sm:$0xff]
        %v521 = vld [vmem:[#allocation2 + $0x38] sm:$0xff]
        %v522 = vld [vmem:[#allocation2 + $0x40] sm:$0xff]
        %v523 = vld [vmem:[#allocation2 + $0x48] sm:$0xff]
        %v524 = vld [vmem:[#allocation2 + $0x50] sm:$0xff]
        %v525 = vld [vmem:[#allocation2 + $0x58] sm:$0xff]
        %v526 = vld [vmem:[#allocation2 + $0x60] sm:$0xff]
        %v527 = vld [vmem:[#allocation2 + $0x68] sm:$0xff]
        %v528 = vld [vmem:[#allocation2 + $0x70] sm:$0xff]
        %v529 = vld [vmem:[#allocation2 + $0x78] sm:$0xff]
        %v530 = vld [vmem:[#allocation2 + $0x80] sm:$0xff]
        %v531 = vld [vmem:[#allocation2 + $0x88] sm:$0xff]
        %v532 = vld [vmem:[#allocation2 + $0x90] sm:$0xff]
        %v533 = vld [vmem:[#allocation2 + $0x98] sm:$0xff]
        %v534 = vld [vmem:[#allocation2 + $0xa0] sm:$0xff]
        %v535 = vld [vmem:[#allocation2 + $0xa8] sm:$0xff]
        %v536 = vld [vmem:[#allocation2 + $0xb0] sm:$0xff]
        %v537 = vld [vmem:[#allocation2 + $0xb8] sm:$0xff]
        %v538 = vld [vmem:[#allocation2 + $0xc0] sm:$0xff]
        %v539 = vld [vmem:[#allocation2 + $0xc8] sm:$0xff]
        %v540 = vld [vmem:[#allocation2 + $0xd0] sm:$0xff]
        %v541 = vld [vmem:[#allocation2 + $0xd8] sm:$0xff]
        %v542 = vld [vmem:[#allocation2 + $0xe0] sm:$0xff]
        %v543 = vld [vmem:[#allocation2 + $0xe8] sm:$0xff]
        %v544 = vld [vmem:[%s2] sm:$0xff]
        %546 = vset.pattern.permute.xlu0 0
        %547 = vperm.xlu0 %546, %v544
        %v548 = vpop.permute.xlu0 %547
        %vm550 = vcmask 916480
        %v552 = vsel %vm550, %v513, 0
        %554 = vmatprep.subr.mxu0 0.0
        %555 = vmatpush1.msra.mxu0 %v514
        %556 = vmatprep.subr.mxu0 0.0
        %557 = vmatpush1.msra.mxu0 %v515
        %558 = vmatprep.subr.mxu0 0.0
        %559 = vmatpush1.msra.mxu0 %v516
        %560 = vmatprep.subr.mxu0 0.0
        %561 = vmatpush1.msra.mxu0 %v517
        %562 = vmatprep.subr.mxu0 0.0
        %563 = vmatpush1.msra.mxu0 %v518
        %564 = vmatprep.subr.mxu0 0.0
        %565 = vmatpush1.msra.mxu0 %v519
        %566 = vmatprep.subr.mxu0 0.0
        %567 = vmatpush1.msra.mxu0 %v520
        %568 = vmatprep.subr.mxu0 0.0
        %569 = vmatpush1.msra.mxu0 %v521
        %570 = vmatprep.subr.mxu0 0.0
        %571 = vmatpush1.msra.mxu0 %v522
        %572 = vmatprep.subr.mxu0 0.0
        %573 = vmatpush1.msra.mxu0 %v523
        %574 = vmatprep.subr.mxu0 0.0
        %575 = vmatpush1.msra.mxu0 %v524
        %576 = vmatprep.subr.mxu0 0.0
        %577 = vmatpush1.msra.mxu0 %v525
        %578 = vmatprep.subr.mxu0 0.0
        %579 = vmatpush1.msra.mxu0 %v526
        %580 = vmatprep.subr.mxu0 0.0
        %581 = vmatpush1.msra.mxu0 %v527
        %582 = vmatprep.subr.mxu0 0.0
        %583 = vmatpush1.msra.mxu0 %v528
        %584 = vmatprep.subr.mxu0 0.0
        %585 = vmatpush1.msra.mxu0 %v529
        %586 = vmatprep.subr.mxu0 0.0
        %587 = vmatpush1.msra.mxu0 %v530
        %588 = vmatprep.subr.mxu0 0.0
        %589 = vmatpush1.msra.mxu0 %v531
        %590 = vmatprep.subr.mxu0 0.0
        %591 = vmatpush1.msra.mxu0 %v532
        %592 = vmatprep.subr.mxu0 0.0
        %593 = vmatpush1.msra.mxu0 %v533
        %594 = vmatprep.subr.mxu0 0.0
        %595 = vmatpush1.msra.mxu0 %v534
        %596 = vmatprep.subr.mxu0 0.0
        %597 = vmatpush1.msra.mxu0 %v535
        %598 = vmatprep.subr.mxu0 0.0
        %599 = vmatpush1.msra.mxu0 %v536
        %600 = vmatprep.subr.mxu0 0.0
        %601 = vmatpush1.msra.mxu0 %v537
        %602 = vmatprep.subr.mxu0 0.0
        %603 = vmatpush1.msra.mxu0 %v538
        %604 = vmatprep.subr.mxu0 0.0
        %605 = vmatpush1.msra.mxu0 %v539
        %606 = vmatprep.subr.mxu0 0.0
        %607 = vmatpush1.msra.mxu0 %v540
        %608 = vmatprep.subr.mxu0 0.0
        %609 = vmatpush1.msra.mxu0 %v541
        %610 = vmatprep.subr.mxu0 0.0
        %611 = vmatpush1.msra.mxu0 %v542
        %612 = vmatprep.subr.mxu0 0.0
        %613 = vmatpush1.msra.mxu0 %v543
        %614 = vmatprep.subr.mxu0 0.0
        %615 = vmatpush1.msra.mxu0 0.0
        %616 = vmatprep.subr.mxu0 0.0
        %617 = vmatpush1.msra.mxu0 0.0
        %618 = vmatprep.mubr.f32.mxu0 %v552
        %619 = vmatmul.mubr.f32.gmra.mrb[0].mxu0 %v512
        %v620 = vpop.f32.mrb[0].mxu0
        %v621 = vadd.f32 %v548, %v620
        %v622 = vpop.f32.mrb[0].mxu0
        %623 = vdwg.mxu0
        %v624 = vsub.f32 0.0, %v621
        %v625 = vmul.f32 %v624, 1.442695
        %v626 = vpow.pop %v625
        %v627 = vadd.f32 %v626, 1.0
        %v628 = vrcp.pop %v627
        %v629 = vmul.f32 %v621, %v628
        %630 = vst [vmem:[#allocation3] sm:$0xff] %v629
        %631 = vst.msk [vmem:[#allocation4] sm:$0xff] %vm242, 0.0
        %v632 = vld [vmem:[#allocation3] sm:$0xff]
        %634 = vrot.lane.b32.xlu0 %v632, 29
        %v635 = vpop.permute.xlu0 %634
        %637 = vst.msk [vmem:[#allocation4] sm:$0xff] %vm249, %v635
        %638 = vst.msk [vmem:[#allocation4 + $0x8] sm:$0xff] %vm251, 0.0
        %v639 = vld [vmem:[#allocation3] sm:$0xff]
        %641 = vrot.lane.b32.xlu0 %v639, 27
        %v642 = vpop.permute.xlu0 %641
        %644 = vst.msk [vmem:[#allocation4 + $0x8] sm:$0xff] %vm258, %v642
        %645 = vst.msk [vmem:[#allocation4 + $0x10] sm:$0xff] %vm260, 0.0
        %v646 = vld [vmem:[#allocation3] sm:$0xff]
        %648 = vrot.lane.b32.xlu0 %v646, 25
        %v649 = vpop.permute.xlu0 %648
        %651 = vst.msk [vmem:[#allocation4 + $0x10] sm:$0xff] %vm267, %v649
        %652 = vst.msk [vmem:[#allocation4 + $0x18] sm:$0xff] %vm269, 0.0
        %v653 = vld [vmem:[#allocation3] sm:$0xff]
        %655 = vrot.lane.b32.xlu0 %v653, 23
        %v656 = vpop.permute.xlu0 %655
        %658 = vst.msk [vmem:[#allocation4 + $0x18] sm:$0xff] %vm276, %v656
        %659 = vst.msk [vmem:[#allocation4 + $0x20] sm:$0xff] %vm278, 0.0
        %v660 = vld [vmem:[#allocation3] sm:$0xff]
        %662 = vrot.lane.b32.xlu0 %v660, 21
        %v663 = vpop.permute.xlu0 %662
        %665 = vst.msk [vmem:[#allocation4 + $0x20] sm:$0xff] %vm285, %v663
        %666 = vst.msk [vmem:[#allocation4 + $0x28] sm:$0xff] %vm287, 0.0
        %v667 = vld [vmem:[#allocation3] sm:$0xff]
        %669 = vrot.lane.b32.xlu0 %v667, 19
        %v670 = vpop.permute.xlu0 %669
        %672 = vst.msk [vmem:[#allocation4 + $0x28] sm:$0xff] %vm294, %v670
        %673 = vst.msk [vmem:[#allocation4 + $0x30] sm:$0xff] %vm296, 0.0
        %v674 = vld [vmem:[#allocation3] sm:$0xff]
        %676 = vrot.lane.b32.xlu0 %v674, 17
        %v677 = vpop.permute.xlu0 %676
        %679 = vst.msk [vmem:[#allocation4 + $0x30] sm:$0xff] %vm303, %v677
        %680 = vst.msk [vmem:[#allocation4 + $0x38] sm:$0xff] %vm305, 0.0
        %v681 = vld [vmem:[#allocation3] sm:$0xff]
        %683 = vrot.lane.b32.xlu0 %v681, 15
        %v684 = vpop.permute.xlu0 %683
        %686 = vst.msk [vmem:[#allocation4 + $0x38] sm:$0xff] %vm312, %v684
        %687 = vst.msk [vmem:[#allocation4 + $0x40] sm:$0xff] %vm314, 0.0
        %v688 = vld [vmem:[#allocation3] sm:$0xff]
        %690 = vrot.lane.b32.xlu0 %v688, 13
        %v691 = vpop.permute.xlu0 %690
        %693 = vst.msk [vmem:[#allocation4 + $0x40] sm:$0xff] %vm321, %v691
        %694 = vst.msk [vmem:[#allocation4 + $0x48] sm:$0xff] %vm323, 0.0
        %v695 = vld [vmem:[#allocation3] sm:$0xff]
        %697 = vrot.lane.b32.xlu0 %v695, 11
        %v698 = vpop.permute.xlu0 %697
        %700 = vst.msk [vmem:[#allocation4 + $0x48] sm:$0xff] %vm330, %v698
        %701 = vst.msk [vmem:[#allocation4 + $0x50] sm:$0xff] %vm332, 0.0
        %v702 = vld [vmem:[#allocation3] sm:$0xff]
        %704 = vrot.lane.b32.xlu0 %v702, 9
        %v705 = vpop.permute.xlu0 %704
        %707 = vst.msk [vmem:[#allocation4 + $0x50] sm:$0xff] %vm339, %v705
        %708 = vst.msk [vmem:[#allocation4 + $0x58] sm:$0xff] %vm341, 0.0
        %v709 = vld [vmem:[#allocation3] sm:$0xff]
        %711 = vrot.lane.b32.xlu0 %v709, 7
        %v712 = vpop.permute.xlu0 %711
        %714 = vst.msk [vmem:[#allocation4 + $0x58] sm:$0xff] %vm348, %v712
        %715 = vst.msk [vmem:[#allocation4 + $0x60] sm:$0xff] %vm350, 0.0
        %v716 = vld [vmem:[#allocation3] sm:$0xff]
        %718 = vrot.lane.b32.xlu0 %v716, 5
        %v719 = vpop.permute.xlu0 %718
        %721 = vst.msk [vmem:[#allocation4 + $0x60] sm:$0xff] %vm357, %v719
        %722 = vst.msk [vmem:[#allocation4 + $0x68] sm:$0xff] %vm359, 0.0
        %v723 = vld [vmem:[#allocation3] sm:$0xff]
        %725 = vrot.lane.b32.xlu0 %v723, 3
        %v726 = vpop.permute.xlu0 %725
        %728 = vst.msk [vmem:[#allocation4 + $0x68] sm:$0xff] %vm366, %v726
        %729 = vst.msk [vmem:[#allocation4 + $0x70] sm:$0xff] %vm368, 0.0
        %v730 = vld [vmem:[#allocation3] sm:$0xff]
        %732 = vrot.lane.b32.xlu0 %v730, 1
        %v733 = vpop.permute.xlu0 %732
        %735 = vst.msk [vmem:[#allocation4 + $0x70] sm:$0xff] %vm375, %v733
        %736 = vst.msk [vmem:[#allocation4 + $0x78] sm:$0xff] %vm377, 0.0
        %v737 = vld [vmem:[#allocation3] sm:$0xff]
        %739 = vrot.lane.b32.xlu0 %v737, 127
        %v740 = vpop.permute.xlu0 %739
        %742 = vst.msk [vmem:[#allocation4 + $0x78] sm:$0xff] %vm384, %v740
        %743 = vst.msk [vmem:[#allocation4 + $0x80] sm:$0xff] %vm386, 0.0
        %v744 = vld [vmem:[#allocation3] sm:$0xff]
        %746 = vrot.lane.b32.xlu0 %v744, 125
        %v747 = vpop.permute.xlu0 %746
        %749 = vst.msk [vmem:[#allocation4 + $0x80] sm:$0xff] %vm393, %v747
        %750 = vst.msk [vmem:[#allocation4 + $0x88] sm:$0xff] %vm395, 0.0
        %v751 = vld [vmem:[#allocation3] sm:$0xff]
        %753 = vrot.lane.b32.xlu0 %v751, 123
        %v754 = vpop.permute.xlu0 %753
        %756 = vst.msk [vmem:[#allocation4 + $0x88] sm:$0xff] %vm402, %v754
        %757 = vst.msk [vmem:[#allocation4 + $0x90] sm:$0xff] %vm404, 0.0
        %v758 = vld [vmem:[#allocation3] sm:$0xff]
        %760 = vrot.lane.b32.xlu0 %v758, 121
        %v761 = vpop.permute.xlu0 %760
        %763 = vst.msk [vmem:[#allocation4 + $0x90] sm:$0xff] %vm411, %v761
        %764 = vst.msk [vmem:[#allocation4 + $0x98] sm:$0xff] %vm413, 0.0
        %v765 = vld [vmem:[#allocation3] sm:$0xff]
        %767 = vrot.lane.b32.xlu0 %v765, 119
        %v768 = vpop.permute.xlu0 %767
        %770 = vst.msk [vmem:[#allocation4 + $0x98] sm:$0xff] %vm420, %v768
        %771 = vst.msk [vmem:[#allocation4 + $0xa0] sm:$0xff] %vm422, 0.0
        %v772 = vld [vmem:[#allocation3] sm:$0xff]
        %774 = vrot.lane.b32.xlu0 %v772, 117
        %v775 = vpop.permute.xlu0 %774
        %777 = vst.msk [vmem:[#allocation4 + $0xa0] sm:$0xff] %vm429, %v775
        %778 = vst.msk [vmem:[#allocation4 + $0xa8] sm:$0xff] %vm431, 0.0
        %v779 = vld [vmem:[#allocation3] sm:$0xff]
        %781 = vrot.lane.b32.xlu0 %v779, 115
        %v782 = vpop.permute.xlu0 %781
        %784 = vst.msk [vmem:[#allocation4 + $0xa8] sm:$0xff] %vm438, %v782
        %785 = vst.msk [vmem:[#allocation4 + $0xb0] sm:$0xff] %vm440, 0.0
        %v786 = vld [vmem:[#allocation3] sm:$0xff]
        %788 = vrot.lane.b32.xlu0 %v786, 113
        %v789 = vpop.permute.xlu0 %788
        %791 = vst.msk [vmem:[#allocation4 + $0xb0] sm:$0xff] %vm447, %v789
        %792 = vst.msk [vmem:[#allocation4 + $0xb8] sm:$0xff] %vm449, 0.0
        %v793 = vld [vmem:[#allocation3] sm:$0xff]
        %795 = vrot.lane.b32.xlu0 %v793, 111
        %v796 = vpop.permute.xlu0 %795
        %798 = vst.msk [vmem:[#allocation4 + $0xb8] sm:$0xff] %vm456, %v796
        %799 = vst.msk [vmem:[#allocation4 + $0xc0] sm:$0xff] %vm458, 0.0
        %v800 = vld [vmem:[#allocation3] sm:$0xff]
        %802 = vrot.lane.b32.xlu0 %v800, 109
        %v803 = vpop.permute.xlu0 %802
        %805 = vst.msk [vmem:[#allocation4 + $0xc0] sm:$0xff] %vm465, %v803
        %806 = vst.msk [vmem:[#allocation4 + $0xc8] sm:$0xff] %vm467, 0.0
        %v807 = vld [vmem:[#allocation3] sm:$0xff]
        %809 = vrot.lane.b32.xlu0 %v807, 107
        %v810 = vpop.permute.xlu0 %809
        %812 = vst.msk [vmem:[#allocation4 + $0xc8] sm:$0xff] %vm474, %v810
        %813 = vst.msk [vmem:[#allocation4 + $0xd0] sm:$0xff] %vm476, 0.0
        %v814 = vld [vmem:[#allocation3] sm:$0xff]
        %816 = vrot.lane.b32.xlu0 %v814, 105
        %v817 = vpop.permute.xlu0 %816
        %819 = vst.msk [vmem:[#allocation4 + $0xd0] sm:$0xff] %vm483, %v817
        %820 = vst.msk [vmem:[#allocation4 + $0xd8] sm:$0xff] %vm485, 0.0
        %v821 = vld [vmem:[#allocation3] sm:$0xff]
        %823 = vrot.lane.b32.xlu0 %v821, 103
        %v824 = vpop.permute.xlu0 %823
        %826 = vst.msk [vmem:[#allocation4 + $0xd8] sm:$0xff] %vm492, %v824
        %827 = vst.msk [vmem:[#allocation4 + $0xe0] sm:$0xff] %vm494, 0.0
        %v828 = vld [vmem:[#allocation3] sm:$0xff]
        %830 = vrot.lane.b32.xlu0 %v828, 101
        %v831 = vpop.permute.xlu0 %830
        %833 = vst.msk [vmem:[#allocation4 + $0xe0] sm:$0xff] %vm501, %v831
        %834 = vst.msk [vmem:[#allocation4 + $0xe8] sm:$0xff] %vm503, 0.0
        %v835 = vld [vmem:[#allocation3] sm:$0xff]
        %837 = vrot.lane.b32.xlu0 %v835, 99
        %v838 = vpop.permute.xlu0 %837
        %840 = vst.msk [vmem:[#allocation4 + $0xe8] sm:$0xff] %vm510, %v838
        %v841 = vld [vmem:[%s3] sm:$0xff]
        %v842 = vld [vmem:[%s3 + $0x8] sm:$0xff]
        %v843 = vld [vmem:[#allocation4] sm:$0xff]
        %v844 = vld [vmem:[#allocation4 + $0x8] sm:$0xff]
        %v845 = vld [vmem:[#allocation4 + $0x10] sm:$0xff]
        %v846 = vld [vmem:[#allocation4 + $0x18] sm:$0xff]
        %v847 = vld [vmem:[#allocation4 + $0x20] sm:$0xff]
        %v848 = vld [vmem:[#allocation4 + $0x28] sm:$0xff]
        %v849 = vld [vmem:[#allocation4 + $0x30] sm:$0xff]
        %v850 = vld [vmem:[#allocation4 + $0x38] sm:$0xff]
        %v851 = vld [vmem:[#allocation4 + $0x40] sm:$0xff]
        %v852 = vld [vmem:[#allocation4 + $0x48] sm:$0xff]
        %v853 = vld [vmem:[#allocation4 + $0x50] sm:$0xff]
        %v854 = vld [vmem:[#allocation4 + $0x58] sm:$0xff]
        %v855 = vld [vmem:[#allocation4 + $0x60] sm:$0xff]
        %v856 = vld [vmem:[#allocation4 + $0x68] sm:$0xff]
        %v857 = vld [vmem:[#allocation4 + $0x70] sm:$0xff]
        %v858 = vld [vmem:[#allocation4 + $0x78] sm:$0xff]
        %v859 = vld [vmem:[#allocation4 + $0x80] sm:$0xff]
        %v860 = vld [vmem:[#allocation4 + $0x88] sm:$0xff]
        %v861 = vld [vmem:[#allocation4 + $0x90] sm:$0xff]
        %v862 = vld [vmem:[#allocation4 + $0x98] sm:$0xff]
        %v863 = vld [vmem:[#allocation4 + $0xa0] sm:$0xff]
        %v864 = vld [vmem:[#allocation4 + $0xa8] sm:$0xff]
        %v865 = vld [vmem:[#allocation4 + $0xb0] sm:$0xff]
        %v866 = vld [vmem:[#allocation4 + $0xb8] sm:$0xff]
        %v867 = vld [vmem:[#allocation4 + $0xc0] sm:$0xff]
        %v868 = vld [vmem:[#allocation4 + $0xc8] sm:$0xff]
        %v869 = vld [vmem:[#allocation4 + $0xd0] sm:$0xff]
        %v870 = vld [vmem:[#allocation4 + $0xd8] sm:$0xff]
        %v871 = vld [vmem:[#allocation4 + $0xe0] sm:$0xff]
        %v872 = vld [vmem:[#allocation4 + $0xe8] sm:$0xff]
        %v873 = vld [vmem:[%s4] sm:$0xff]
        %875 = vset.pattern.permute.xlu0 0
        %876 = vperm.xlu0 %875, %v873
        %v877 = vpop.permute.xlu0 %876
        %v880 = vsel %vm550, %v842, 0
        %882 = vmatprep.subr.mxu0 0.0
        %883 = vmatpush1.msra.mxu0 %v843
        %884 = vmatprep.subr.mxu0 0.0
        %885 = vmatpush1.msra.mxu0 %v844
        %886 = vmatprep.subr.mxu0 0.0
        %887 = vmatpush1.msra.mxu0 %v845
        %888 = vmatprep.subr.mxu0 0.0
        %889 = vmatpush1.msra.mxu0 %v846
        %890 = vmatprep.subr.mxu0 0.0
        %891 = vmatpush1.msra.mxu0 %v847
        %892 = vmatprep.subr.mxu0 0.0
        %893 = vmatpush1.msra.mxu0 %v848
        %894 = vmatprep.subr.mxu0 0.0
        %895 = vmatpush1.msra.mxu0 %v849
        %896 = vmatprep.subr.mxu0 0.0
        %897 = vmatpush1.msra.mxu0 %v850
        %898 = vmatprep.subr.mxu0 0.0
        %899 = vmatpush1.msra.mxu0 %v851
        %900 = vmatprep.subr.mxu0 0.0
        %901 = vmatpush1.msra.mxu0 %v852
        %902 = vmatprep.subr.mxu0 0.0
        %903 = vmatpush1.msra.mxu0 %v853
        %904 = vmatprep.subr.mxu0 0.0
        %905 = vmatpush1.msra.mxu0 %v854
        %906 = vmatprep.subr.mxu0 0.0
        %907 = vmatpush1.msra.mxu0 %v855
        %908 = vmatprep.subr.mxu0 0.0
        %909 = vmatpush1.msra.mxu0 %v856
        %910 = vmatprep.subr.mxu0 0.0
        %911 = vmatpush1.msra.mxu0 %v857
        %912 = vmatprep.subr.mxu0 0.0
        %913 = vmatpush1.msra.mxu0 %v858
        %914 = vmatprep.subr.mxu0 0.0
        %915 = vmatpush1.msra.mxu0 %v859
        %916 = vmatprep.subr.mxu0 0.0
        %917 = vmatpush1.msra.mxu0 %v860
        %918 = vmatprep.subr.mxu0 0.0
        %919 = vmatpush1.msra.mxu0 %v861
        %920 = vmatprep.subr.mxu0 0.0
        %921 = vmatpush1.msra.mxu0 %v862
        %922 = vmatprep.subr.mxu0 0.0
        %923 = vmatpush1.msra.mxu0 %v863
        %924 = vmatprep.subr.mxu0 0.0
        %925 = vmatpush1.msra.mxu0 %v864
        %926 = vmatprep.subr.mxu0 0.0
        %927 = vmatpush1.msra.mxu0 %v865
        %928 = vmatprep.subr.mxu0 0.0
        %929 = vmatpush1.msra.mxu0 %v866
        %930 = vmatprep.subr.mxu0 0.0
        %931 = vmatpush1.msra.mxu0 %v867
        %932 = vmatprep.subr.mxu0 0.0
        %933 = vmatpush1.msra.mxu0 %v868
        %934 = vmatprep.subr.mxu0 0.0
        %935 = vmatpush1.msra.mxu0 %v869
        %936 = vmatprep.subr.mxu0 0.0
        %937 = vmatpush1.msra.mxu0 %v870
        %938 = vmatprep.subr.mxu0 0.0
        %939 = vmatpush1.msra.mxu0 %v871
        %940 = vmatprep.subr.mxu0 0.0
        %941 = vmatpush1.msra.mxu0 %v872
        %942 = vmatprep.subr.mxu0 0.0
        %943 = vmatpush1.msra.mxu0 0.0
        %944 = vmatprep.subr.mxu0 0.0
        %945 = vmatpush1.msra.mxu0 0.0
        %946 = vmatprep.mubr.f32.mxu0 %v880
        %947 = vmatmul.mubr.f32.gmra.mrb[0].mxu0 %v841
        %v948 = vpop.f32.mrb[0].mxu0
        %v949 = vadd.f32 %v877, %v948
        %v950 = vpop.f32.mrb[0].mxu0
        %951 = vdwg.mxu0
        %v952 = vsub.f32 0.0, %v949
        %v953 = vmul.f32 %v952, 1.442695
        %v954 = vpow.pop %v953
        %v955 = vadd.f32 %v954, 1.0
        %v956 = vrcp.pop %v955
        %v957 = vmul.f32 %v949, %v956
        %v958 = vld [vmem:[#allocation3] sm:$0xff]
        %v959 = vadd.f32 %v958, %v957
        %960 = vst [vmem:[%s241] sm:$0xff] %v959
        %s961 = sand.u32 %s140, 1
        %s962 = scalar_lea.sflag [#allocation7], %s961
        %s963 = sand.u32 %s140, 1
        %s964 = smul.addr %s963, 8
        %s965 = scalar_lea.vmem [#allocation8], %s964
        // Predicated region
        $region45: #{seq_encoder2_forward.7} parent=39 // pred_check
          %p966 = pneg %p150
        $region46: #{seq_encoder2_forward.7} parent=39 // pred_check_branch
          %968 = sbr.rel (%p966) target = $region48
        $region47: #{seq_encoder2_forward.7} parent=39 // pred_region
          %s970 = ssub.s32 128, 128
          %971 = vsyncadd %s962, %s970
          %s972 = smul.addr %s22, 8
          %s973 = sadd.s32 7, %s972
          %s974 = smul.addr %s973, 128
          %s975 = scalar_lea.hbm %s5, %s974
          %s977 = sshll.u32 %s965, 4
          %s978 = int_to_ptr.vmem [resolvable:$true] %s977
          %980 = dma.vmem_to_hbm [thread:$0]  %s978, 128, %s975, %s962
        $region48: #{seq_encoder2_forward.7} parent=39 // pred_fallthru
          _
      $region40: #{seq_encoder2_forward.7} parent=5 // pred_fallthru
        _
      %p981 = scmp.le.s32.totalorder 2, %s17
      // Predicated region
      $region49: #{seq_encoder2_forward.7} parent=5 // pred_check
        %p982 = pneg %p981
      $region50: #{seq_encoder2_forward.7} parent=5 // pred_check_branch
        %984 = sbr.rel (%p982) target = $region52
      $region51: #{seq_encoder2_forward.7} parent=5 // pred_region
        %s985 = ssub.s32 %s17, 2
        // Predicated region
        $region53: #{seq_encoder2_forward.7} parent=51 // pred_check
          %p986 = pneg %p156
        $region54: #{seq_encoder2_forward.7} parent=51 // pred_check_branch
          %988 = sbr.rel (%p986) target = $region56
        $region55: #{seq_encoder2_forward.7} parent=51 // pred_region
          %s989 = sand.u32 %s141, 1
          %s990 = scalar_lea.sflag [#allocation7], %s989
          %s991 = sand.u32 %s141, 1
          %s992 = smul.addr %s991, 8
          %s993 = scalar_lea.vmem [#allocation8], %s992
          %994 = dma.done %s990, 128
        $region56: #{seq_encoder2_forward.7} parent=51 // pred_fallthru
          _
      $region52: #{seq_encoder2_forward.7} parent=5 // pred_fallthru
        _
    $region6: #{seq_encoder2_forward.7} parent=1 // loop_footer
      %s21 = sadd.s32 1, %s17
    $region7: #{seq_encoder2_forward.7} parent=1 // loop_footer_branch
      %16 = sbr.rel target = $region3
    $region8: #{seq_encoder2_forward.7} parent=1 // loop_exit
      _
    %995 = vsyncpa [#allocation6], 1
    %s996 = scalar_lea.sflag [#allocation6], 1
    %997 = vsyncpa %s996, 1
    %998 = vsyncpa [#allocation7], 1
    %s999 = scalar_lea.sflag [#allocation7], 1
    %1000 = vsyncpa %s999, 1

</llo_original>
